<compile_context>
chip_gen: v5e
topology: v5e:2x2
jax: 0.10.0
libtpu: 0.0.40
codegen_flags: <defaults>
</compile_context>

<pallas_src>
import functools

import jax
import jax.numpy as jnp
from jax.experimental import pallas as pl
from jax.experimental.pallas import tpu as pltpu

EPS = 1e-5
LANES = 128


def _conv_tile(x_ref, w_ref, *, kh, kw, toh, ow, cin, cp):
    """Fused-im2col conv for one row tile. Returns (toh*ow, cp) float32."""
    x = x_ref[0].astype(jnp.float32)                       # (TIH, Wp, Cin)
    tm = toh * ow
    acc = jnp.zeros((tm, cp), jnp.float32)
    for i in range(kh):                                    # kh*kw small tap GEMMs
        for j in range(kw):
            tap = x[i:i + toh, j:j + ow, :].reshape(tm, cin)
            acc += jnp.dot(tap, w_ref[i * kw + j].astype(jnp.float32),
                           preferred_element_type=jnp.float32)
    return acc


def _stats_kernel(x_ref, w_ref, ssum_ref, ssq_ref, *, conv):
    # Pass 1: accumulate per-channel sum / sum-of-squares over all M tiles.
    @pl.when(pl.program_id(0) == 0)
    def _():
        ssum_ref[...] = jnp.zeros_like(ssum_ref)
        ssq_ref[...] = jnp.zeros_like(ssq_ref)

    z = conv(x_ref, w_ref)                                 # (TM, CP) f32, no bias
    ssum_ref[...] += jnp.sum(z, axis=0, keepdims=True)
    ssq_ref[...] += jnp.sum(z * z, axis=0, keepdims=True)


def _apply_kernel(x_ref, w_ref, ss_ref, o_ref, *, conv):
    # Pass 2: recompute conv tile, fused BN scale/shift + ReLU, lane-dense store.
    z = conv(x_ref, w_ref)                                 # (TM, CP) f32
    ss = ss_ref[...]                                       # (2, CP): scale row 0, shift row 1
    out = jnp.maximum(z * ss[0:1, :] + ss[1:2, :], 0.0)
    o_ref[...] = out.astype(o_ref.dtype)


def _pick_toh(oh, ow):
    """Largest divisor of OH giving a sublane-aligned tile of <= 512 rows."""
    best = 1
    for d in range(1, oh + 1):
        if oh % d == 0 and (d * ow) % 8 == 0 and d * ow <= 512:
            best = d
    return best


@functools.partial(jax.jit, static_argnames=("stride", "padding"))
def conv_block_forward(x_nchw, conv_w, conv_b, bn_gamma, bn_beta, *, stride, padding):
    # conv_b is algebraically dead: BatchNorm's mean subtraction cancels any
    # per-channel constant, so we never add it (saves a full (M, Cout) pass).
    del conv_b
    N, Cin, H, W = x_nchw.shape
    Cout, _, kh, kw = conv_w.shape
    assert stride == 1, "fused-im2col ConvBlock kernel currently assumes stride == 1"

    OH = (H + 2 * padding - kh) // stride + 1
    OW = (W + 2 * padding - kw) // stride + 1
    Hp, Wp = H + 2 * padding, W + 2 * padding
    CP = max(LANES, ((Cout + LANES - 1) // LANES) * LANES)  # lane-dense channels

    TOH = _pick_toh(OH, OW)          # output rows per tile
    T = OH // TOH
    TIH = TOH + kh - 1               # padded-input rows needed per tile (stride=1)
    TM = TOH * OW                    # GEMM M per tile
    NT = N * T                       # grid size
    MTOT = N * OH * OW
    assert TM % 8 == 0

    # ---- glue (XLA): NCHW->NHWC, spatial zero-pad, halo'd row tiles ----------
    x_nhwc = jnp.transpose(x_nchw, (0, 2, 3, 1)).astype(jnp.float32)
    xp = jnp.pad(x_nhwc, ((0, 0), (padding, padding), (padding, padding), (0, 0)))
    xt = jnp.stack([xp[:, t * TOH: t * TOH + TIH] for t in range(T)], axis=1)
    xt = xt.reshape(NT, TIH, Wp, Cin)            # only (kh-1) halo rows duplicated

    # Weights: (Cout, Cin, kh, kw) -> (kh*kw, Cin, CP), zero-padded to 128 lanes.
    w = jnp.transpose(conv_w, (2, 3, 1, 0)).reshape(kh * kw, Cin, Cout)
    w = jnp.pad(w, ((0, 0), (0, 0), (0, CP - Cout))).astype(jnp.float32)

    conv = functools.partial(_conv_tile, kh=kh, kw=kw, toh=TOH, ow=OW, cin=Cin, cp=CP)

    x_spec = pl.BlockSpec((1, TIH, Wp, Cin), lambda m: (m, 0, 0, 0))
    w_spec = pl.BlockSpec((kh * kw, Cin, CP), lambda m: (0, 0, 0))  # VMEM-resident

    # ---- pass 1: per-channel batch statistics (reduction over M tiles) -------
    ssum, ssq = pl.pallas_call(
        functools.partial(_stats_kernel, conv=conv),
        out_shape=(jax.ShapeDtypeStruct((1, CP), jnp.float32),
                   jax.ShapeDtypeStruct((1, CP), jnp.float32)),
        grid=(NT,),
        in_specs=[x_spec, w_spec],
        out_specs=(pl.BlockSpec((1, CP), lambda m: (0, 0)),
                   pl.BlockSpec((1, CP), lambda m: (0, 0))),
        compiler_params=pltpu.CompilerParams(
            dimension_semantics=("arbitrary",)),          # accumulator across tiles
    )(xt, w)

    # ---- fold BN into one per-channel scale/shift (tiny, between passes) -----
    mean = ssum / MTOT
    var = jnp.maximum(ssq / MTOT - mean * mean, 0.0)      # biased batch variance
    g = jnp.pad(bn_gamma.astype(jnp.float32), (0, CP - Cout)).reshape(1, CP)
    b = jnp.pad(bn_beta.astype(jnp.float32), (0, CP - Cout)).reshape(1, CP)
    scale = g * jax.lax.rsqrt(var + EPS)
    shift = b - mean * scale
    ss = jnp.concatenate([scale, shift], axis=0)          # single (2, CP) stream

    # ---- pass 2: recompute conv per tile + fused normalize/ReLU --------------
    out2d = pl.pallas_call(
        functools.partial(_apply_kernel, conv=conv),
        out_shape=jax.ShapeDtypeStruct((NT * TM, CP), jnp.float32),
        grid=(NT,),
        in_specs=[x_spec, w_spec, pl.BlockSpec((2, CP), lambda m: (0, 0))],
        out_specs=pl.BlockSpec((TM, CP), lambda m: (m, 0)),
        compiler_params=pltpu.CompilerParams(
            dimension_semantics=("parallel",)),           # independent tiles (v7x 2 TCs)
    )(xt, w, ss)

    out = out2d.reshape(N, OH, OW, CP)[..., :Cout]        # drop padded lanes
    return jnp.transpose(out, (0, 3, 1, 2))               # module contract is NCHW


def _reference(x_nchw, conv_w, conv_b, bn_gamma, bn_beta, *, stride, padding):
    y = jax.lax.conv_general_dilated(
        x_nchw, conv_w, window_strides=(stride, stride),
        padding=((padding, padding), (padding, padding)),
        dimension_numbers=("NCHW", "OIHW", "NCHW"))
    y = y + conv_b.reshape(1, -1, 1, 1)
    mean = jnp.mean(y, axis=(0, 2, 3), keepdims=True)
    var = jnp.mean((y - mean) ** 2, axis=(0, 2, 3), keepdims=True)
    y = (y - mean) * jax.lax.rsqrt(var + EPS)
    y = y * bn_gamma.reshape(1, -1, 1, 1) + bn_beta.reshape(1, -1, 1, 1)
    return jnp.maximum(y, 0.0)


if __name__ == "__main__":
    # ConvBlock(in_channels=4, out_channels=8, kernel_size=3, stride=1, padding=1)
    N, Cin, H, W = 2, 4, 16, 16
    Cout, ksz, stride, padding = 8, 3, 1, 1

    key = jax.random.PRNGKey(0)
    kx, kw, kb = jax.random.split(key, 3)

    x = jax.random.normal(kx, (N, Cin, H, W), dtype=jnp.float32)
    fan_in = Cin * ksz * ksz
    conv_w = jax.random.normal(kw, (Cout, Cin, ksz, ksz), dtype=jnp.float32) / jnp.sqrt(fan_in)
    conv_b = jax.random.normal(kb, (Cout,), dtype=jnp.float32) * 0.1
    bn_gamma = jnp.ones((Cout,), dtype=jnp.float32)   # nn.BatchNorm2d default init
    bn_beta = jnp.zeros((Cout,), dtype=jnp.float32)

    out = conv_block_forward(x, conv_w, conv_b, bn_gamma, bn_beta,
                             stride=stride, padding=padding)
    out = jax.block_until_ready(out)

    ref = _reference(x, conv_w, conv_b, bn_gamma, bn_beta,
                     stride=stride, padding=padding)
    assert out.shape == (N, Cout, H, W), out.shape
    err = float(jnp.max(jnp.abs(out - ref)))
    assert err < 2e-4, err

    print("KERNEL_OK")
</pallas_src>

<mosaic_0001>
module attributes {stable_mosaic.version = 11 : i64} {
  func.func @_stats_kernel(%arg0: i32, %arg1: memref<1x18x18x4xf32, #tpu.memory_space<vmem>>, %arg2: memref<9x4x128xf32, #tpu.memory_space<vmem>>, %arg3: memref<1x128xf32, #tpu.memory_space<vmem>>, %arg4: memref<1x128xf32, #tpu.memory_space<vmem>>) attributes {dimension_semantics = [#tpu.dimension_semantics<arbitrary>], iteration_bounds = array<i64: 2>, scalar_prefetch = 0 : i64, scratch_operands = 0 : i64, tpu.core_type = #tpu.core_type<tc>, window_params = [{transform_indices = @transform_0, window_bounds = array<i64: 1, 18, 18, 4>}, {pipeline_mode = #tpu.pipeline_mode<synchronous>, transform_indices = @transform_1, window_bounds = array<i64: 9, 4, 128>}, {pipeline_mode = #tpu.pipeline_mode<synchronous>, transform_indices = @transform_2, window_bounds = array<i64: 1, 128>}, {pipeline_mode = #tpu.pipeline_mode<synchronous>, transform_indices = @transform_3, window_bounds = array<i64: 1, 128>}]} {
    %c0_i32 = arith.constant 0 : i32
    %0 = arith.cmpi eq, %arg0, %c0_i32 : i32
    %1 = arith.extui %0 : i1 to i32
    %c0_i32_0 = arith.constant 0 : i32
    %2 = arith.cmpi ne, %1, %c0_i32_0 : i32
    scf.if %2 {
      %cst_42 = arith.constant 0.000000e+00 : f32
      %71 = vector.broadcast %cst_42 : f32 to vector<1x128xf32>
      %c0_43 = arith.constant 0 : index
      %c0_44 = arith.constant 0 : index
      %72 = vector.load %arg3[%c0_43, %c0_44] : memref<1x128xf32, #tpu.memory_space<vmem>>, vector<1x128xf32>
      tpu.vector_store %arg3[%c0_43, %c0_44], %71 {strides = array<i32>} : memref<1x128xf32, #tpu.memory_space<vmem>>, vector<1x128xf32>,
      %cst_45 = arith.constant 0.000000e+00 : f32
      %73 = vector.broadcast %cst_45 : f32 to vector<1x128xf32>
      %c0_46 = arith.constant 0 : index
      %c0_47 = arith.constant 0 : index
      %74 = vector.load %arg4[%c0_46, %c0_47] : memref<1x128xf32, #tpu.memory_space<vmem>>, vector<1x128xf32>
      tpu.vector_store %arg4[%c0_46, %c0_47], %73 {strides = array<i32>} : memref<1x128xf32, #tpu.memory_space<vmem>>, vector<1x128xf32>,
    } else {
    }
    %c0 = arith.constant 0 : index
    %c0_1 = arith.constant 0 : index
    %c0_2 = arith.constant 0 : index
    %c0_3 = arith.constant 0 : index
    %3 = vector.load %arg1[%c0, %c0_1, %c0_2, %c0_3] : memref<1x18x18x4xf32, #tpu.memory_space<vmem>>, vector<1x18x18x4xf32>
    %4 = vector.shape_cast %3 : vector<1x18x18x4xf32> to vector<18x18x4xf32>
    %cst = arith.constant 0.000000e+00 : f32
    %5 = vector.broadcast %cst : f32 to vector<256x128xf32>
    %6 = vector.extract_strided_slice %4 {offsets = [0, 0, 0], sizes = [16, 16, 4], strides = [1, 1, 1]} : vector<18x18x4xf32> to vector<16x16x4xf32>
    %7 = vector.shape_cast %6 : vector<16x16x4xf32> to vector<256x4xf32>
    %c0_4 = arith.constant 0 : index
    %c0_5 = arith.constant 0 : index
    %c0_6 = arith.constant 0 : index
    %8 = vector.load %arg2[%c0_4, %c0_5, %c0_6] : memref<9x4x128xf32, #tpu.memory_space<vmem>>, vector<1x4x128xf32>
    %9 = vector.shape_cast %8 : vector<1x4x128xf32> to vector<4x128xf32>
    %cst_7 = arith.constant dense<0.000000e+00> : vector<256x128xf32>
    %10 = tpu.matmul %7, %9, %cst_7 {dimension_numbers = #tpu.dot_dimension_numbers<[1], [0], [0], [1], [0, 0, 1, 1], [], []>} : vector<256x4xf32>, vector<4x128xf32>, vector<256x128xf32> -> vector<256x128xf32>
    %11 = arith.addf %5, %10 : vector<256x128xf32>
    %12 = vector.extract_strided_slice %4 {offsets = [0, 1, 0], sizes = [16, 16, 4], strides = [1, 1, 1]} : vector<18x18x4xf32> to vector<16x16x4xf32>
    %13 = vector.shape_cast %12 : vector<16x16x4xf32> to vector<256x4xf32>
    %c1 = arith.constant 1 : index
    %c0_8 = arith.constant 0 : index
    %c0_9 = arith.constant 0 : index
    %14 = vector.load %arg2[%c1, %c0_8, %c0_9] : memref<9x4x128xf32, #tpu.memory_space<vmem>>, vector<1x4x128xf32>
    %15 = vector.shape_cast %14 : vector<1x4x128xf32> to vector<4x128xf32>
    %cst_10 = arith.constant dense<0.000000e+00> : vector<256x128xf32>
    %16 = tpu.matmul %13, %15, %cst_10 {dimension_numbers = #tpu.dot_dimension_numbers<[1], [0], [0], [1], [0, 0, 1, 1], [], []>} : vector<256x4xf32>, vector<4x128xf32>, vector<256x128xf32> -> vector<256x128xf32>
    %17 = arith.addf %11, %16 : vector<256x128xf32>
    %18 = vector.extract_strided_slice %4 {offsets = [0, 2, 0], sizes = [16, 16, 4], strides = [1, 1, 1]} : vector<18x18x4xf32> to vector<16x16x4xf32>
    %19 = vector.shape_cast %18 : vector<16x16x4xf32> to vector<256x4xf32>
    %c2 = arith.constant 2 : index
    %c0_11 = arith.constant 0 : index
    %c0_12 = arith.constant 0 : index
    %20 = vector.load %arg2[%c2, %c0_11, %c0_12] : memref<9x4x128xf32, #tpu.memory_space<vmem>>, vector<1x4x128xf32>
    %21 = vector.shape_cast %20 : vector<1x4x128xf32> to vector<4x128xf32>
    %cst_13 = arith.constant dense<0.000000e+00> : vector<256x128xf32>
    %22 = tpu.matmul %19, %21, %cst_13 {dimension_numbers = #tpu.dot_dimension_numbers<[1], [0], [0], [1], [0, 0, 1, 1], [], []>} : vector<256x4xf32>, vector<4x128xf32>, vector<256x128xf32> -> vector<256x128xf32>
    %23 = arith.addf %17, %22 : vector<256x128xf32>
    %24 = vector.extract_strided_slice %4 {offsets = [1, 0, 0], sizes = [16, 16, 4], strides = [1, 1, 1]} : vector<18x18x4xf32> to vector<16x16x4xf32>
    %25 = vector.shape_cast %24 : vector<16x16x4xf32> to vector<256x4xf32>
    %c3 = arith.constant 3 : index
    %c0_14 = arith.constant 0 : index
    %c0_15 = arith.constant 0 : index
    %26 = vector.load %arg2[%c3, %c0_14, %c0_15] : memref<9x4x128xf32, #tpu.memory_space<vmem>>, vector<1x4x128xf32>
    %27 = vector.shape_cast %26 : vector<1x4x128xf32> to vector<4x128xf32>
    %cst_16 = arith.constant dense<0.000000e+00> : vector<256x128xf32>
    %28 = tpu.matmul %25, %27, %cst_16 {dimension_numbers = #tpu.dot_dimension_numbers<[1], [0], [0], [1], [0, 0, 1, 1], [], []>} : vector<256x4xf32>, vector<4x128xf32>, vector<256x128xf32> -> vector<256x128xf32>
    %29 = arith.addf %23, %28 : vector<256x128xf32>
    %30 = vector.extract_strided_slice %4 {offsets = [1, 1, 0], sizes = [16, 16, 4], strides = [1, 1, 1]} : vector<18x18x4xf32> to vector<16x16x4xf32>
    %31 = vector.shape_cast %30 : vector<16x16x4xf32> to vector<256x4xf32>
    %c4 = arith.constant 4 : index
    %c0_17 = arith.constant 0 : index
    %c0_18 = arith.constant 0 : index
    %32 = vector.load %arg2[%c4, %c0_17, %c0_18] : memref<9x4x128xf32, #tpu.memory_space<vmem>>, vector<1x4x128xf32>
    %33 = vector.shape_cast %32 : vector<1x4x128xf32> to vector<4x128xf32>
    %cst_19 = arith.constant dense<0.000000e+00> : vector<256x128xf32>
    %34 = tpu.matmul %31, %33, %cst_19 {dimension_numbers = #tpu.dot_dimension_numbers<[1], [0], [0], [1], [0, 0, 1, 1], [], []>} : vector<256x4xf32>, vector<4x128xf32>, vector<256x128xf32> -> vector<256x128xf32>
    %35 = arith.addf %29, %34 : vector<256x128xf32>
    %36 = vector.extract_strided_slice %4 {offsets = [1, 2, 0], sizes = [16, 16, 4], strides = [1, 1, 1]} : vector<18x18x4xf32> to vector<16x16x4xf32>
    %37 = vector.shape_cast %36 : vector<16x16x4xf32> to vector<256x4xf32>
    %c5 = arith.constant 5 : index
    %c0_20 = arith.constant 0 : index
    %c0_21 = arith.constant 0 : index
    %38 = vector.load %arg2[%c5, %c0_20, %c0_21] : memref<9x4x128xf32, #tpu.memory_space<vmem>>, vector<1x4x128xf32>
    %39 = vector.shape_cast %38 : vector<1x4x128xf32> to vector<4x128xf32>
    %cst_22 = arith.constant dense<0.000000e+00> : vector<256x128xf32>
    %40 = tpu.matmul %37, %39, %cst_22 {dimension_numbers = #tpu.dot_dimension_numbers<[1], [0], [0], [1], [0, 0, 1, 1], [], []>} : vector<256x4xf32>, vector<4x128xf32>, vector<256x128xf32> -> vector<256x128xf32>
    %41 = arith.addf %35, %40 : vector<256x128xf32>
    %42 = vector.extract_strided_slice %4 {offsets = [2, 0, 0], sizes = [16, 16, 4], strides = [1, 1, 1]} : vector<18x18x4xf32> to vector<16x16x4xf32>
    %43 = vector.shape_cast %42 : vector<16x16x4xf32> to vector<256x4xf32>
    %c6 = arith.constant 6 : index
    %c0_23 = arith.constant 0 : index
    %c0_24 = arith.constant 0 : index
    %44 = vector.load %arg2[%c6, %c0_23, %c0_24] : memref<9x4x128xf32, #tpu.memory_space<vmem>>, vector<1x4x128xf32>
    %45 = vector.shape_cast %44 : vector<1x4x128xf32> to vector<4x128xf32>
    %cst_25 = arith.constant dense<0.000000e+00> : vector<256x128xf32>
    %46 = tpu.matmul %43, %45, %cst_25 {dimension_numbers = #tpu.dot_dimension_numbers<[1], [0], [0], [1], [0, 0, 1, 1], [], []>} : vector<256x4xf32>, vector<4x128xf32>, vector<256x128xf32> -> vector<256x128xf32>
    %47 = arith.addf %41, %46 : vector<256x128xf32>
    %48 = vector.extract_strided_slice %4 {offsets = [2, 1, 0], sizes = [16, 16, 4], strides = [1, 1, 1]} : vector<18x18x4xf32> to vector<16x16x4xf32>
    %49 = vector.shape_cast %48 : vector<16x16x4xf32> to vector<256x4xf32>
    %c7 = arith.constant 7 : index
    %c0_26 = arith.constant 0 : index
    %c0_27 = arith.constant 0 : index
    %50 = vector.load %arg2[%c7, %c0_26, %c0_27] : memref<9x4x128xf32, #tpu.memory_space<vmem>>, vector<1x4x128xf32>
    %51 = vector.shape_cast %50 : vector<1x4x128xf32> to vector<4x128xf32>
    %cst_28 = arith.constant dense<0.000000e+00> : vector<256x128xf32>
    %52 = tpu.matmul %49, %51, %cst_28 {dimension_numbers = #tpu.dot_dimension_numbers<[1], [0], [0], [1], [0, 0, 1, 1], [], []>} : vector<256x4xf32>, vector<4x128xf32>, vector<256x128xf32> -> vector<256x128xf32>
    %53 = arith.addf %47, %52 : vector<256x128xf32>
    %54 = vector.extract_strided_slice %4 {offsets = [2, 2, 0], sizes = [16, 16, 4], strides = [1, 1, 1]} : vector<18x18x4xf32> to vector<16x16x4xf32>
    %55 = vector.shape_cast %54 : vector<16x16x4xf32> to vector<256x4xf32>
    %c8 = arith.constant 8 : index
    %c0_29 = arith.constant 0 : index
    %c0_30 = arith.constant 0 : index
    %56 = vector.load %arg2[%c8, %c0_29, %c0_30] : memref<9x4x128xf32, #tpu.memory_space<vmem>>, vector<1x4x128xf32>
    %57 = vector.shape_cast %56 : vector<1x4x128xf32> to vector<4x128xf32>
    %cst_31 = arith.constant dense<0.000000e+00> : vector<256x128xf32>
    %58 = tpu.matmul %55, %57, %cst_31 {dimension_numbers = #tpu.dot_dimension_numbers<[1], [0], [0], [1], [0, 0, 1, 1], [], []>} : vector<256x4xf32>, vector<4x128xf32>, vector<256x128xf32> -> vector<256x128xf32>
    %59 = arith.addf %53, %58 : vector<256x128xf32>
    %c0_32 = arith.constant 0 : index
    %c0_33 = arith.constant 0 : index
    %60 = vector.load %arg3[%c0_32, %c0_33] : memref<1x128xf32, #tpu.memory_space<vmem>>, vector<1x128xf32>
    %cst_34 = arith.constant dense<0.000000e+00> : vector<128xf32>
    %61 = vector.multi_reduction <add>, %59, %cst_34 [0] : vector<256x128xf32> to vector<128xf32>
    %62 = vector.shape_cast %61 : vector<128xf32> to vector<1x128xf32>
    %63 = arith.addf %60, %62 : vector<1x128xf32>
    %c0_35 = arith.constant 0 : index
    %c0_36 = arith.constant 0 : index
    %64 = vector.load %arg3[%c0_35, %c0_36] : memref<1x128xf32, #tpu.memory_space<vmem>>, vector<1x128xf32>
    tpu.vector_store %arg3[%c0_35, %c0_36], %63 {strides = array<i32>} : memref<1x128xf32, #tpu.memory_space<vmem>>, vector<1x128xf32>,
    %c0_37 = arith.constant 0 : index
    %c0_38 = arith.constant 0 : index
    %65 = vector.load %arg4[%c0_37, %c0_38] : memref<1x128xf32, #tpu.memory_space<vmem>>, vector<1x128xf32>
    %66 = arith.mulf %59, %59 : vector<256x128xf32>
    %cst_39 = arith.constant dense<0.000000e+00> : vector<128xf32>
    %67 = vector.multi_reduction <add>, %66, %cst_39 [0] : vector<256x128xf32> to vector<128xf32>
    %68 = vector.shape_cast %67 : vector<128xf32> to vector<1x128xf32>
    %69 = arith.addf %65, %68 : vector<1x128xf32>
    %c0_40 = arith.constant 0 : index
    %c0_41 = arith.constant 0 : index
    %70 = vector.load %arg4[%c0_40, %c0_41] : memref<1x128xf32, #tpu.memory_space<vmem>>, vector<1x128xf32>
    tpu.vector_store %arg4[%c0_40, %c0_41], %69 {strides = array<i32>} : memref<1x128xf32, #tpu.memory_space<vmem>>, vector<1x128xf32>,
    return
  }
  func.func @transform_0(%arg0: i32) -> (i32, i32, i32, i32) {
    %c0_i32 = arith.constant 0 : i32
    %c0_i32_0 = arith.constant 0 : i32
    %c0_i32_1 = arith.constant 0 : i32
    %c0_i32_2 = arith.constant 0 : i32
    return %arg0, %c0_i32, %c0_i32_0, %c0_i32_1 : i32, i32, i32, i32
  }
  func.func @transform_1(%arg0: i32) -> (i32, i32, i32) {
    %c0_i32 = arith.constant 0 : i32
    %c0_i32_0 = arith.constant 0 : i32
    %c0_i32_1 = arith.constant 0 : i32
    %c0_i32_2 = arith.constant 0 : i32
    return %c0_i32, %c0_i32_0, %c0_i32_1 : i32, i32, i32
  }
  func.func @transform_2(%arg0: i32) -> (i32, i32) {
    %c0_i32 = arith.constant 0 : i32
    %c0_i32_0 = arith.constant 0 : i32
    %c0_i32_1 = arith.constant 0 : i32
    return %c0_i32, %c0_i32_0 : i32, i32
  }
  func.func @transform_3(%arg0: i32) -> (i32, i32) {
    %c0_i32 = arith.constant 0 : i32
    %c0_i32_0 = arith.constant 0 : i32
    %c0_i32_1 = arith.constant 0 : i32
    return %c0_i32, %c0_i32_0 : i32, i32
  }
}

module attributes {stable_mosaic.version = 11 : i64} {
  func.func @_apply_kernel(%arg0: i32, %arg1: memref<1x18x18x4xf32, #tpu.memory_space<vmem>>, %arg2: memref<9x4x128xf32, #tpu.memory_space<vmem>>, %arg3: memref<2x128xf32, #tpu.memory_space<vmem>>, %arg4: memref<256x128xf32, #tpu.memory_space<vmem>>) attributes {dimension_semantics = [#tpu.dimension_semantics<parallel>], iteration_bounds = array<i64: 2>, scalar_prefetch = 0 : i64, scratch_operands = 0 : i64, tpu.core_type = #tpu.core_type<tc>, window_params = [{transform_indices = @transform_0, window_bounds = array<i64: 1, 18, 18, 4>}, {pipeline_mode = #tpu.pipeline_mode<synchronous>, transform_indices = @transform_1, window_bounds = array<i64: 9, 4, 128>}, {pipeline_mode = #tpu.pipeline_mode<synchronous>, transform_indices = @transform_2, window_bounds = array<i64: 2, 128>}, {transform_indices = @transform_3, window_bounds = array<i64: 256, 128>}]} {
    %c0 = arith.constant 0 : index
    %c0_0 = arith.constant 0 : index
    %c0_1 = arith.constant 0 : index
    %c0_2 = arith.constant 0 : index
    %0 = vector.load %arg1[%c0, %c0_0, %c0_1, %c0_2] : memref<1x18x18x4xf32, #tpu.memory_space<vmem>>, vector<1x18x18x4xf32>
    %1 = vector.shape_cast %0 : vector<1x18x18x4xf32> to vector<18x18x4xf32>
    %cst = arith.constant 0.000000e+00 : f32
    %2 = vector.broadcast %cst : f32 to vector<256x128xf32>
    %3 = vector.extract_strided_slice %1 {offsets = [0, 0, 0], sizes = [16, 16, 4], strides = [1, 1, 1]} : vector<18x18x4xf32> to vector<16x16x4xf32>
    %4 = vector.shape_cast %3 : vector<16x16x4xf32> to vector<256x4xf32>
    %c0_3 = arith.constant 0 : index
    %c0_4 = arith.constant 0 : index
    %c0_5 = arith.constant 0 : index
    %5 = vector.load %arg2[%c0_3, %c0_4, %c0_5] : memref<9x4x128xf32, #tpu.memory_space<vmem>>, vector<1x4x128xf32>
    %6 = vector.shape_cast %5 : vector<1x4x128xf32> to vector<4x128xf32>
    %cst_6 = arith.constant dense<0.000000e+00> : vector<256x128xf32>
    %7 = tpu.matmul %4, %6, %cst_6 {dimension_numbers = #tpu.dot_dimension_numbers<[1], [0], [0], [1], [0, 0, 1, 1], [], []>} : vector<256x4xf32>, vector<4x128xf32>, vector<256x128xf32> -> vector<256x128xf32>
    %8 = arith.addf %2, %7 : vector<256x128xf32>
    %9 = vector.extract_strided_slice %1 {offsets = [0, 1, 0], sizes = [16, 16, 4], strides = [1, 1, 1]} : vector<18x18x4xf32> to vector<16x16x4xf32>
    %10 = vector.shape_cast %9 : vector<16x16x4xf32> to vector<256x4xf32>
    %c1 = arith.constant 1 : index
    %c0_7 = arith.constant 0 : index
    %c0_8 = arith.constant 0 : index
    %11 = vector.load %arg2[%c1, %c0_7, %c0_8] : memref<9x4x128xf32, #tpu.memory_space<vmem>>, vector<1x4x128xf32>
    %12 = vector.shape_cast %11 : vector<1x4x128xf32> to vector<4x128xf32>
    %cst_9 = arith.constant dense<0.000000e+00> : vector<256x128xf32>
    %13 = tpu.matmul %10, %12, %cst_9 {dimension_numbers = #tpu.dot_dimension_numbers<[1], [0], [0], [1], [0, 0, 1, 1], [], []>} : vector<256x4xf32>, vector<4x128xf32>, vector<256x128xf32> -> vector<256x128xf32>
    %14 = arith.addf %8, %13 : vector<256x128xf32>
    %15 = vector.extract_strided_slice %1 {offsets = [0, 2, 0], sizes = [16, 16, 4], strides = [1, 1, 1]} : vector<18x18x4xf32> to vector<16x16x4xf32>
    %16 = vector.shape_cast %15 : vector<16x16x4xf32> to vector<256x4xf32>
    %c2 = arith.constant 2 : index
    %c0_10 = arith.constant 0 : index
    %c0_11 = arith.constant 0 : index
    %17 = vector.load %arg2[%c2, %c0_10, %c0_11] : memref<9x4x128xf32, #tpu.memory_space<vmem>>, vector<1x4x128xf32>
    %18 = vector.shape_cast %17 : vector<1x4x128xf32> to vector<4x128xf32>
    %cst_12 = arith.constant dense<0.000000e+00> : vector<256x128xf32>
    %19 = tpu.matmul %16, %18, %cst_12 {dimension_numbers = #tpu.dot_dimension_numbers<[1], [0], [0], [1], [0, 0, 1, 1], [], []>} : vector<256x4xf32>, vector<4x128xf32>, vector<256x128xf32> -> vector<256x128xf32>
    %20 = arith.addf %14, %19 : vector<256x128xf32>
    %21 = vector.extract_strided_slice %1 {offsets = [1, 0, 0], sizes = [16, 16, 4], strides = [1, 1, 1]} : vector<18x18x4xf32> to vector<16x16x4xf32>
    %22 = vector.shape_cast %21 : vector<16x16x4xf32> to vector<256x4xf32>
    %c3 = arith.constant 3 : index
    %c0_13 = arith.constant 0 : index
    %c0_14 = arith.constant 0 : index
    %23 = vector.load %arg2[%c3, %c0_13, %c0_14] : memref<9x4x128xf32, #tpu.memory_space<vmem>>, vector<1x4x128xf32>
    %24 = vector.shape_cast %23 : vector<1x4x128xf32> to vector<4x128xf32>
    %cst_15 = arith.constant dense<0.000000e+00> : vector<256x128xf32>
    %25 = tpu.matmul %22, %24, %cst_15 {dimension_numbers = #tpu.dot_dimension_numbers<[1], [0], [0], [1], [0, 0, 1, 1], [], []>} : vector<256x4xf32>, vector<4x128xf32>, vector<256x128xf32> -> vector<256x128xf32>
    %26 = arith.addf %20, %25 : vector<256x128xf32>
    %27 = vector.extract_strided_slice %1 {offsets = [1, 1, 0], sizes = [16, 16, 4], strides = [1, 1, 1]} : vector<18x18x4xf32> to vector<16x16x4xf32>
    %28 = vector.shape_cast %27 : vector<16x16x4xf32> to vector<256x4xf32>
    %c4 = arith.constant 4 : index
    %c0_16 = arith.constant 0 : index
    %c0_17 = arith.constant 0 : index
    %29 = vector.load %arg2[%c4, %c0_16, %c0_17] : memref<9x4x128xf32, #tpu.memory_space<vmem>>, vector<1x4x128xf32>
    %30 = vector.shape_cast %29 : vector<1x4x128xf32> to vector<4x128xf32>
    %cst_18 = arith.constant dense<0.000000e+00> : vector<256x128xf32>
    %31 = tpu.matmul %28, %30, %cst_18 {dimension_numbers = #tpu.dot_dimension_numbers<[1], [0], [0], [1], [0, 0, 1, 1], [], []>} : vector<256x4xf32>, vector<4x128xf32>, vector<256x128xf32> -> vector<256x128xf32>
    %32 = arith.addf %26, %31 : vector<256x128xf32>
    %33 = vector.extract_strided_slice %1 {offsets = [1, 2, 0], sizes = [16, 16, 4], strides = [1, 1, 1]} : vector<18x18x4xf32> to vector<16x16x4xf32>
    %34 = vector.shape_cast %33 : vector<16x16x4xf32> to vector<256x4xf32>
    %c5 = arith.constant 5 : index
    %c0_19 = arith.constant 0 : index
    %c0_20 = arith.constant 0 : index
    %35 = vector.load %arg2[%c5, %c0_19, %c0_20] : memref<9x4x128xf32, #tpu.memory_space<vmem>>, vector<1x4x128xf32>
    %36 = vector.shape_cast %35 : vector<1x4x128xf32> to vector<4x128xf32>
    %cst_21 = arith.constant dense<0.000000e+00> : vector<256x128xf32>
    %37 = tpu.matmul %34, %36, %cst_21 {dimension_numbers = #tpu.dot_dimension_numbers<[1], [0], [0], [1], [0, 0, 1, 1], [], []>} : vector<256x4xf32>, vector<4x128xf32>, vector<256x128xf32> -> vector<256x128xf32>
    %38 = arith.addf %32, %37 : vector<256x128xf32>
    %39 = vector.extract_strided_slice %1 {offsets = [2, 0, 0], sizes = [16, 16, 4], strides = [1, 1, 1]} : vector<18x18x4xf32> to vector<16x16x4xf32>
    %40 = vector.shape_cast %39 : vector<16x16x4xf32> to vector<256x4xf32>
    %c6 = arith.constant 6 : index
    %c0_22 = arith.constant 0 : index
    %c0_23 = arith.constant 0 : index
    %41 = vector.load %arg2[%c6, %c0_22, %c0_23] : memref<9x4x128xf32, #tpu.memory_space<vmem>>, vector<1x4x128xf32>
    %42 = vector.shape_cast %41 : vector<1x4x128xf32> to vector<4x128xf32>
    %cst_24 = arith.constant dense<0.000000e+00> : vector<256x128xf32>
    %43 = tpu.matmul %40, %42, %cst_24 {dimension_numbers = #tpu.dot_dimension_numbers<[1], [0], [0], [1], [0, 0, 1, 1], [], []>} : vector<256x4xf32>, vector<4x128xf32>, vector<256x128xf32> -> vector<256x128xf32>
    %44 = arith.addf %38, %43 : vector<256x128xf32>
    %45 = vector.extract_strided_slice %1 {offsets = [2, 1, 0], sizes = [16, 16, 4], strides = [1, 1, 1]} : vector<18x18x4xf32> to vector<16x16x4xf32>
    %46 = vector.shape_cast %45 : vector<16x16x4xf32> to vector<256x4xf32>
    %c7 = arith.constant 7 : index
    %c0_25 = arith.constant 0 : index
    %c0_26 = arith.constant 0 : index
    %47 = vector.load %arg2[%c7, %c0_25, %c0_26] : memref<9x4x128xf32, #tpu.memory_space<vmem>>, vector<1x4x128xf32>
    %48 = vector.shape_cast %47 : vector<1x4x128xf32> to vector<4x128xf32>
    %cst_27 = arith.constant dense<0.000000e+00> : vector<256x128xf32>
    %49 = tpu.matmul %46, %48, %cst_27 {dimension_numbers = #tpu.dot_dimension_numbers<[1], [0], [0], [1], [0, 0, 1, 1], [], []>} : vector<256x4xf32>, vector<4x128xf32>, vector<256x128xf32> -> vector<256x128xf32>
    %50 = arith.addf %44, %49 : vector<256x128xf32>
    %51 = vector.extract_strided_slice %1 {offsets = [2, 2, 0], sizes = [16, 16, 4], strides = [1, 1, 1]} : vector<18x18x4xf32> to vector<16x16x4xf32>
    %52 = vector.shape_cast %51 : vector<16x16x4xf32> to vector<256x4xf32>
    %c8 = arith.constant 8 : index
    %c0_28 = arith.constant 0 : index
    %c0_29 = arith.constant 0 : index
    %53 = vector.load %arg2[%c8, %c0_28, %c0_29] : memref<9x4x128xf32, #tpu.memory_space<vmem>>, vector<1x4x128xf32>
    %54 = vector.shape_cast %53 : vector<1x4x128xf32> to vector<4x128xf32>
    %cst_30 = arith.constant dense<0.000000e+00> : vector<256x128xf32>
    %55 = tpu.matmul %52, %54, %cst_30 {dimension_numbers = #tpu.dot_dimension_numbers<[1], [0], [0], [1], [0, 0, 1, 1], [], []>} : vector<256x4xf32>, vector<4x128xf32>, vector<256x128xf32> -> vector<256x128xf32>
    %56 = arith.addf %50, %55 : vector<256x128xf32>
    %c0_31 = arith.constant 0 : index
    %c0_32 = arith.constant 0 : index
    %57 = vector.load %arg3[%c0_31, %c0_32] : memref<2x128xf32, #tpu.memory_space<vmem>>, vector<2x128xf32>
    %58 = vector.extract_strided_slice %57 {offsets = [0, 0], sizes = [1, 128], strides = [1, 1]} : vector<2x128xf32> to vector<1x128xf32>
    %59 = vector.broadcast %58 : vector<1x128xf32> to vector<256x128xf32>
    %60 = arith.mulf %56, %59 : vector<256x128xf32>
    %61 = vector.extract_strided_slice %57 {offsets = [1, 0], sizes = [1, 128], strides = [1, 1]} : vector<2x128xf32> to vector<1x128xf32>
    %62 = vector.broadcast %61 : vector<1x128xf32> to vector<256x128xf32>
    %63 = arith.addf %60, %62 : vector<256x128xf32>
    %cst_33 = arith.constant 0.000000e+00 : f32
    %64 = vector.broadcast %cst_33 : f32 to vector<256x128xf32>
    %65 = arith.maximumf %63, %64 : vector<256x128xf32>
    %c0_34 = arith.constant 0 : index
    %c0_35 = arith.constant 0 : index
    %66 = vector.load %arg4[%c0_34, %c0_35] : memref<256x128xf32, #tpu.memory_space<vmem>>, vector<256x128xf32>
    tpu.vector_store %arg4[%c0_34, %c0_35], %65 {strides = array<i32>} : memref<256x128xf32, #tpu.memory_space<vmem>>, vector<256x128xf32>,
    return
  }
  func.func @transform_0(%arg0: i32) -> (i32, i32, i32, i32) {
    %c0_i32 = arith.constant 0 : i32
    %c0_i32_0 = arith.constant 0 : i32
    %c0_i32_1 = arith.constant 0 : i32
    %c0_i32_2 = arith.constant 0 : i32
    return %arg0, %c0_i32, %c0_i32_0, %c0_i32_1 : i32, i32, i32, i32
  }
  func.func @transform_1(%arg0: i32) -> (i32, i32, i32) {
    %c0_i32 = arith.constant 0 : i32
    %c0_i32_0 = arith.constant 0 : i32
    %c0_i32_1 = arith.constant 0 : i32
    %c0_i32_2 = arith.constant 0 : i32
    return %c0_i32, %c0_i32_0, %c0_i32_1 : i32, i32, i32
  }
  func.func @transform_2(%arg0: i32) -> (i32, i32) {
    %c0_i32 = arith.constant 0 : i32
    %c0_i32_0 = arith.constant 0 : i32
    %c0_i32_1 = arith.constant 0 : i32
    return %c0_i32, %c0_i32_0 : i32, i32
  }
  func.func @transform_3(%arg0: i32) -> (i32, i32) {
    %c0_i32 = arith.constant 0 : i32
    %c0_i32_0 = arith.constant 0 : i32
    return %arg0, %c0_i32 : i32, i32
  }
}

</mosaic_0001>

<llo_original>
// kernel: conv_block_forward.2
$region0: #{conv_block_forward.2}
  #allocation0 [shape = 'u32[]', space=smem, size = 0x4, offset = 0x4, fixed_abs, tag = 'smem constant byte address 0x4 - core index']
  #allocation1 [shape = 'u32[72,128]{1,0:T(1,128)}', space=vmem, size = 0x9000, scoped, tag = 'internal scratch']
  %s0 = inlined_call_operand.vmem [shape: f32[2,18,18,4], index: 0, kind: input, shape index: {}]
  %s1 = inlined_call_operand.vmem [shape: f32[9,4,128], index: 1, kind: input, shape index: {}]
  %s2 = inlined_call_operand.vmem [shape: f32[1,128], index: 2, kind: output, shape index: {0}]
  %s3 = inlined_call_operand.vmem [shape: f32[1,128], index: 3, kind: output, shape index: {1}]
  %4 = xla_tuple %s2, %s3
  %s5 = sld [smem:[#allocation0]]
  $region53: #{conv_block_forward.2} parent=0
    _
  %s7 = ssub.s32 1, %s5
  %s8 = scalar_select 0, %s7, %s5
  loop: start=0, step=1, limit=4
  $region2: #{conv_block_forward.2} parent=0 // loop_pre_header
    _
  $region3: #{conv_block_forward.2} parent=0 // loop_header
    %s10 = sphi 0, %s14
    %p11 = scmp.ge.s32.totalorder %s10, 4
    %s20 = sphi 0, %s22
    %s23 = sphi 0, %s20
    %s24 = sphi 0, %s23
    %s40 = sphi 0, %s24
    %s44 = sphi 0, %s44
    %s46 = sphi 0, %s44
    %s47 = sphi 0, %s46
    %s61 = sphi 0, %s47
    %s65 = sphi 0, %s65
    %s67 = sphi 0, %s65
    %s68 = sphi 0, %s67
    %s82 = sphi 0, %s68
    %s86 = sphi 0, %s86
    %s88 = sphi 0, %s86
    %s89 = sphi 0, %s88
    %s103 = sphi 0, %s89
  $region4: #{conv_block_forward.2} parent=0 // loop_header_branch
    %13 = sbr.rel (%p11) target = $region8
  $region5: #{conv_block_forward.2} parent=0 // loop_body
    %s15 = ssub.s32 %s10, 1
    %s16 = ssub.s32 %s10, 2
    %s17 = sadd.s32 %s10, 1
    %s18 = ssub.s32 %s10, %s17
    %p19 = scmp.eq.s32.totalorder %s18, 0
    %s21 = sadd.s32 %s20, 1
    %s22 = scalar_select %p19, %s20, %s21
    %p25 = pneg %p19
    %p26 = scmp.eq.s32.totalorder %s10, 1
    %p27 = por %p25, %p26
    %p28 = scmp.ne.s32.totalorder %s20, %s23
    %p29 = scmp.eq.s32.totalorder %s10, 0
    %p30 = por %p28, %p29
    %p31 = scmp.ne.s32.totalorder %s20, %s23
    %p32 = scmp.eq.s32.totalorder %s15, 1
    %p33 = por %p31, %p32
    %p34 = scmp.ne.s32.totalorder %s23, %s24
    %p35 = scmp.eq.s32.totalorder %s15, 0
    %p36 = por %p34, %p35
    %p37 = scmp.ne.s32.totalorder %s23, %s24
    %p38 = scmp.eq.s32.totalorder %s16, 1
    %p39 = por %p37, %p38
    %p41 = scmp.ne.s32.totalorder %s24, %s40
    %p42 = scmp.eq.s32.totalorder %s16, 0
    %p43 = por %p41, %p42
    %s45 = sadd.s32 %s44, 1
    %p48 = scmp.eq.s32.totalorder %s10, 1
    %p49 = scmp.ne.s32.totalorder %s44, %s46
    %p50 = scmp.eq.s32.totalorder %s10, 0
    %p51 = por %p49, %p50
    %p52 = scmp.ne.s32.totalorder %s44, %s46
    %p53 = scmp.eq.s32.totalorder %s15, 1
    %p54 = por %p52, %p53
    %p55 = scmp.ne.s32.totalorder %s46, %s47
    %p56 = scmp.eq.s32.totalorder %s15, 0
    %p57 = por %p55, %p56
    %p58 = scmp.ne.s32.totalorder %s46, %s47
    %p59 = scmp.eq.s32.totalorder %s16, 1
    %p60 = por %p58, %p59
    %p62 = scmp.ne.s32.totalorder %s47, %s61
    %p63 = scmp.eq.s32.totalorder %s16, 0
    %p64 = por %p62, %p63
    %s66 = sadd.s32 %s65, 1
    %p69 = scmp.eq.s32.totalorder %s10, 1
    %p70 = scmp.ne.s32.totalorder %s65, %s67
    %p71 = scmp.eq.s32.totalorder %s10, 0
    %p72 = por %p70, %p71
    %p73 = scmp.ne.s32.totalorder %s65, %s67
    %p74 = scmp.eq.s32.totalorder %s15, 1
    %p75 = por %p73, %p74
    %p76 = scmp.ne.s32.totalorder %s67, %s68
    %p77 = scmp.eq.s32.totalorder %s15, 0
    %p78 = por %p76, %p77
    %p79 = scmp.ne.s32.totalorder %s67, %s68
    %p80 = scmp.eq.s32.totalorder %s16, 1
    %p81 = por %p79, %p80
    %p83 = scmp.ne.s32.totalorder %s68, %s82
    %p84 = scmp.eq.s32.totalorder %s16, 0
    %p85 = por %p83, %p84
    %s87 = sadd.s32 %s86, 1
    %p90 = scmp.eq.s32.totalorder %s10, 1
    %p91 = scmp.ne.s32.totalorder %s86, %s88
    %p92 = scmp.eq.s32.totalorder %s10, 0
    %p93 = por %p91, %p92
    %p94 = scmp.ne.s32.totalorder %s86, %s88
    %p95 = scmp.eq.s32.totalorder %s15, 1
    %p96 = por %p94, %p95
    %p97 = scmp.ne.s32.totalorder %s88, %s89
    %p98 = scmp.eq.s32.totalorder %s15, 0
    %p99 = por %p97, %p98
    %p100 = scmp.ne.s32.totalorder %s88, %s89
    %p101 = scmp.eq.s32.totalorder %s16, 1
    %p102 = por %p100, %p101
    %p104 = scmp.ne.s32.totalorder %s89, %s103
    %p105 = scmp.eq.s32.totalorder %s16, 0
    %p106 = por %p104, %p105
    %p107 = scmp.le.s32.totalorder 1, %s10
    %p108 = scmp.lt.s32.totalorder %s10, 3
    %p109 = pnand %p107, %p108
    %p110 = pneg %p109
    // Predicated region
    $region9: #{conv_block_forward.2} parent=5 // pred_check
      _
    $region10: #{conv_block_forward.2} parent=5 // pred_check_branch
      %112 = sbr.rel (%p109) target = $region12
    $region11: #{conv_block_forward.2} parent=5 // pred_region
      %s113 = ssub.s32 %s10, 1
      // Predicated region
      $region13: #{conv_block_forward.2} parent=11 // pred_check
        %p114 = pneg %p57
      $region14: #{conv_block_forward.2} parent=11 // pred_check_branch
        %116 = sbr.rel (%p114) target = $region16
      $region15: #{conv_block_forward.2} parent=11 // pred_region
        _
      $region16: #{conv_block_forward.2} parent=11 // pred_fallthru
        _
    $region12: #{conv_block_forward.2} parent=5 // pred_fallthru
      _
    %p117 = scmp.lt.s32.totalorder %s10, 2
    // Predicated region
    $region17: #{conv_block_forward.2} parent=5 // pred_check
      %p118 = pneg %p117
    $region18: #{conv_block_forward.2} parent=5 // pred_check_branch
      %120 = sbr.rel (%p118) target = $region20
    $region19: #{conv_block_forward.2} parent=5 // pred_region
      // Predicated region
      $region21: #{conv_block_forward.2} parent=19 // pred_check
        %p121 = pneg %p30
      $region22: #{conv_block_forward.2} parent=19 // pred_check_branch
        %123 = sbr.rel (%p121) target = $region24
      $region23: #{conv_block_forward.2} parent=19 // pred_region
        %p124 = scmp.lt.s32.totalorder %s10, 1
        %s125 = scalar_select %p124, %s10, 1
        %s126 = smul.addr %s125, 54
        %s127 = smul.addr %s126, 8
        %s128 = scalar_lea.vmem %s0, %s127
      $region24: #{conv_block_forward.2} parent=19 // pred_fallthru
        _
    $region20: #{conv_block_forward.2} parent=5 // pred_fallthru
      _
    %p129 = scmp.le.s32.totalorder 1, %s10
    %p130 = scmp.lt.s32.totalorder %s10, 3
    %p131 = pnand %p129, %p130
    %p132 = pneg %p131
    // Predicated region
    $region25: #{conv_block_forward.2} parent=5 // pred_check
      _
    $region26: #{conv_block_forward.2} parent=5 // pred_check_branch
      %134 = sbr.rel (%p131) target = $region28
    $region27: #{conv_block_forward.2} parent=5 // pred_region
      %s135 = ssub.s32 %s10, 1
      %p136 = scmp.lt.s32.totalorder %s15, 1
      %s137 = scalar_select %p136, %s15, 1
      %s138 = smul.addr %s137, 54
      %s139 = smul.addr %s138, 8
      %s140 = scalar_lea.vmem %s0, %s139
      %p141 = pneg %p36
      %p142 = pneg %p33
      %p143 = pneg %p57
      %p144 = pneg %p54
      %p145 = pneg %p78
      %p146 = pneg %p75
      %p147 = pneg %p99
      %p148 = pneg %p96
      %p149 = scmp.lt.s32.totalorder %s15, 1
      %s150 = scalar_select %p149, %s15, 1
      %s151 = smul.addr %s150, 54
      %s152 = smul.addr %s151, 8
      %s153 = scalar_lea.vmem %s0, %s152
      %p154 = scmp.eq.s32.totalorder %s15, 0
      // Predicated region
      $region29: #{conv_block_forward.2} parent=27 // pred_check
        %p155 = pneg %p154
      $region30: #{conv_block_forward.2} parent=27 // pred_check_branch
        %157 = sbr.rel (%p155) target = $region32
      $region31: #{conv_block_forward.2} parent=27 // pred_region
        %158 = vst [vmem:[%s2] sm:$0x1] 0.0
        %159 = vst [vmem:[%s3] sm:$0x1] 0.0
      $region32: #{conv_block_forward.2} parent=27 // pred_fallthru
        _
      %v160 = vld [vmem:[%s153] sm:$0xff]
      %v161 = vld [vmem:[%s153 + $0x8] sm:$0xff]
      %v162 = vld [vmem:[%s153 + $0x10] sm:$0x3]
      %v163 = vld [vmem:[%s153 + $0x18] sm:$0xff]
      %v164 = vld [vmem:[%s153 + $0x20] sm:$0xff]
      %v165 = vld [vmem:[%s153 + $0x28] sm:$0x3]
      %v166 = vld [vmem:[%s153 + $0x30] sm:$0xff]
      %v167 = vld [vmem:[%s153 + $0x38] sm:$0xff]
      %v168 = vld [vmem:[%s153 + $0x40] sm:$0x3]
      %v169 = vld [vmem:[%s153 + $0x48] sm:$0xff]
      %v170 = vld [vmem:[%s153 + $0x50] sm:$0xff]
      %v171 = vld [vmem:[%s153 + $0x58] sm:$0x3]
      %v172 = vld [vmem:[%s153 + $0x60] sm:$0xff]
      %v173 = vld [vmem:[%s153 + $0x68] sm:$0xff]
      %v174 = vld [vmem:[%s153 + $0x70] sm:$0x3]
      %v175 = vld [vmem:[%s153 + $0x78] sm:$0xff]
      %v176 = vld [vmem:[%s153 + $0x80] sm:$0xff]
      %v177 = vld [vmem:[%s153 + $0x88] sm:$0x3]
      %v178 = vld [vmem:[%s153 + $0x90] sm:$0xff]
      %v179 = vld [vmem:[%s153 + $0x98] sm:$0xff]
      %v180 = vld [vmem:[%s153 + $0xa0] sm:$0x3]
      %v181 = vld [vmem:[%s153 + $0xa8] sm:$0xff]
      %v182 = vld [vmem:[%s153 + $0xb0] sm:$0xff]
      %v183 = vld [vmem:[%s153 + $0xb8] sm:$0x3]
      %v184 = vld [vmem:[%s153 + $0xc0] sm:$0xff]
      %v185 = vld [vmem:[%s153 + $0xc8] sm:$0xff]
      %v186 = vld [vmem:[%s153 + $0xd0] sm:$0x3]
      %v187 = vld [vmem:[%s153 + $0xd8] sm:$0xff]
      %v188 = vld [vmem:[%s153 + $0xe0] sm:$0xff]
      %v189 = vld [vmem:[%s153 + $0xe8] sm:$0x3]
      %v190 = vld [vmem:[%s153 + $0xf0] sm:$0xff]
      %v191 = vld [vmem:[%s153 + $0xf8] sm:$0xff]
      %v192 = vld [vmem:[%s153 + $0x100] sm:$0x3]
      %v193 = vld [vmem:[%s153 + $0x108] sm:$0xff]
      %v194 = vld [vmem:[%s153 + $0x110] sm:$0xff]
      %v195 = vld [vmem:[%s153 + $0x118] sm:$0x3]
      %v196 = vld [vmem:[%s153 + $0x120] sm:$0xff]
      %v197 = vld [vmem:[%s153 + $0x128] sm:$0xff]
      %v198 = vld [vmem:[%s153 + $0x130] sm:$0x3]
      %v199 = vld [vmem:[%s153 + $0x138] sm:$0xff]
      %v200 = vld [vmem:[%s153 + $0x140] sm:$0xff]
      %v201 = vld [vmem:[%s153 + $0x148] sm:$0x3]
      %v202 = vld [vmem:[%s153 + $0x150] sm:$0xff]
      %v203 = vld [vmem:[%s153 + $0x158] sm:$0xff]
      %v204 = vld [vmem:[%s153 + $0x160] sm:$0x3]
      %v205 = vld [vmem:[%s153 + $0x168] sm:$0xff]
      %v206 = vld [vmem:[%s153 + $0x170] sm:$0xff]
      %v207 = vld [vmem:[%s153 + $0x178] sm:$0x3]
      %v208 = vld [vmem:[%s153 + $0x180] sm:$0xff]
      %v209 = vld [vmem:[%s153 + $0x188] sm:$0xff]
      %v210 = vld [vmem:[%s153 + $0x190] sm:$0x3]
      %v211 = vld [vmem:[%s153 + $0x198] sm:$0xff]
      %v212 = vld [vmem:[%s153 + $0x1a0] sm:$0xff]
      %v213 = vld [vmem:[%s153 + $0x1a8] sm:$0x3]
      %v214 = vld [vmem:[%s1] sm:$0xf]
      %vm263 = vcmask 1046528
      %v264 = vrot.slane %v160, 1
      %v265 = vrot.slane %v161, 1
      %v266 = vsel %vm263, %v264, %v265
      %v267 = vrot.slane %v162, 1
      %v268 = vsel %vm263, %v265, %v267
      %v269 = vrot.slane %v163, 1
      %v270 = vrot.slane %v164, 1
      %v271 = vsel %vm263, %v269, %v270
      %v272 = vrot.slane %v165, 1
      %v273 = vsel %vm263, %v270, %v272
      %v274 = vrot.slane %v166, 1
      %v275 = vrot.slane %v167, 1
      %v276 = vsel %vm263, %v274, %v275
      %v277 = vrot.slane %v168, 1
      %v278 = vsel %vm263, %v275, %v277
      %v279 = vrot.slane %v169, 1
      %v280 = vrot.slane %v170, 1
      %v281 = vsel %vm263, %v279, %v280
      %v282 = vrot.slane %v171, 1
      %v283 = vsel %vm263, %v280, %v282
      %v284 = vrot.slane %v172, 1
      %v285 = vrot.slane %v173, 1
      %v286 = vsel %vm263, %v284, %v285
      %v287 = vrot.slane %v174, 1
      %v288 = vsel %vm263, %v285, %v287
      %v289 = vrot.slane %v175, 1
      %v290 = vrot.slane %v176, 1
      %v291 = vsel %vm263, %v289, %v290
      %v292 = vrot.slane %v177, 1
      %v293 = vsel %vm263, %v290, %v292
      %v294 = vrot.slane %v178, 1
      %v295 = vrot.slane %v179, 1
      %v296 = vsel %vm263, %v294, %v295
      %v297 = vrot.slane %v180, 1
      %v298 = vsel %vm263, %v295, %v297
      %v299 = vrot.slane %v181, 1
      %v300 = vrot.slane %v182, 1
      %v301 = vsel %vm263, %v299, %v300
      %v302 = vrot.slane %v183, 1
      %v303 = vsel %vm263, %v300, %v302
      %v304 = vrot.slane %v184, 1
      %v305 = vrot.slane %v185, 1
      %v306 = vsel %vm263, %v304, %v305
      %v307 = vrot.slane %v186, 1
      %v308 = vsel %vm263, %v305, %v307
      %v309 = vrot.slane %v187, 1
      %v310 = vrot.slane %v188, 1
      %v311 = vsel %vm263, %v309, %v310
      %v312 = vrot.slane %v189, 1
      %v313 = vsel %vm263, %v310, %v312
      %v314 = vrot.slane %v190, 1
      %v315 = vrot.slane %v191, 1
      %v316 = vsel %vm263, %v314, %v315
      %v317 = vrot.slane %v192, 1
      %v318 = vsel %vm263, %v315, %v317
      %v319 = vrot.slane %v193, 1
      %v320 = vrot.slane %v194, 1
      %v321 = vsel %vm263, %v319, %v320
      %v322 = vrot.slane %v195, 1
      %v323 = vsel %vm263, %v320, %v322
      %v324 = vrot.slane %v196, 1
      %v325 = vrot.slane %v197, 1
      %v326 = vsel %vm263, %v324, %v325
      %v327 = vrot.slane %v198, 1
      %v328 = vsel %vm263, %v325, %v327
      %v329 = vrot.slane %v199, 1
      %v330 = vrot.slane %v200, 1
      %v331 = vsel %vm263, %v329, %v330
      %v332 = vrot.slane %v201, 1
      %v333 = vsel %vm263, %v330, %v332
      %v334 = vrot.slane %v202, 1
      %v335 = vrot.slane %v203, 1
      %v336 = vsel %vm263, %v334, %v335
      %v337 = vrot.slane %v204, 1
      %v338 = vsel %vm263, %v335, %v337
      %v339 = vrot.slane %v205, 1
      %v340 = vrot.slane %v206, 1
      %v341 = vsel %vm263, %v339, %v340
      %v342 = vrot.slane %v207, 1
      %v343 = vsel %vm263, %v340, %v342
      %s344 = scalar_lea.vmem %s1, 4
      %v345 = vld [vmem:[%s344] sm:$0xf]
      %vm346 = vcmask 31744
      %v347 = vsel %vm346, %v266, 0
      %v349 = vsel %vm346, %v268, 0
      %v351 = vsel %vm346, %v271, 0
      %v353 = vsel %vm346, %v273, 0
      %v355 = vsel %vm346, %v276, 0
      %v357 = vsel %vm346, %v278, 0
      %v359 = vsel %vm346, %v281, 0
      %v361 = vsel %vm346, %v283, 0
      %v363 = vsel %vm346, %v286, 0
      %v365 = vsel %vm346, %v288, 0
      %v367 = vsel %vm346, %v291, 0
      %v369 = vsel %vm346, %v293, 0
      %v371 = vsel %vm346, %v296, 0
      %v373 = vsel %vm346, %v298, 0
      %v375 = vsel %vm346, %v301, 0
      %v377 = vsel %vm346, %v303, 0
      %v379 = vsel %vm346, %v306, 0
      %v381 = vsel %vm346, %v308, 0
      %v383 = vsel %vm346, %v311, 0
      %v385 = vsel %vm346, %v313, 0
      %v387 = vsel %vm346, %v316, 0
      %v389 = vsel %vm346, %v318, 0
      %v391 = vsel %vm346, %v321, 0
      %v393 = vsel %vm346, %v323, 0
      %v395 = vsel %vm346, %v326, 0
      %v397 = vsel %vm346, %v328, 0
      %v399 = vsel %vm346, %v331, 0
      %v401 = vsel %vm346, %v333, 0
      %v403 = vsel %vm346, %v336, 0
      %v405 = vsel %vm346, %v338, 0
      %v407 = vsel %vm346, %v341, 0
      %v409 = vsel %vm346, %v343, 0
      %vm411 = vcmask 1043456
      %v413 = vsel %vm411, %v345, 0
      %415 = vmatpush.msra.mxu0 0.0
      %416 = vmatpush.msra.mxu0 0.0
      %417 = vmatpush.msra.mxu0 0.0
      %418 = vmatpush.msra.mxu0 0.0
      %419 = vmatpush.msra.mxu0 0.0
      %420 = vmatpush.msra.mxu0 0.0
      %421 = vmatpush.msra.mxu0 0.0
      %422 = vmatpush.msra.mxu0 0.0
      %423 = vmatpush.msra.mxu0 0.0
      %424 = vmatpush.msra.mxu0 0.0
      %425 = vmatpush.msra.mxu0 0.0
      %426 = vmatpush.msra.mxu0 0.0
      %427 = vmatpush.msra.mxu0 0.0
      %428 = vmatpush.msra.mxu0 0.0
      %429 = vmatpush.msra.mxu0 0.0
      %430 = vmatpush.msra.mxu0 %v413
      %431 = vmatmul.f32.gmra.mxu0 %v347
      %v432 = vpop.f32.mrf.mxu0
      %v433 = vadd.f32 0.0, %v432
      %434 = vmatmul.f32.gmra.mxu0 %v349
      %v435 = vpop.f32.mrf.mxu0
      %v436 = vadd.f32 0.0, %v435
      %437 = vmatmul.f32.gmra.mxu0 %v351
      %v438 = vpop.f32.mrf.mxu0
      %v439 = vadd.f32 0.0, %v438
      %440 = vmatmul.f32.gmra.mxu0 %v353
      %v441 = vpop.f32.mrf.mxu0
      %v442 = vadd.f32 0.0, %v441
      %443 = vmatmul.f32.gmra.mxu0 %v355
      %v444 = vpop.f32.mrf.mxu0
      %v445 = vadd.f32 0.0, %v444
      %446 = vmatmul.f32.gmra.mxu0 %v357
      %v447 = vpop.f32.mrf.mxu0
      %v448 = vadd.f32 0.0, %v447
      %449 = vmatmul.f32.gmra.mxu0 %v359
      %v450 = vpop.f32.mrf.mxu0
      %v451 = vadd.f32 0.0, %v450
      %452 = vmatmul.f32.gmra.mxu0 %v361
      %v453 = vpop.f32.mrf.mxu0
      %v454 = vadd.f32 0.0, %v453
      %455 = vmatmul.f32.gmra.mxu0 %v363
      %v456 = vpop.f32.mrf.mxu0
      %v457 = vadd.f32 0.0, %v456
      %458 = vmatmul.f32.gmra.mxu0 %v365
      %v459 = vpop.f32.mrf.mxu0
      %v460 = vadd.f32 0.0, %v459
      %461 = vmatmul.f32.gmra.mxu0 %v367
      %v462 = vpop.f32.mrf.mxu0
      %v463 = vadd.f32 0.0, %v462
      %464 = vmatmul.f32.gmra.mxu0 %v369
      %v465 = vpop.f32.mrf.mxu0
      %v466 = vadd.f32 0.0, %v465
      %467 = vmatmul.f32.gmra.mxu0 %v371
      %v468 = vpop.f32.mrf.mxu0
      %v469 = vadd.f32 0.0, %v468
      %470 = vmatmul.f32.gmra.mxu0 %v373
      %v471 = vpop.f32.mrf.mxu0
      %v472 = vadd.f32 0.0, %v471
      %473 = vmatmul.f32.gmra.mxu0 %v375
      %v474 = vpop.f32.mrf.mxu0
      %v475 = vadd.f32 0.0, %v474
      %476 = vmatmul.f32.gmra.mxu0 %v377
      %v477 = vpop.f32.mrf.mxu0
      %v478 = vadd.f32 0.0, %v477
      %479 = vmatmul.f32.gmra.mxu0 %v379
      %v480 = vpop.f32.mrf.mxu0
      %v481 = vadd.f32 0.0, %v480
      %482 = vmatmul.f32.gmra.mxu0 %v381
      %v483 = vpop.f32.mrf.mxu0
      %v484 = vadd.f32 0.0, %v483
      %485 = vmatmul.f32.gmra.mxu0 %v383
      %v486 = vpop.f32.mrf.mxu0
      %v487 = vadd.f32 0.0, %v486
      %488 = vmatmul.f32.gmra.mxu0 %v385
      %v489 = vpop.f32.mrf.mxu0
      %v490 = vadd.f32 0.0, %v489
      %491 = vmatmul.f32.gmra.mxu0 %v387
      %v492 = vpop.f32.mrf.mxu0
      %v493 = vadd.f32 0.0, %v492
      %494 = vmatmul.f32.gmra.mxu0 %v389
      %v495 = vpop.f32.mrf.mxu0
      %v496 = vadd.f32 0.0, %v495
      %497 = vmatmul.f32.gmra.mxu0 %v391
      %v498 = vpop.f32.mrf.mxu0
      %v499 = vadd.f32 0.0, %v498
      %500 = vmatmul.f32.gmra.mxu0 %v393
      %v501 = vpop.f32.mrf.mxu0
      %v502 = vadd.f32 0.0, %v501
      %503 = vmatmul.f32.gmra.mxu0 %v395
      %v504 = vpop.f32.mrf.mxu0
      %v505 = vadd.f32 0.0, %v504
      %506 = vmatmul.f32.gmra.mxu0 %v397
      %v507 = vpop.f32.mrf.mxu0
      %v508 = vadd.f32 0.0, %v507
      %509 = vmatmul.f32.gmra.mxu0 %v399
      %v510 = vpop.f32.mrf.mxu0
      %v511 = vadd.f32 0.0, %v510
      %512 = vmatmul.f32.gmra.mxu0 %v401
      %v513 = vpop.f32.mrf.mxu0
      %v514 = vadd.f32 0.0, %v513
      %515 = vmatmul.f32.gmra.mxu0 %v403
      %v516 = vpop.f32.mrf.mxu0
      %v517 = vadd.f32 0.0, %v516
      %518 = vmatmul.f32.gmra.mxu0 %v405
      %v519 = vpop.f32.mrf.mxu0
      %v520 = vadd.f32 0.0, %v519
      %521 = vmatmul.f32.gmra.mxu0 %v407
      %v522 = vpop.f32.mrf.mxu0
      %v523 = vadd.f32 0.0, %v522
      %524 = vmatmul.f32.gmra.mxu0 %v409
      %v525 = vpop.f32.mrf.mxu0
      %v526 = vadd.f32 0.0, %v525
      %527 = vdwg.mxu0
      %v528 = vsel %vm346, %v160, 0
      %v530 = vsel %vm346, %v161, 0
      %v532 = vsel %vm346, %v163, 0
      %v534 = vsel %vm346, %v164, 0
      %v536 = vsel %vm346, %v166, 0
      %v538 = vsel %vm346, %v167, 0
      %v540 = vsel %vm346, %v169, 0
      %v542 = vsel %vm346, %v170, 0
      %v544 = vsel %vm346, %v172, 0
      %v546 = vsel %vm346, %v173, 0
      %v548 = vsel %vm346, %v175, 0
      %v550 = vsel %vm346, %v176, 0
      %v552 = vsel %vm346, %v178, 0
      %v554 = vsel %vm346, %v179, 0
      %v556 = vsel %vm346, %v181, 0
      %v558 = vsel %vm346, %v182, 0
      %v560 = vsel %vm346, %v184, 0
      %v562 = vsel %vm346, %v185, 0
      %v564 = vsel %vm346, %v187, 0
      %v566 = vsel %vm346, %v188, 0
      %v568 = vsel %vm346, %v190, 0
      %v570 = vsel %vm346, %v191, 0
      %v572 = vsel %vm346, %v193, 0
      %v574 = vsel %vm346, %v194, 0
      %v576 = vsel %vm346, %v196, 0
      %v578 = vsel %vm346, %v197, 0
      %v580 = vsel %vm346, %v199, 0
      %v582 = vsel %vm346, %v200, 0
      %v584 = vsel %vm346, %v202, 0
      %v586 = vsel %vm346, %v203, 0
      %v588 = vsel %vm346, %v205, 0
      %v590 = vsel %vm346, %v206, 0
      %v593 = vsel %vm411, %v214, 0
      %595 = vmatpush.msra.mxu0 0.0
      %596 = vmatpush.msra.mxu0 0.0
      %597 = vmatpush.msra.mxu0 0.0
      %598 = vmatpush.msra.mxu0 0.0
      %599 = vmatpush.msra.mxu0 0.0
      %600 = vmatpush.msra.mxu0 0.0
      %601 = vmatpush.msra.mxu0 0.0
      %602 = vmatpush.msra.mxu0 0.0
      %603 = vmatpush.msra.mxu0 0.0
      %604 = vmatpush.msra.mxu0 0.0
      %605 = vmatpush.msra.mxu0 0.0
      %606 = vmatpush.msra.mxu0 0.0
      %607 = vmatpush.msra.mxu0 0.0
      %608 = vmatpush.msra.mxu0 0.0
      %609 = vmatpush.msra.mxu0 0.0
      %610 = vmatpush.msra.mxu0 %v593
      %611 = vmatmul.f32.gmra.mxu0 %v528
      %v612 = vpop.f32.mrf.mxu0
      %v613 = vadd.f32 %v433, %v612
      %614 = vmatmul.f32.gmra.mxu0 %v530
      %v615 = vpop.f32.mrf.mxu0
      %v616 = vadd.f32 %v436, %v615
      %617 = vmatmul.f32.gmra.mxu0 %v532
      %v618 = vpop.f32.mrf.mxu0
      %v619 = vadd.f32 %v439, %v618
      %620 = vmatmul.f32.gmra.mxu0 %v534
      %v621 = vpop.f32.mrf.mxu0
      %v622 = vadd.f32 %v442, %v621
      %623 = vmatmul.f32.gmra.mxu0 %v536
      %v624 = vpop.f32.mrf.mxu0
      %v625 = vadd.f32 %v445, %v624
      %626 = vmatmul.f32.gmra.mxu0 %v538
      %v627 = vpop.f32.mrf.mxu0
      %v628 = vadd.f32 %v448, %v627
      %629 = vmatmul.f32.gmra.mxu0 %v540
      %v630 = vpop.f32.mrf.mxu0
      %v631 = vadd.f32 %v451, %v630
      %632 = vmatmul.f32.gmra.mxu0 %v542
      %v633 = vpop.f32.mrf.mxu0
      %v634 = vadd.f32 %v454, %v633
      %635 = vmatmul.f32.gmra.mxu0 %v544
      %v636 = vpop.f32.mrf.mxu0
      %v637 = vadd.f32 %v457, %v636
      %638 = vmatmul.f32.gmra.mxu0 %v546
      %v639 = vpop.f32.mrf.mxu0
      %v640 = vadd.f32 %v460, %v639
      %641 = vmatmul.f32.gmra.mxu0 %v548
      %v642 = vpop.f32.mrf.mxu0
      %v643 = vadd.f32 %v463, %v642
      %644 = vmatmul.f32.gmra.mxu0 %v550
      %v645 = vpop.f32.mrf.mxu0
      %v646 = vadd.f32 %v466, %v645
      %647 = vmatmul.f32.gmra.mxu0 %v552
      %v648 = vpop.f32.mrf.mxu0
      %v649 = vadd.f32 %v469, %v648
      %650 = vmatmul.f32.gmra.mxu0 %v554
      %v651 = vpop.f32.mrf.mxu0
      %v652 = vadd.f32 %v472, %v651
      %653 = vmatmul.f32.gmra.mxu0 %v556
      %v654 = vpop.f32.mrf.mxu0
      %v655 = vadd.f32 %v475, %v654
      %656 = vmatmul.f32.gmra.mxu0 %v558
      %v657 = vpop.f32.mrf.mxu0
      %v658 = vadd.f32 %v478, %v657
      %659 = vmatmul.f32.gmra.mxu0 %v560
      %v660 = vpop.f32.mrf.mxu0
      %v661 = vadd.f32 %v481, %v660
      %662 = vmatmul.f32.gmra.mxu0 %v562
      %v663 = vpop.f32.mrf.mxu0
      %v664 = vadd.f32 %v484, %v663
      %665 = vmatmul.f32.gmra.mxu0 %v564
      %v666 = vpop.f32.mrf.mxu0
      %v667 = vadd.f32 %v487, %v666
      %668 = vmatmul.f32.gmra.mxu0 %v566
      %v669 = vpop.f32.mrf.mxu0
      %v670 = vadd.f32 %v490, %v669
      %671 = vmatmul.f32.gmra.mxu0 %v568
      %v672 = vpop.f32.mrf.mxu0
      %v673 = vadd.f32 %v493, %v672
      %674 = vmatmul.f32.gmra.mxu0 %v570
      %v675 = vpop.f32.mrf.mxu0
      %v676 = vadd.f32 %v496, %v675
      %677 = vmatmul.f32.gmra.mxu0 %v572
      %v678 = vpop.f32.mrf.mxu0
      %v679 = vadd.f32 %v499, %v678
      %680 = vmatmul.f32.gmra.mxu0 %v574
      %v681 = vpop.f32.mrf.mxu0
      %v682 = vadd.f32 %v502, %v681
      %683 = vmatmul.f32.gmra.mxu0 %v576
      %v684 = vpop.f32.mrf.mxu0
      %v685 = vadd.f32 %v505, %v684
      %686 = vmatmul.f32.gmra.mxu0 %v578
      %v687 = vpop.f32.mrf.mxu0
      %v688 = vadd.f32 %v508, %v687
      %689 = vmatmul.f32.gmra.mxu0 %v580
      %v690 = vpop.f32.mrf.mxu0
      %v691 = vadd.f32 %v511, %v690
      %692 = vmatmul.f32.gmra.mxu0 %v582
      %v693 = vpop.f32.mrf.mxu0
      %v694 = vadd.f32 %v514, %v693
      %695 = vmatmul.f32.gmra.mxu0 %v584
      %v696 = vpop.f32.mrf.mxu0
      %v697 = vadd.f32 %v517, %v696
      %698 = vmatmul.f32.gmra.mxu0 %v586
      %v699 = vpop.f32.mrf.mxu0
      %v700 = vadd.f32 %v520, %v699
      %701 = vmatmul.f32.gmra.mxu0 %v588
      %v702 = vpop.f32.mrf.mxu0
      %v703 = vadd.f32 %v523, %v702
      %704 = vmatmul.f32.gmra.mxu0 %v590
      %v705 = vpop.f32.mrf.mxu0
      %v706 = vadd.f32 %v526, %v705
      %707 = vdwg.mxu0
      %vm708 = vcmask 1045504
      %v709 = vrot.slane %v160, 2
      %v710 = vrot.slane %v161, 2
      %v711 = vsel %vm708, %v709, %v710
      %v712 = vrot.slane %v162, 2
      %v713 = vsel %vm708, %v710, %v712
      %v714 = vrot.slane %v163, 2
      %v715 = vrot.slane %v164, 2
      %v716 = vsel %vm708, %v714, %v715
      %v717 = vrot.slane %v165, 2
      %v718 = vsel %vm708, %v715, %v717
      %v719 = vrot.slane %v166, 2
      %v720 = vrot.slane %v167, 2
      %v721 = vsel %vm708, %v719, %v720
      %v722 = vrot.slane %v168, 2
      %v723 = vsel %vm708, %v720, %v722
      %v724 = vrot.slane %v169, 2
      %v725 = vrot.slane %v170, 2
      %v726 = vsel %vm708, %v724, %v725
      %v727 = vrot.slane %v171, 2
      %v728 = vsel %vm708, %v725, %v727
      %v729 = vrot.slane %v172, 2
      %v730 = vrot.slane %v173, 2
      %v731 = vsel %vm708, %v729, %v730
      %v732 = vrot.slane %v174, 2
      %v733 = vsel %vm708, %v730, %v732
      %v734 = vrot.slane %v175, 2
      %v735 = vrot.slane %v176, 2
      %v736 = vsel %vm708, %v734, %v735
      %v737 = vrot.slane %v177, 2
      %v738 = vsel %vm708, %v735, %v737
      %v739 = vrot.slane %v178, 2
      %v740 = vrot.slane %v179, 2
      %v741 = vsel %vm708, %v739, %v740
      %v742 = vrot.slane %v180, 2
      %v743 = vsel %vm708, %v740, %v742
      %v744 = vrot.slane %v181, 2
      %v745 = vrot.slane %v182, 2
      %v746 = vsel %vm708, %v744, %v745
      %v747 = vrot.slane %v183, 2
      %v748 = vsel %vm708, %v745, %v747
      %v749 = vrot.slane %v184, 2
      %v750 = vrot.slane %v185, 2
      %v751 = vsel %vm708, %v749, %v750
      %v752 = vrot.slane %v186, 2
      %v753 = vsel %vm708, %v750, %v752
      %v754 = vrot.slane %v187, 2
      %v755 = vrot.slane %v188, 2
      %v756 = vsel %vm708, %v754, %v755
      %v757 = vrot.slane %v189, 2
      %v758 = vsel %vm708, %v755, %v757
      %v759 = vrot.slane %v190, 2
      %v760 = vrot.slane %v191, 2
      %v761 = vsel %vm708, %v759, %v760
      %v762 = vrot.slane %v192, 2
      %v763 = vsel %vm708, %v760, %v762
      %v764 = vrot.slane %v193, 2
      %v765 = vrot.slane %v194, 2
      %v766 = vsel %vm708, %v764, %v765
      %v767 = vrot.slane %v195, 2
      %v768 = vsel %vm708, %v765, %v767
      %v769 = vrot.slane %v196, 2
      %v770 = vrot.slane %v197, 2
      %v771 = vsel %vm708, %v769, %v770
      %v772 = vrot.slane %v198, 2
      %v773 = vsel %vm708, %v770, %v772
      %v774 = vrot.slane %v199, 2
      %v775 = vrot.slane %v200, 2
      %v776 = vsel %vm708, %v774, %v775
      %v777 = vrot.slane %v201, 2
      %v778 = vsel %vm708, %v775, %v777
      %v779 = vrot.slane %v202, 2
      %v780 = vrot.slane %v203, 2
      %v781 = vsel %vm708, %v779, %v780
      %v782 = vrot.slane %v204, 2
      %v783 = vsel %vm708, %v780, %v782
      %v784 = vrot.slane %v205, 2
      %v785 = vrot.slane %v206, 2
      %v786 = vsel %vm708, %v784, %v785
      %v787 = vrot.slane %v207, 2
      %v788 = vsel %vm708, %v785, %v787
      %s789 = scalar_lea.vmem %s1, 8
      %v790 = vld [vmem:[%s789] sm:$0xf]
      %v791 = vsel %vm346, %v711, 0
      %v793 = vsel %vm346, %v713, 0
      %v795 = vsel %vm346, %v716, 0
      %v797 = vsel %vm346, %v718, 0
      %v799 = vsel %vm346, %v721, 0
      %v801 = vsel %vm346, %v723, 0
      %v803 = vsel %vm346, %v726, 0
      %v805 = vsel %vm346, %v728, 0
      %v807 = vsel %vm346, %v731, 0
      %v809 = vsel %vm346, %v733, 0
      %v811 = vsel %vm346, %v736, 0
      %v813 = vsel %vm346, %v738, 0
      %v815 = vsel %vm346, %v741, 0
      %v817 = vsel %vm346, %v743, 0
      %v819 = vsel %vm346, %v746, 0
      %v821 = vsel %vm346, %v748, 0
      %v823 = vsel %vm346, %v751, 0
      %v825 = vsel %vm346, %v753, 0
      %v827 = vsel %vm346, %v756, 0
      %v829 = vsel %vm346, %v758, 0
      %v831 = vsel %vm346, %v761, 0
      %v833 = vsel %vm346, %v763, 0
      %v835 = vsel %vm346, %v766, 0
      %v837 = vsel %vm346, %v768, 0
      %v839 = vsel %vm346, %v771, 0
      %v841 = vsel %vm346, %v773, 0
      %v843 = vsel %vm346, %v776, 0
      %v845 = vsel %vm346, %v778, 0
      %v847 = vsel %vm346, %v781, 0
      %v849 = vsel %vm346, %v783, 0
      %v851 = vsel %vm346, %v786, 0
      %v853 = vsel %vm346, %v788, 0
      %v856 = vsel %vm411, %v790, 0
      %858 = vmatpush.msra.mxu0 0.0
      %859 = vmatpush.msra.mxu0 0.0
      %860 = vmatpush.msra.mxu0 0.0
      %861 = vmatpush.msra.mxu0 0.0
      %862 = vmatpush.msra.mxu0 0.0
      %863 = vmatpush.msra.mxu0 0.0
      %864 = vmatpush.msra.mxu0 0.0
      %865 = vmatpush.msra.mxu0 0.0
      %866 = vmatpush.msra.mxu0 0.0
      %867 = vmatpush.msra.mxu0 0.0
      %868 = vmatpush.msra.mxu0 0.0
      %869 = vmatpush.msra.mxu0 0.0
      %870 = vmatpush.msra.mxu0 0.0
      %871 = vmatpush.msra.mxu0 0.0
      %872 = vmatpush.msra.mxu0 0.0
      %873 = vmatpush.msra.mxu0 %v856
      %874 = vmatmul.f32.gmra.mxu0 %v791
      %v875 = vpop.f32.mrf.mxu0
      %v876 = vadd.f32 0.0, %v875
      %877 = vmatmul.f32.gmra.mxu0 %v793
      %v878 = vpop.f32.mrf.mxu0
      %v879 = vadd.f32 0.0, %v878
      %880 = vmatmul.f32.gmra.mxu0 %v795
      %v881 = vpop.f32.mrf.mxu0
      %v882 = vadd.f32 0.0, %v881
      %883 = vmatmul.f32.gmra.mxu0 %v797
      %v884 = vpop.f32.mrf.mxu0
      %v885 = vadd.f32 0.0, %v884
      %886 = vmatmul.f32.gmra.mxu0 %v799
      %v887 = vpop.f32.mrf.mxu0
      %v888 = vadd.f32 0.0, %v887
      %889 = vmatmul.f32.gmra.mxu0 %v801
      %v890 = vpop.f32.mrf.mxu0
      %v891 = vadd.f32 0.0, %v890
      %892 = vmatmul.f32.gmra.mxu0 %v803
      %v893 = vpop.f32.mrf.mxu0
      %v894 = vadd.f32 0.0, %v893
      %895 = vmatmul.f32.gmra.mxu0 %v805
      %v896 = vpop.f32.mrf.mxu0
      %v897 = vadd.f32 0.0, %v896
      %898 = vmatmul.f32.gmra.mxu0 %v807
      %v899 = vpop.f32.mrf.mxu0
      %v900 = vadd.f32 0.0, %v899
      %901 = vmatmul.f32.gmra.mxu0 %v809
      %v902 = vpop.f32.mrf.mxu0
      %v903 = vadd.f32 0.0, %v902
      %904 = vmatmul.f32.gmra.mxu0 %v811
      %v905 = vpop.f32.mrf.mxu0
      %v906 = vadd.f32 0.0, %v905
      %907 = vmatmul.f32.gmra.mxu0 %v813
      %v908 = vpop.f32.mrf.mxu0
      %v909 = vadd.f32 0.0, %v908
      %910 = vmatmul.f32.gmra.mxu0 %v815
      %v911 = vpop.f32.mrf.mxu0
      %v912 = vadd.f32 0.0, %v911
      %913 = vmatmul.f32.gmra.mxu0 %v817
      %v914 = vpop.f32.mrf.mxu0
      %v915 = vadd.f32 0.0, %v914
      %916 = vmatmul.f32.gmra.mxu0 %v819
      %v917 = vpop.f32.mrf.mxu0
      %v918 = vadd.f32 0.0, %v917
      %919 = vmatmul.f32.gmra.mxu0 %v821
      %v920 = vpop.f32.mrf.mxu0
      %v921 = vadd.f32 0.0, %v920
      %922 = vmatmul.f32.gmra.mxu0 %v823
      %v923 = vpop.f32.mrf.mxu0
      %v924 = vadd.f32 0.0, %v923
      %925 = vmatmul.f32.gmra.mxu0 %v825
      %v926 = vpop.f32.mrf.mxu0
      %v927 = vadd.f32 0.0, %v926
      %928 = vmatmul.f32.gmra.mxu0 %v827
      %v929 = vpop.f32.mrf.mxu0
      %v930 = vadd.f32 0.0, %v929
      %931 = vmatmul.f32.gmra.mxu0 %v829
      %v932 = vpop.f32.mrf.mxu0
      %v933 = vadd.f32 0.0, %v932
      %934 = vmatmul.f32.gmra.mxu0 %v831
      %v935 = vpop.f32.mrf.mxu0
      %v936 = vadd.f32 0.0, %v935
      %937 = vmatmul.f32.gmra.mxu0 %v833
      %v938 = vpop.f32.mrf.mxu0
      %v939 = vadd.f32 0.0, %v938
      %940 = vmatmul.f32.gmra.mxu0 %v835
      %v941 = vpop.f32.mrf.mxu0
      %v942 = vadd.f32 0.0, %v941
      %943 = vmatmul.f32.gmra.mxu0 %v837
      %v944 = vpop.f32.mrf.mxu0
      %v945 = vadd.f32 0.0, %v944
      %946 = vmatmul.f32.gmra.mxu0 %v839
      %v947 = vpop.f32.mrf.mxu0
      %v948 = vadd.f32 0.0, %v947
      %949 = vmatmul.f32.gmra.mxu0 %v841
      %v950 = vpop.f32.mrf.mxu0
      %v951 = vadd.f32 0.0, %v950
      %952 = vmatmul.f32.gmra.mxu0 %v843
      %v953 = vpop.f32.mrf.mxu0
      %v954 = vadd.f32 0.0, %v953
      %955 = vmatmul.f32.gmra.mxu0 %v845
      %v956 = vpop.f32.mrf.mxu0
      %v957 = vadd.f32 0.0, %v956
      %958 = vmatmul.f32.gmra.mxu0 %v847
      %v959 = vpop.f32.mrf.mxu0
      %v960 = vadd.f32 0.0, %v959
      %961 = vmatmul.f32.gmra.mxu0 %v849
      %v962 = vpop.f32.mrf.mxu0
      %v963 = vadd.f32 0.0, %v962
      %964 = vmatmul.f32.gmra.mxu0 %v851
      %v965 = vpop.f32.mrf.mxu0
      %v966 = vadd.f32 0.0, %v965
      %967 = vmatmul.f32.gmra.mxu0 %v853
      %v968 = vpop.f32.mrf.mxu0
      %v969 = vadd.f32 0.0, %v968
      %970 = vdwg.mxu0
      %v971 = vadd.f32 %v613, %v876
      %v972 = vadd.f32 %v616, %v879
      %v973 = vadd.f32 %v619, %v882
      %v974 = vadd.f32 %v622, %v885
      %v975 = vadd.f32 %v625, %v888
      %v976 = vadd.f32 %v628, %v891
      %v977 = vadd.f32 %v631, %v894
      %v978 = vadd.f32 %v634, %v897
      %v979 = vadd.f32 %v637, %v900
      %v980 = vadd.f32 %v640, %v903
      %v981 = vadd.f32 %v643, %v906
      %v982 = vadd.f32 %v646, %v909
      %v983 = vadd.f32 %v649, %v912
      %v984 = vadd.f32 %v652, %v915
      %v985 = vadd.f32 %v655, %v918
      %v986 = vadd.f32 %v658, %v921
      %v987 = vadd.f32 %v661, %v924
      %v988 = vadd.f32 %v664, %v927
      %v989 = vadd.f32 %v667, %v930
      %v990 = vadd.f32 %v670, %v933
      %v991 = vadd.f32 %v673, %v936
      %v992 = vadd.f32 %v676, %v939
      %v993 = vadd.f32 %v679, %v942
      %v994 = vadd.f32 %v682, %v945
      %v995 = vadd.f32 %v685, %v948
      %v996 = vadd.f32 %v688, %v951
      %v997 = vadd.f32 %v691, %v954
      %v998 = vadd.f32 %v694, %v957
      %v999 = vadd.f32 %v697, %v960
      %v1000 = vadd.f32 %v700, %v963
      %v1001 = vadd.f32 %v703, %v966
      %v1002 = vadd.f32 %v706, %v969
      %s1003 = scalar_lea.vmem %s1, 12
      %v1004 = vld [vmem:[%s1003] sm:$0xf]
      %v1006 = vsel %vm346, %v208, 0
      %v1009 = vsel %vm346, %v209, 0
      %v1012 = vsel %vm411, %v1004, 0
      %1014 = vmatpush.msra.mxu0 0.0
      %1015 = vmatpush.msra.mxu0 0.0
      %1016 = vmatpush.msra.mxu0 0.0
      %1017 = vmatpush.msra.mxu0 0.0
      %1018 = vmatpush.msra.mxu0 0.0
      %1019 = vmatpush.msra.mxu0 0.0
      %1020 = vmatpush.msra.mxu0 0.0
      %1021 = vmatpush.msra.mxu0 0.0
      %1022 = vmatpush.msra.mxu0 0.0
      %1023 = vmatpush.msra.mxu0 0.0
      %1024 = vmatpush.msra.mxu0 0.0
      %1025 = vmatpush.msra.mxu0 0.0
      %1026 = vmatpush.msra.mxu0 0.0
      %1027 = vmatpush.msra.mxu0 0.0
      %1028 = vmatpush.msra.mxu0 0.0
      %1029 = vmatpush.msra.mxu0 %v1012
      %1030 = vmatmul.f32.gmra.mxu0 %v532
      %v1031 = vpop.f32.mrf.mxu0
      %v1032 = vadd.f32 0.0, %v1031
      %1033 = vmatmul.f32.gmra.mxu0 %v534
      %v1034 = vpop.f32.mrf.mxu0
      %v1035 = vadd.f32 0.0, %v1034
      %1036 = vmatmul.f32.gmra.mxu0 %v536
      %v1037 = vpop.f32.mrf.mxu0
      %v1038 = vadd.f32 0.0, %v1037
      %1039 = vmatmul.f32.gmra.mxu0 %v538
      %v1040 = vpop.f32.mrf.mxu0
      %v1041 = vadd.f32 0.0, %v1040
      %1042 = vmatmul.f32.gmra.mxu0 %v540
      %v1043 = vpop.f32.mrf.mxu0
      %v1044 = vadd.f32 0.0, %v1043
      %1045 = vmatmul.f32.gmra.mxu0 %v542
      %v1046 = vpop.f32.mrf.mxu0
      %v1047 = vadd.f32 0.0, %v1046
      %1048 = vmatmul.f32.gmra.mxu0 %v544
      %v1049 = vpop.f32.mrf.mxu0
      %v1050 = vadd.f32 0.0, %v1049
      %1051 = vmatmul.f32.gmra.mxu0 %v546
      %v1052 = vpop.f32.mrf.mxu0
      %v1053 = vadd.f32 0.0, %v1052
      %1054 = vmatmul.f32.gmra.mxu0 %v548
      %v1055 = vpop.f32.mrf.mxu0
      %v1056 = vadd.f32 0.0, %v1055
      %1057 = vmatmul.f32.gmra.mxu0 %v550
      %v1058 = vpop.f32.mrf.mxu0
      %v1059 = vadd.f32 0.0, %v1058
      %1060 = vmatmul.f32.gmra.mxu0 %v552
      %v1061 = vpop.f32.mrf.mxu0
      %v1062 = vadd.f32 0.0, %v1061
      %1063 = vmatmul.f32.gmra.mxu0 %v554
      %v1064 = vpop.f32.mrf.mxu0
      %v1065 = vadd.f32 0.0, %v1064
      %1066 = vmatmul.f32.gmra.mxu0 %v556
      %v1067 = vpop.f32.mrf.mxu0
      %v1068 = vadd.f32 0.0, %v1067
      %1069 = vmatmul.f32.gmra.mxu0 %v558
      %v1070 = vpop.f32.mrf.mxu0
      %v1071 = vadd.f32 0.0, %v1070
      %1072 = vmatmul.f32.gmra.mxu0 %v560
      %v1073 = vpop.f32.mrf.mxu0
      %v1074 = vadd.f32 0.0, %v1073
      %1075 = vmatmul.f32.gmra.mxu0 %v562
      %v1076 = vpop.f32.mrf.mxu0
      %v1077 = vadd.f32 0.0, %v1076
      %1078 = vmatmul.f32.gmra.mxu0 %v564
      %v1079 = vpop.f32.mrf.mxu0
      %v1080 = vadd.f32 0.0, %v1079
      %1081 = vmatmul.f32.gmra.mxu0 %v566
      %v1082 = vpop.f32.mrf.mxu0
      %v1083 = vadd.f32 0.0, %v1082
      %1084 = vmatmul.f32.gmra.mxu0 %v568
      %v1085 = vpop.f32.mrf.mxu0
      %v1086 = vadd.f32 0.0, %v1085
      %1087 = vmatmul.f32.gmra.mxu0 %v570
      %v1088 = vpop.f32.mrf.mxu0
      %v1089 = vadd.f32 0.0, %v1088
      %1090 = vmatmul.f32.gmra.mxu0 %v572
      %v1091 = vpop.f32.mrf.mxu0
      %v1092 = vadd.f32 0.0, %v1091
      %1093 = vmatmul.f32.gmra.mxu0 %v574
      %v1094 = vpop.f32.mrf.mxu0
      %v1095 = vadd.f32 0.0, %v1094
      %1096 = vmatmul.f32.gmra.mxu0 %v576
      %v1097 = vpop.f32.mrf.mxu0
      %v1098 = vadd.f32 0.0, %v1097
      %1099 = vmatmul.f32.gmra.mxu0 %v578
      %v1100 = vpop.f32.mrf.mxu0
      %v1101 = vadd.f32 0.0, %v1100
      %1102 = vmatmul.f32.gmra.mxu0 %v580
      %v1103 = vpop.f32.mrf.mxu0
      %v1104 = vadd.f32 0.0, %v1103
      %1105 = vmatmul.f32.gmra.mxu0 %v582
      %v1106 = vpop.f32.mrf.mxu0
      %v1107 = vadd.f32 0.0, %v1106
      %1108 = vmatmul.f32.gmra.mxu0 %v584
      %v1109 = vpop.f32.mrf.mxu0
      %v1110 = vadd.f32 0.0, %v1109
      %1111 = vmatmul.f32.gmra.mxu0 %v586
      %v1112 = vpop.f32.mrf.mxu0
      %v1113 = vadd.f32 0.0, %v1112
      %1114 = vmatmul.f32.gmra.mxu0 %v588
      %v1115 = vpop.f32.mrf.mxu0
      %v1116 = vadd.f32 0.0, %v1115
      %1117 = vmatmul.f32.gmra.mxu0 %v590
      %v1118 = vpop.f32.mrf.mxu0
      %v1119 = vadd.f32 0.0, %v1118
      %1120 = vmatmul.f32.gmra.mxu0 %v1006
      %v1121 = vpop.f32.mrf.mxu0
      %v1122 = vadd.f32 0.0, %v1121
      %1123 = vmatmul.f32.gmra.mxu0 %v1009
      %v1124 = vpop.f32.mrf.mxu0
      %v1125 = vadd.f32 0.0, %v1124
      %1126 = vdwg.mxu0
      %v1127 = vadd.f32 %v971, %v1032
      %v1128 = vadd.f32 %v972, %v1035
      %v1129 = vadd.f32 %v973, %v1038
      %v1130 = vadd.f32 %v974, %v1041
      %v1131 = vadd.f32 %v975, %v1044
      %v1132 = vadd.f32 %v976, %v1047
      %v1133 = vadd.f32 %v977, %v1050
      %v1134 = vadd.f32 %v978, %v1053
      %v1135 = vadd.f32 %v979, %v1056
      %v1136 = vadd.f32 %v980, %v1059
      %v1137 = vadd.f32 %v981, %v1062
      %v1138 = vadd.f32 %v982, %v1065
      %v1139 = vadd.f32 %v983, %v1068
      %v1140 = vadd.f32 %v984, %v1071
      %v1141 = vadd.f32 %v985, %v1074
      %v1142 = vadd.f32 %v986, %v1077
      %v1143 = vadd.f32 %v987, %v1080
      %v1144 = vadd.f32 %v988, %v1083
      %v1145 = vadd.f32 %v989, %v1086
      %v1146 = vadd.f32 %v990, %v1089
      %v1147 = vadd.f32 %v991, %v1092
      %v1148 = vadd.f32 %v992, %v1095
      %v1149 = vadd.f32 %v993, %v1098
      %v1150 = vadd.f32 %v994, %v1101
      %v1151 = vadd.f32 %v995, %v1104
      %v1152 = vadd.f32 %v996, %v1107
      %v1153 = vadd.f32 %v997, %v1110
      %v1154 = vadd.f32 %v998, %v1113
      %v1155 = vadd.f32 %v999, %v1116
      %v1156 = vadd.f32 %v1000, %v1119
      %v1157 = vadd.f32 %v1001, %v1122
      %v1158 = vadd.f32 %v1002, %v1125
      %v1160 = vrot.slane %v208, 1
      %v1161 = vrot.slane %v209, 1
      %v1162 = vsel %vm263, %v1160, %v1161
      %v1163 = vrot.slane %v210, 1
      %v1164 = vsel %vm263, %v1161, %v1163
      %s1165 = scalar_lea.vmem %s1, 16
      %v1166 = vld [vmem:[%s1165] sm:$0xf]
      %v1167 = vsel %vm346, %v1162, 0
      %v1169 = vsel %vm346, %v1164, 0
      %v1172 = vsel %vm411, %v1166, 0
      %1174 = vmatpush.msra.mxu0 0.0
      %1175 = vmatpush.msra.mxu0 0.0
      %1176 = vmatpush.msra.mxu0 0.0
      %1177 = vmatpush.msra.mxu0 0.0
      %1178 = vmatpush.msra.mxu0 0.0
      %1179 = vmatpush.msra.mxu0 0.0
      %1180 = vmatpush.msra.mxu0 0.0
      %1181 = vmatpush.msra.mxu0 0.0
      %1182 = vmatpush.msra.mxu0 0.0
      %1183 = vmatpush.msra.mxu0 0.0
      %1184 = vmatpush.msra.mxu0 0.0
      %1185 = vmatpush.msra.mxu0 0.0
      %1186 = vmatpush.msra.mxu0 0.0
      %1187 = vmatpush.msra.mxu0 0.0
      %1188 = vmatpush.msra.mxu0 0.0
      %1189 = vmatpush.msra.mxu0 %v1172
      %1190 = vmatmul.f32.gmra.mxu0 %v351
      %v1191 = vpop.f32.mrf.mxu0
      %v1192 = vadd.f32 0.0, %v1191
      %1193 = vmatmul.f32.gmra.mxu0 %v353
      %v1194 = vpop.f32.mrf.mxu0
      %v1195 = vadd.f32 0.0, %v1194
      %1196 = vmatmul.f32.gmra.mxu0 %v355
      %v1197 = vpop.f32.mrf.mxu0
      %v1198 = vadd.f32 0.0, %v1197
      %1199 = vmatmul.f32.gmra.mxu0 %v357
      %v1200 = vpop.f32.mrf.mxu0
      %v1201 = vadd.f32 0.0, %v1200
      %1202 = vmatmul.f32.gmra.mxu0 %v359
      %v1203 = vpop.f32.mrf.mxu0
      %v1204 = vadd.f32 0.0, %v1203
      %1205 = vmatmul.f32.gmra.mxu0 %v361
      %v1206 = vpop.f32.mrf.mxu0
      %v1207 = vadd.f32 0.0, %v1206
      %1208 = vmatmul.f32.gmra.mxu0 %v363
      %v1209 = vpop.f32.mrf.mxu0
      %v1210 = vadd.f32 0.0, %v1209
      %1211 = vmatmul.f32.gmra.mxu0 %v365
      %v1212 = vpop.f32.mrf.mxu0
      %v1213 = vadd.f32 0.0, %v1212
      %1214 = vmatmul.f32.gmra.mxu0 %v367
      %v1215 = vpop.f32.mrf.mxu0
      %v1216 = vadd.f32 0.0, %v1215
      %1217 = vmatmul.f32.gmra.mxu0 %v369
      %v1218 = vpop.f32.mrf.mxu0
      %v1219 = vadd.f32 0.0, %v1218
      %1220 = vmatmul.f32.gmra.mxu0 %v371
      %v1221 = vpop.f32.mrf.mxu0
      %v1222 = vadd.f32 0.0, %v1221
      %1223 = vmatmul.f32.gmra.mxu0 %v373
      %v1224 = vpop.f32.mrf.mxu0
      %v1225 = vadd.f32 0.0, %v1224
      %1226 = vmatmul.f32.gmra.mxu0 %v375
      %v1227 = vpop.f32.mrf.mxu0
      %v1228 = vadd.f32 0.0, %v1227
      %1229 = vmatmul.f32.gmra.mxu0 %v377
      %v1230 = vpop.f32.mrf.mxu0
      %v1231 = vadd.f32 0.0, %v1230
      %1232 = vmatmul.f32.gmra.mxu0 %v379
      %v1233 = vpop.f32.mrf.mxu0
      %v1234 = vadd.f32 0.0, %v1233
      %1235 = vmatmul.f32.gmra.mxu0 %v381
      %v1236 = vpop.f32.mrf.mxu0
      %v1237 = vadd.f32 0.0, %v1236
      %1238 = vmatmul.f32.gmra.mxu0 %v383
      %v1239 = vpop.f32.mrf.mxu0
      %v1240 = vadd.f32 0.0, %v1239
      %1241 = vmatmul.f32.gmra.mxu0 %v385
      %v1242 = vpop.f32.mrf.mxu0
      %v1243 = vadd.f32 0.0, %v1242
      %1244 = vmatmul.f32.gmra.mxu0 %v387
      %v1245 = vpop.f32.mrf.mxu0
      %v1246 = vadd.f32 0.0, %v1245
      %1247 = vmatmul.f32.gmra.mxu0 %v389
      %v1248 = vpop.f32.mrf.mxu0
      %v1249 = vadd.f32 0.0, %v1248
      %1250 = vmatmul.f32.gmra.mxu0 %v391
      %v1251 = vpop.f32.mrf.mxu0
      %v1252 = vadd.f32 0.0, %v1251
      %1253 = vmatmul.f32.gmra.mxu0 %v393
      %v1254 = vpop.f32.mrf.mxu0
      %v1255 = vadd.f32 0.0, %v1254
      %1256 = vmatmul.f32.gmra.mxu0 %v395
      %v1257 = vpop.f32.mrf.mxu0
      %v1258 = vadd.f32 0.0, %v1257
      %1259 = vmatmul.f32.gmra.mxu0 %v397
      %v1260 = vpop.f32.mrf.mxu0
      %v1261 = vadd.f32 0.0, %v1260
      %1262 = vmatmul.f32.gmra.mxu0 %v399
      %v1263 = vpop.f32.mrf.mxu0
      %v1264 = vadd.f32 0.0, %v1263
      %1265 = vmatmul.f32.gmra.mxu0 %v401
      %v1266 = vpop.f32.mrf.mxu0
      %v1267 = vadd.f32 0.0, %v1266
      %1268 = vmatmul.f32.gmra.mxu0 %v403
      %v1269 = vpop.f32.mrf.mxu0
      %v1270 = vadd.f32 0.0, %v1269
      %1271 = vmatmul.f32.gmra.mxu0 %v405
      %v1272 = vpop.f32.mrf.mxu0
      %v1273 = vadd.f32 0.0, %v1272
      %1274 = vmatmul.f32.gmra.mxu0 %v407
      %v1275 = vpop.f32.mrf.mxu0
      %v1276 = vadd.f32 0.0, %v1275
      %1277 = vmatmul.f32.gmra.mxu0 %v409
      %v1278 = vpop.f32.mrf.mxu0
      %v1279 = vadd.f32 0.0, %v1278
      %1280 = vmatmul.f32.gmra.mxu0 %v1167
      %v1281 = vpop.f32.mrf.mxu0
      %v1282 = vadd.f32 0.0, %v1281
      %1283 = vmatmul.f32.gmra.mxu0 %v1169
      %v1284 = vpop.f32.mrf.mxu0
      %v1285 = vadd.f32 0.0, %v1284
      %1286 = vdwg.mxu0
      %v1287 = vadd.f32 %v1127, %v1192
      %v1288 = vadd.f32 %v1128, %v1195
      %v1289 = vadd.f32 %v1129, %v1198
      %v1290 = vadd.f32 %v1130, %v1201
      %v1291 = vadd.f32 %v1131, %v1204
      %v1292 = vadd.f32 %v1132, %v1207
      %v1293 = vadd.f32 %v1133, %v1210
      %v1294 = vadd.f32 %v1134, %v1213
      %v1295 = vadd.f32 %v1135, %v1216
      %v1296 = vadd.f32 %v1136, %v1219
      %v1297 = vadd.f32 %v1137, %v1222
      %v1298 = vadd.f32 %v1138, %v1225
      %v1299 = vadd.f32 %v1139, %v1228
      %v1300 = vadd.f32 %v1140, %v1231
      %v1301 = vadd.f32 %v1141, %v1234
      %v1302 = vadd.f32 %v1142, %v1237
      %v1303 = vadd.f32 %v1143, %v1240
      %v1304 = vadd.f32 %v1144, %v1243
      %v1305 = vadd.f32 %v1145, %v1246
      %v1306 = vadd.f32 %v1146, %v1249
      %v1307 = vadd.f32 %v1147, %v1252
      %v1308 = vadd.f32 %v1148, %v1255
      %v1309 = vadd.f32 %v1149, %v1258
      %v1310 = vadd.f32 %v1150, %v1261
      %v1311 = vadd.f32 %v1151, %v1264
      %v1312 = vadd.f32 %v1152, %v1267
      %v1313 = vadd.f32 %v1153, %v1270
      %v1314 = vadd.f32 %v1154, %v1273
      %v1315 = vadd.f32 %v1155, %v1276
      %v1316 = vadd.f32 %v1156, %v1279
      %v1317 = vadd.f32 %v1157, %v1282
      %v1318 = vadd.f32 %v1158, %v1285
      %v1319 = vrot.slane %v208, 2
      %v1320 = vrot.slane %v209, 2
      %v1321 = vsel %vm708, %v1319, %v1320
      %v1322 = vrot.slane %v210, 2
      %v1323 = vsel %vm708, %v1320, %v1322
      %s1324 = scalar_lea.vmem %s1, 20
      %v1325 = vld [vmem:[%s1324] sm:$0xf]
      %v1326 = vsel %vm346, %v1321, 0
      %v1328 = vsel %vm346, %v1323, 0
      %v1331 = vsel %vm411, %v1325, 0
      %1333 = vmatpush.msra.mxu0 0.0
      %1334 = vmatpush.msra.mxu0 0.0
      %1335 = vmatpush.msra.mxu0 0.0
      %1336 = vmatpush.msra.mxu0 0.0
      %1337 = vmatpush.msra.mxu0 0.0
      %1338 = vmatpush.msra.mxu0 0.0
      %1339 = vmatpush.msra.mxu0 0.0
      %1340 = vmatpush.msra.mxu0 0.0
      %1341 = vmatpush.msra.mxu0 0.0
      %1342 = vmatpush.msra.mxu0 0.0
      %1343 = vmatpush.msra.mxu0 0.0
      %1344 = vmatpush.msra.mxu0 0.0
      %1345 = vmatpush.msra.mxu0 0.0
      %1346 = vmatpush.msra.mxu0 0.0
      %1347 = vmatpush.msra.mxu0 0.0
      %1348 = vmatpush.msra.mxu0 %v1331
      %1349 = vmatmul.f32.gmra.mxu0 %v795
      %v1350 = vpop.f32.mrf.mxu0
      %v1351 = vadd.f32 0.0, %v1350
      %1352 = vmatmul.f32.gmra.mxu0 %v797
      %v1353 = vpop.f32.mrf.mxu0
      %v1354 = vadd.f32 0.0, %v1353
      %1355 = vmatmul.f32.gmra.mxu0 %v799
      %v1356 = vpop.f32.mrf.mxu0
      %v1357 = vadd.f32 0.0, %v1356
      %1358 = vmatmul.f32.gmra.mxu0 %v801
      %v1359 = vpop.f32.mrf.mxu0
      %v1360 = vadd.f32 0.0, %v1359
      %1361 = vmatmul.f32.gmra.mxu0 %v803
      %v1362 = vpop.f32.mrf.mxu0
      %v1363 = vadd.f32 0.0, %v1362
      %1364 = vmatmul.f32.gmra.mxu0 %v805
      %v1365 = vpop.f32.mrf.mxu0
      %v1366 = vadd.f32 0.0, %v1365
      %1367 = vmatmul.f32.gmra.mxu0 %v807
      %v1368 = vpop.f32.mrf.mxu0
      %v1369 = vadd.f32 0.0, %v1368
      %1370 = vmatmul.f32.gmra.mxu0 %v809
      %v1371 = vpop.f32.mrf.mxu0
      %v1372 = vadd.f32 0.0, %v1371
      %1373 = vmatmul.f32.gmra.mxu0 %v811
      %v1374 = vpop.f32.mrf.mxu0
      %v1375 = vadd.f32 0.0, %v1374
      %1376 = vmatmul.f32.gmra.mxu0 %v813
      %v1377 = vpop.f32.mrf.mxu0
      %v1378 = vadd.f32 0.0, %v1377
      %1379 = vmatmul.f32.gmra.mxu0 %v815
      %v1380 = vpop.f32.mrf.mxu0
      %v1381 = vadd.f32 0.0, %v1380
      %1382 = vmatmul.f32.gmra.mxu0 %v817
      %v1383 = vpop.f32.mrf.mxu0
      %v1384 = vadd.f32 0.0, %v1383
      %1385 = vmatmul.f32.gmra.mxu0 %v819
      %v1386 = vpop.f32.mrf.mxu0
      %v1387 = vadd.f32 0.0, %v1386
      %1388 = vmatmul.f32.gmra.mxu0 %v821
      %v1389 = vpop.f32.mrf.mxu0
      %v1390 = vadd.f32 0.0, %v1389
      %1391 = vmatmul.f32.gmra.mxu0 %v823
      %v1392 = vpop.f32.mrf.mxu0
      %v1393 = vadd.f32 0.0, %v1392
      %1394 = vmatmul.f32.gmra.mxu0 %v825
      %v1395 = vpop.f32.mrf.mxu0
      %v1396 = vadd.f32 0.0, %v1395
      %1397 = vmatmul.f32.gmra.mxu0 %v827
      %v1398 = vpop.f32.mrf.mxu0
      %v1399 = vadd.f32 0.0, %v1398
      %1400 = vmatmul.f32.gmra.mxu0 %v829
      %v1401 = vpop.f32.mrf.mxu0
      %v1402 = vadd.f32 0.0, %v1401
      %1403 = vmatmul.f32.gmra.mxu0 %v831
      %v1404 = vpop.f32.mrf.mxu0
      %v1405 = vadd.f32 0.0, %v1404
      %1406 = vmatmul.f32.gmra.mxu0 %v833
      %v1407 = vpop.f32.mrf.mxu0
      %v1408 = vadd.f32 0.0, %v1407
      %1409 = vmatmul.f32.gmra.mxu0 %v835
      %v1410 = vpop.f32.mrf.mxu0
      %v1411 = vadd.f32 0.0, %v1410
      %1412 = vmatmul.f32.gmra.mxu0 %v837
      %v1413 = vpop.f32.mrf.mxu0
      %v1414 = vadd.f32 0.0, %v1413
      %1415 = vmatmul.f32.gmra.mxu0 %v839
      %v1416 = vpop.f32.mrf.mxu0
      %v1417 = vadd.f32 0.0, %v1416
      %1418 = vmatmul.f32.gmra.mxu0 %v841
      %v1419 = vpop.f32.mrf.mxu0
      %v1420 = vadd.f32 0.0, %v1419
      %1421 = vmatmul.f32.gmra.mxu0 %v843
      %v1422 = vpop.f32.mrf.mxu0
      %v1423 = vadd.f32 0.0, %v1422
      %1424 = vmatmul.f32.gmra.mxu0 %v845
      %v1425 = vpop.f32.mrf.mxu0
      %v1426 = vadd.f32 0.0, %v1425
      %1427 = vmatmul.f32.gmra.mxu0 %v847
      %v1428 = vpop.f32.mrf.mxu0
      %v1429 = vadd.f32 0.0, %v1428
      %1430 = vmatmul.f32.gmra.mxu0 %v849
      %v1431 = vpop.f32.mrf.mxu0
      %v1432 = vadd.f32 0.0, %v1431
      %1433 = vmatmul.f32.gmra.mxu0 %v851
      %v1434 = vpop.f32.mrf.mxu0
      %v1435 = vadd.f32 0.0, %v1434
      %1436 = vmatmul.f32.gmra.mxu0 %v853
      %v1437 = vpop.f32.mrf.mxu0
      %v1438 = vadd.f32 0.0, %v1437
      %1439 = vmatmul.f32.gmra.mxu0 %v1326
      %v1440 = vpop.f32.mrf.mxu0
      %v1441 = vadd.f32 0.0, %v1440
      %1442 = vmatmul.f32.gmra.mxu0 %v1328
      %v1443 = vpop.f32.mrf.mxu0
      %v1444 = vadd.f32 0.0, %v1443
      %1445 = vdwg.mxu0
      %v1446 = vadd.f32 %v1287, %v1351
      %v1447 = vadd.f32 %v1288, %v1354
      %v1448 = vadd.f32 %v1289, %v1357
      %v1449 = vadd.f32 %v1290, %v1360
      %v1450 = vadd.f32 %v1291, %v1363
      %v1451 = vadd.f32 %v1292, %v1366
      %v1452 = vadd.f32 %v1293, %v1369
      %v1453 = vadd.f32 %v1294, %v1372
      %v1454 = vadd.f32 %v1295, %v1375
      %v1455 = vadd.f32 %v1296, %v1378
      %v1456 = vadd.f32 %v1297, %v1381
      %v1457 = vadd.f32 %v1298, %v1384
      %v1458 = vadd.f32 %v1299, %v1387
      %v1459 = vadd.f32 %v1300, %v1390
      %v1460 = vadd.f32 %v1301, %v1393
      %v1461 = vadd.f32 %v1302, %v1396
      %v1462 = vadd.f32 %v1303, %v1399
      %v1463 = vadd.f32 %v1304, %v1402
      %v1464 = vadd.f32 %v1305, %v1405
      %v1465 = vadd.f32 %v1306, %v1408
      %v1466 = vadd.f32 %v1307, %v1411
      %v1467 = vadd.f32 %v1308, %v1414
      %v1468 = vadd.f32 %v1309, %v1417
      %v1469 = vadd.f32 %v1310, %v1420
      %v1470 = vadd.f32 %v1311, %v1423
      %v1471 = vadd.f32 %v1312, %v1426
      %v1472 = vadd.f32 %v1313, %v1429
      %v1473 = vadd.f32 %v1314, %v1432
      %v1474 = vadd.f32 %v1315, %v1435
      %v1475 = vadd.f32 %v1316, %v1438
      %v1476 = vadd.f32 %v1317, %v1441
      %v1477 = vadd.f32 %v1318, %v1444
      %s1478 = scalar_lea.vmem %s1, 24
      %v1479 = vld [vmem:[%s1478] sm:$0xf]
      %v1481 = vsel %vm346, %v211, 0
      %v1484 = vsel %vm346, %v212, 0
      %v1487 = vsel %vm411, %v1479, 0
      %1489 = vmatpush.msra.mxu0 0.0
      %1490 = vmatpush.msra.mxu0 0.0
      %1491 = vmatpush.msra.mxu0 0.0
      %1492 = vmatpush.msra.mxu0 0.0
      %1493 = vmatpush.msra.mxu0 0.0
      %1494 = vmatpush.msra.mxu0 0.0
      %1495 = vmatpush.msra.mxu0 0.0
      %1496 = vmatpush.msra.mxu0 0.0
      %1497 = vmatpush.msra.mxu0 0.0
      %1498 = vmatpush.msra.mxu0 0.0
      %1499 = vmatpush.msra.mxu0 0.0
      %1500 = vmatpush.msra.mxu0 0.0
      %1501 = vmatpush.msra.mxu0 0.0
      %1502 = vmatpush.msra.mxu0 0.0
      %1503 = vmatpush.msra.mxu0 0.0
      %1504 = vmatpush.msra.mxu0 %v1487
      %1505 = vmatmul.f32.gmra.mxu0 %v536
      %v1506 = vpop.f32.mrf.mxu0
      %v1507 = vadd.f32 0.0, %v1506
      %1508 = vmatmul.f32.gmra.mxu0 %v538
      %v1509 = vpop.f32.mrf.mxu0
      %v1510 = vadd.f32 0.0, %v1509
      %1511 = vmatmul.f32.gmra.mxu0 %v540
      %v1512 = vpop.f32.mrf.mxu0
      %v1513 = vadd.f32 0.0, %v1512
      %1514 = vmatmul.f32.gmra.mxu0 %v542
      %v1515 = vpop.f32.mrf.mxu0
      %v1516 = vadd.f32 0.0, %v1515
      %1517 = vmatmul.f32.gmra.mxu0 %v544
      %v1518 = vpop.f32.mrf.mxu0
      %v1519 = vadd.f32 0.0, %v1518
      %1520 = vmatmul.f32.gmra.mxu0 %v546
      %v1521 = vpop.f32.mrf.mxu0
      %v1522 = vadd.f32 0.0, %v1521
      %1523 = vmatmul.f32.gmra.mxu0 %v548
      %v1524 = vpop.f32.mrf.mxu0
      %v1525 = vadd.f32 0.0, %v1524
      %1526 = vmatmul.f32.gmra.mxu0 %v550
      %v1527 = vpop.f32.mrf.mxu0
      %v1528 = vadd.f32 0.0, %v1527
      %1529 = vmatmul.f32.gmra.mxu0 %v552
      %v1530 = vpop.f32.mrf.mxu0
      %v1531 = vadd.f32 0.0, %v1530
      %1532 = vmatmul.f32.gmra.mxu0 %v554
      %v1533 = vpop.f32.mrf.mxu0
      %v1534 = vadd.f32 0.0, %v1533
      %1535 = vmatmul.f32.gmra.mxu0 %v556
      %v1536 = vpop.f32.mrf.mxu0
      %v1537 = vadd.f32 0.0, %v1536
      %1538 = vmatmul.f32.gmra.mxu0 %v558
      %v1539 = vpop.f32.mrf.mxu0
      %v1540 = vadd.f32 0.0, %v1539
      %1541 = vmatmul.f32.gmra.mxu0 %v560
      %v1542 = vpop.f32.mrf.mxu0
      %v1543 = vadd.f32 0.0, %v1542
      %1544 = vmatmul.f32.gmra.mxu0 %v562
      %v1545 = vpop.f32.mrf.mxu0
      %v1546 = vadd.f32 0.0, %v1545
      %1547 = vmatmul.f32.gmra.mxu0 %v564
      %v1548 = vpop.f32.mrf.mxu0
      %v1549 = vadd.f32 0.0, %v1548
      %1550 = vmatmul.f32.gmra.mxu0 %v566
      %v1551 = vpop.f32.mrf.mxu0
      %v1552 = vadd.f32 0.0, %v1551
      %1553 = vmatmul.f32.gmra.mxu0 %v568
      %v1554 = vpop.f32.mrf.mxu0
      %v1555 = vadd.f32 0.0, %v1554
      %1556 = vmatmul.f32.gmra.mxu0 %v570
      %v1557 = vpop.f32.mrf.mxu0
      %v1558 = vadd.f32 0.0, %v1557
      %1559 = vmatmul.f32.gmra.mxu0 %v572
      %v1560 = vpop.f32.mrf.mxu0
      %v1561 = vadd.f32 0.0, %v1560
      %1562 = vmatmul.f32.gmra.mxu0 %v574
      %v1563 = vpop.f32.mrf.mxu0
      %v1564 = vadd.f32 0.0, %v1563
      %1565 = vmatmul.f32.gmra.mxu0 %v576
      %v1566 = vpop.f32.mrf.mxu0
      %v1567 = vadd.f32 0.0, %v1566
      %1568 = vmatmul.f32.gmra.mxu0 %v578
      %v1569 = vpop.f32.mrf.mxu0
      %v1570 = vadd.f32 0.0, %v1569
      %1571 = vmatmul.f32.gmra.mxu0 %v580
      %v1572 = vpop.f32.mrf.mxu0
      %v1573 = vadd.f32 0.0, %v1572
      %1574 = vmatmul.f32.gmra.mxu0 %v582
      %v1575 = vpop.f32.mrf.mxu0
      %v1576 = vadd.f32 0.0, %v1575
      %1577 = vmatmul.f32.gmra.mxu0 %v584
      %v1578 = vpop.f32.mrf.mxu0
      %v1579 = vadd.f32 0.0, %v1578
      %1580 = vmatmul.f32.gmra.mxu0 %v586
      %v1581 = vpop.f32.mrf.mxu0
      %v1582 = vadd.f32 0.0, %v1581
      %1583 = vmatmul.f32.gmra.mxu0 %v588
      %v1584 = vpop.f32.mrf.mxu0
      %v1585 = vadd.f32 0.0, %v1584
      %1586 = vmatmul.f32.gmra.mxu0 %v590
      %v1587 = vpop.f32.mrf.mxu0
      %v1588 = vadd.f32 0.0, %v1587
      %1589 = vmatmul.f32.gmra.mxu0 %v1006
      %v1590 = vpop.f32.mrf.mxu0
      %v1591 = vadd.f32 0.0, %v1590
      %1592 = vmatmul.f32.gmra.mxu0 %v1009
      %v1593 = vpop.f32.mrf.mxu0
      %v1594 = vadd.f32 0.0, %v1593
      %1595 = vmatmul.f32.gmra.mxu0 %v1481
      %v1596 = vpop.f32.mrf.mxu0
      %v1597 = vadd.f32 0.0, %v1596
      %1598 = vmatmul.f32.gmra.mxu0 %v1484
      %v1599 = vpop.f32.mrf.mxu0
      %v1600 = vadd.f32 0.0, %v1599
      %1601 = vdwg.mxu0
      %v1602 = vadd.f32 %v1446, %v1507
      %v1603 = vadd.f32 %v1447, %v1510
      %v1604 = vadd.f32 %v1448, %v1513
      %v1605 = vadd.f32 %v1449, %v1516
      %v1606 = vadd.f32 %v1450, %v1519
      %v1607 = vadd.f32 %v1451, %v1522
      %v1608 = vadd.f32 %v1452, %v1525
      %v1609 = vadd.f32 %v1453, %v1528
      %v1610 = vadd.f32 %v1454, %v1531
      %v1611 = vadd.f32 %v1455, %v1534
      %v1612 = vadd.f32 %v1456, %v1537
      %v1613 = vadd.f32 %v1457, %v1540
      %v1614 = vadd.f32 %v1458, %v1543
      %v1615 = vadd.f32 %v1459, %v1546
      %v1616 = vadd.f32 %v1460, %v1549
      %v1617 = vadd.f32 %v1461, %v1552
      %v1618 = vadd.f32 %v1462, %v1555
      %v1619 = vadd.f32 %v1463, %v1558
      %v1620 = vadd.f32 %v1464, %v1561
      %v1621 = vadd.f32 %v1465, %v1564
      %v1622 = vadd.f32 %v1466, %v1567
      %v1623 = vadd.f32 %v1467, %v1570
      %v1624 = vadd.f32 %v1468, %v1573
      %v1625 = vadd.f32 %v1469, %v1576
      %v1626 = vadd.f32 %v1470, %v1579
      %v1627 = vadd.f32 %v1471, %v1582
      %v1628 = vadd.f32 %v1472, %v1585
      %v1629 = vadd.f32 %v1473, %v1588
      %v1630 = vadd.f32 %v1474, %v1591
      %v1631 = vadd.f32 %v1475, %v1594
      %v1632 = vadd.f32 %v1476, %v1597
      %v1633 = vadd.f32 %v1477, %v1600
      %v1635 = vrot.slane %v211, 1
      %v1636 = vrot.slane %v212, 1
      %v1637 = vsel %vm263, %v1635, %v1636
      %v1638 = vrot.slane %v213, 1
      %v1639 = vsel %vm263, %v1636, %v1638
      %s1640 = scalar_lea.vmem %s1, 28
      %v1641 = vld [vmem:[%s1640] sm:$0xf]
      %v1642 = vsel %vm346, %v1637, 0
      %v1644 = vsel %vm346, %v1639, 0
      %v1647 = vsel %vm411, %v1641, 0
      %1649 = vmatpush.msra.mxu0 0.0
      %1650 = vmatpush.msra.mxu0 0.0
      %1651 = vmatpush.msra.mxu0 0.0
      %1652 = vmatpush.msra.mxu0 0.0
      %1653 = vmatpush.msra.mxu0 0.0
      %1654 = vmatpush.msra.mxu0 0.0
      %1655 = vmatpush.msra.mxu0 0.0
      %1656 = vmatpush.msra.mxu0 0.0
      %1657 = vmatpush.msra.mxu0 0.0
      %1658 = vmatpush.msra.mxu0 0.0
      %1659 = vmatpush.msra.mxu0 0.0
      %1660 = vmatpush.msra.mxu0 0.0
      %1661 = vmatpush.msra.mxu0 0.0
      %1662 = vmatpush.msra.mxu0 0.0
      %1663 = vmatpush.msra.mxu0 0.0
      %1664 = vmatpush.msra.mxu0 %v1647
      %1665 = vmatmul.f32.gmra.mxu0 %v355
      %v1666 = vpop.f32.mrf.mxu0
      %v1667 = vadd.f32 0.0, %v1666
      %1668 = vmatmul.f32.gmra.mxu0 %v357
      %v1669 = vpop.f32.mrf.mxu0
      %v1670 = vadd.f32 0.0, %v1669
      %1671 = vmatmul.f32.gmra.mxu0 %v359
      %v1672 = vpop.f32.mrf.mxu0
      %v1673 = vadd.f32 0.0, %v1672
      %1674 = vmatmul.f32.gmra.mxu0 %v361
      %v1675 = vpop.f32.mrf.mxu0
      %v1676 = vadd.f32 0.0, %v1675
      %1677 = vmatmul.f32.gmra.mxu0 %v363
      %v1678 = vpop.f32.mrf.mxu0
      %v1679 = vadd.f32 0.0, %v1678
      %1680 = vmatmul.f32.gmra.mxu0 %v365
      %v1681 = vpop.f32.mrf.mxu0
      %v1682 = vadd.f32 0.0, %v1681
      %1683 = vmatmul.f32.gmra.mxu0 %v367
      %v1684 = vpop.f32.mrf.mxu0
      %v1685 = vadd.f32 0.0, %v1684
      %1686 = vmatmul.f32.gmra.mxu0 %v369
      %v1687 = vpop.f32.mrf.mxu0
      %v1688 = vadd.f32 0.0, %v1687
      %1689 = vmatmul.f32.gmra.mxu0 %v371
      %v1690 = vpop.f32.mrf.mxu0
      %v1691 = vadd.f32 0.0, %v1690
      %1692 = vmatmul.f32.gmra.mxu0 %v373
      %v1693 = vpop.f32.mrf.mxu0
      %v1694 = vadd.f32 0.0, %v1693
      %1695 = vmatmul.f32.gmra.mxu0 %v375
      %v1696 = vpop.f32.mrf.mxu0
      %v1697 = vadd.f32 0.0, %v1696
      %1698 = vmatmul.f32.gmra.mxu0 %v377
      %v1699 = vpop.f32.mrf.mxu0
      %v1700 = vadd.f32 0.0, %v1699
      %1701 = vmatmul.f32.gmra.mxu0 %v379
      %v1702 = vpop.f32.mrf.mxu0
      %v1703 = vadd.f32 0.0, %v1702
      %1704 = vmatmul.f32.gmra.mxu0 %v381
      %v1705 = vpop.f32.mrf.mxu0
      %v1706 = vadd.f32 0.0, %v1705
      %1707 = vmatmul.f32.gmra.mxu0 %v383
      %v1708 = vpop.f32.mrf.mxu0
      %v1709 = vadd.f32 0.0, %v1708
      %1710 = vmatmul.f32.gmra.mxu0 %v385
      %v1711 = vpop.f32.mrf.mxu0
      %v1712 = vadd.f32 0.0, %v1711
      %1713 = vmatmul.f32.gmra.mxu0 %v387
      %v1714 = vpop.f32.mrf.mxu0
      %v1715 = vadd.f32 0.0, %v1714
      %1716 = vmatmul.f32.gmra.mxu0 %v389
      %v1717 = vpop.f32.mrf.mxu0
      %v1718 = vadd.f32 0.0, %v1717
      %1719 = vmatmul.f32.gmra.mxu0 %v391
      %v1720 = vpop.f32.mrf.mxu0
      %v1721 = vadd.f32 0.0, %v1720
      %1722 = vmatmul.f32.gmra.mxu0 %v393
      %v1723 = vpop.f32.mrf.mxu0
      %v1724 = vadd.f32 0.0, %v1723
      %1725 = vmatmul.f32.gmra.mxu0 %v395
      %v1726 = vpop.f32.mrf.mxu0
      %v1727 = vadd.f32 0.0, %v1726
      %1728 = vmatmul.f32.gmra.mxu0 %v397
      %v1729 = vpop.f32.mrf.mxu0
      %v1730 = vadd.f32 0.0, %v1729
      %1731 = vmatmul.f32.gmra.mxu0 %v399
      %v1732 = vpop.f32.mrf.mxu0
      %v1733 = vadd.f32 0.0, %v1732
      %1734 = vmatmul.f32.gmra.mxu0 %v401
      %v1735 = vpop.f32.mrf.mxu0
      %v1736 = vadd.f32 0.0, %v1735
      %1737 = vmatmul.f32.gmra.mxu0 %v403
      %v1738 = vpop.f32.mrf.mxu0
      %v1739 = vadd.f32 0.0, %v1738
      %1740 = vmatmul.f32.gmra.mxu0 %v405
      %v1741 = vpop.f32.mrf.mxu0
      %v1742 = vadd.f32 0.0, %v1741
      %1743 = vmatmul.f32.gmra.mxu0 %v407
      %v1744 = vpop.f32.mrf.mxu0
      %v1745 = vadd.f32 0.0, %v1744
      %1746 = vmatmul.f32.gmra.mxu0 %v409
      %v1747 = vpop.f32.mrf.mxu0
      %v1748 = vadd.f32 0.0, %v1747
      %1749 = vmatmul.f32.gmra.mxu0 %v1167
      %v1750 = vpop.f32.mrf.mxu0
      %v1751 = vadd.f32 0.0, %v1750
      %1752 = vmatmul.f32.gmra.mxu0 %v1169
      %v1753 = vpop.f32.mrf.mxu0
      %v1754 = vadd.f32 0.0, %v1753
      %1755 = vmatmul.f32.gmra.mxu0 %v1642
      %v1756 = vpop.f32.mrf.mxu0
      %v1757 = vadd.f32 0.0, %v1756
      %1758 = vmatmul.f32.gmra.mxu0 %v1644
      %v1759 = vpop.f32.mrf.mxu0
      %v1760 = vadd.f32 0.0, %v1759
      %1761 = vdwg.mxu0
      %v1762 = vadd.f32 %v1602, %v1667
      %v1763 = vadd.f32 %v1603, %v1670
      %v1764 = vadd.f32 %v1604, %v1673
      %v1765 = vadd.f32 %v1605, %v1676
      %v1766 = vadd.f32 %v1606, %v1679
      %v1767 = vadd.f32 %v1607, %v1682
      %v1768 = vadd.f32 %v1608, %v1685
      %v1769 = vadd.f32 %v1609, %v1688
      %v1770 = vadd.f32 %v1610, %v1691
      %v1771 = vadd.f32 %v1611, %v1694
      %v1772 = vadd.f32 %v1612, %v1697
      %v1773 = vadd.f32 %v1613, %v1700
      %v1774 = vadd.f32 %v1614, %v1703
      %v1775 = vadd.f32 %v1615, %v1706
      %v1776 = vadd.f32 %v1616, %v1709
      %v1777 = vadd.f32 %v1617, %v1712
      %v1778 = vadd.f32 %v1618, %v1715
      %v1779 = vadd.f32 %v1619, %v1718
      %v1780 = vadd.f32 %v1620, %v1721
      %v1781 = vadd.f32 %v1621, %v1724
      %v1782 = vadd.f32 %v1622, %v1727
      %v1783 = vadd.f32 %v1623, %v1730
      %v1784 = vadd.f32 %v1624, %v1733
      %v1785 = vadd.f32 %v1625, %v1736
      %v1786 = vadd.f32 %v1626, %v1739
      %v1787 = vadd.f32 %v1627, %v1742
      %v1788 = vadd.f32 %v1628, %v1745
      %v1789 = vadd.f32 %v1629, %v1748
      %v1790 = vadd.f32 %v1630, %v1751
      %v1791 = vadd.f32 %v1631, %v1754
      %v1792 = vadd.f32 %v1632, %v1757
      %v1793 = vadd.f32 %v1633, %v1760
      %v1794 = vrot.slane %v211, 2
      %v1795 = vrot.slane %v212, 2
      %v1796 = vsel %vm708, %v1794, %v1795
      %v1797 = vrot.slane %v213, 2
      %v1798 = vsel %vm708, %v1795, %v1797
      %s1799 = scalar_lea.vmem %s1, 32
      %v1800 = vld [vmem:[%s1799] sm:$0xf]
      %v1801 = vsel %vm346, %v1796, 0
      %v1803 = vsel %vm346, %v1798, 0
      %v1806 = vsel %vm411, %v1800, 0
      %1808 = vmatpush.msra.mxu0 0.0
      %1809 = vmatpush.msra.mxu0 0.0
      %1810 = vmatpush.msra.mxu0 0.0
      %1811 = vmatpush.msra.mxu0 0.0
      %1812 = vmatpush.msra.mxu0 0.0
      %1813 = vmatpush.msra.mxu0 0.0
      %1814 = vmatpush.msra.mxu0 0.0
      %1815 = vmatpush.msra.mxu0 0.0
      %1816 = vmatpush.msra.mxu0 0.0
      %1817 = vmatpush.msra.mxu0 0.0
      %1818 = vmatpush.msra.mxu0 0.0
      %1819 = vmatpush.msra.mxu0 0.0
      %1820 = vmatpush.msra.mxu0 0.0
      %1821 = vmatpush.msra.mxu0 0.0
      %1822 = vmatpush.msra.mxu0 0.0
      %1823 = vmatpush.msra.mxu0 %v1806
      %1824 = vmatmul.f32.gmra.mxu0 %v799
      %v1825 = vpop.f32.mrf.mxu0
      %v1826 = vadd.f32 0.0, %v1825
      %1827 = vmatmul.f32.gmra.mxu0 %v801
      %v1828 = vpop.f32.mrf.mxu0
      %v1829 = vadd.f32 0.0, %v1828
      %1830 = vmatmul.f32.gmra.mxu0 %v803
      %v1831 = vpop.f32.mrf.mxu0
      %v1832 = vadd.f32 0.0, %v1831
      %1833 = vmatmul.f32.gmra.mxu0 %v805
      %v1834 = vpop.f32.mrf.mxu0
      %v1835 = vadd.f32 0.0, %v1834
      %1836 = vmatmul.f32.gmra.mxu0 %v807
      %v1837 = vpop.f32.mrf.mxu0
      %v1838 = vadd.f32 0.0, %v1837
      %1839 = vmatmul.f32.gmra.mxu0 %v809
      %v1840 = vpop.f32.mrf.mxu0
      %v1841 = vadd.f32 0.0, %v1840
      %1842 = vmatmul.f32.gmra.mxu0 %v811
      %v1843 = vpop.f32.mrf.mxu0
      %v1844 = vadd.f32 0.0, %v1843
      %1845 = vmatmul.f32.gmra.mxu0 %v813
      %v1846 = vpop.f32.mrf.mxu0
      %v1847 = vadd.f32 0.0, %v1846
      %1848 = vmatmul.f32.gmra.mxu0 %v815
      %v1849 = vpop.f32.mrf.mxu0
      %v1850 = vadd.f32 0.0, %v1849
      %1851 = vmatmul.f32.gmra.mxu0 %v817
      %v1852 = vpop.f32.mrf.mxu0
      %v1853 = vadd.f32 0.0, %v1852
      %1854 = vmatmul.f32.gmra.mxu0 %v819
      %v1855 = vpop.f32.mrf.mxu0
      %v1856 = vadd.f32 0.0, %v1855
      %1857 = vmatmul.f32.gmra.mxu0 %v821
      %v1858 = vpop.f32.mrf.mxu0
      %v1859 = vadd.f32 0.0, %v1858
      %1860 = vmatmul.f32.gmra.mxu0 %v823
      %v1861 = vpop.f32.mrf.mxu0
      %v1862 = vadd.f32 0.0, %v1861
      %1863 = vmatmul.f32.gmra.mxu0 %v825
      %v1864 = vpop.f32.mrf.mxu0
      %v1865 = vadd.f32 0.0, %v1864
      %1866 = vmatmul.f32.gmra.mxu0 %v827
      %v1867 = vpop.f32.mrf.mxu0
      %v1868 = vadd.f32 0.0, %v1867
      %1869 = vmatmul.f32.gmra.mxu0 %v829
      %v1870 = vpop.f32.mrf.mxu0
      %v1871 = vadd.f32 0.0, %v1870
      %1872 = vmatmul.f32.gmra.mxu0 %v831
      %v1873 = vpop.f32.mrf.mxu0
      %v1874 = vadd.f32 0.0, %v1873
      %1875 = vmatmul.f32.gmra.mxu0 %v833
      %v1876 = vpop.f32.mrf.mxu0
      %v1877 = vadd.f32 0.0, %v1876
      %1878 = vmatmul.f32.gmra.mxu0 %v835
      %v1879 = vpop.f32.mrf.mxu0
      %v1880 = vadd.f32 0.0, %v1879
      %1881 = vmatmul.f32.gmra.mxu0 %v837
      %v1882 = vpop.f32.mrf.mxu0
      %v1883 = vadd.f32 0.0, %v1882
      %1884 = vmatmul.f32.gmra.mxu0 %v839
      %v1885 = vpop.f32.mrf.mxu0
      %v1886 = vadd.f32 0.0, %v1885
      %1887 = vmatmul.f32.gmra.mxu0 %v841
      %v1888 = vpop.f32.mrf.mxu0
      %v1889 = vadd.f32 0.0, %v1888
      %1890 = vmatmul.f32.gmra.mxu0 %v843
      %v1891 = vpop.f32.mrf.mxu0
      %v1892 = vadd.f32 0.0, %v1891
      %1893 = vmatmul.f32.gmra.mxu0 %v845
      %v1894 = vpop.f32.mrf.mxu0
      %v1895 = vadd.f32 0.0, %v1894
      %1896 = vmatmul.f32.gmra.mxu0 %v847
      %v1897 = vpop.f32.mrf.mxu0
      %v1898 = vadd.f32 0.0, %v1897
      %1899 = vmatmul.f32.gmra.mxu0 %v849
      %v1900 = vpop.f32.mrf.mxu0
      %v1901 = vadd.f32 0.0, %v1900
      %1902 = vmatmul.f32.gmra.mxu0 %v851
      %v1903 = vpop.f32.mrf.mxu0
      %v1904 = vadd.f32 0.0, %v1903
      %1905 = vmatmul.f32.gmra.mxu0 %v853
      %v1906 = vpop.f32.mrf.mxu0
      %v1907 = vadd.f32 0.0, %v1906
      %1908 = vmatmul.f32.gmra.mxu0 %v1326
      %v1909 = vpop.f32.mrf.mxu0
      %v1910 = vadd.f32 0.0, %v1909
      %1911 = vmatmul.f32.gmra.mxu0 %v1328
      %v1912 = vpop.f32.mrf.mxu0
      %v1913 = vadd.f32 0.0, %v1912
      %1914 = vmatmul.f32.gmra.mxu0 %v1801
      %v1915 = vpop.f32.mrf.mxu0
      %v1916 = vadd.f32 0.0, %v1915
      %1917 = vmatmul.f32.gmra.mxu0 %v1803
      %v1918 = vpop.f32.mrf.mxu0
      %v1919 = vadd.f32 0.0, %v1918
      %1920 = vdwg.mxu0
      %v1921 = vadd.f32 %v1762, %v1826
      %v1922 = vadd.f32 %v1763, %v1829
      %v1923 = vadd.f32 %v1764, %v1832
      %v1924 = vadd.f32 %v1765, %v1835
      %v1925 = vadd.f32 %v1766, %v1838
      %v1926 = vadd.f32 %v1767, %v1841
      %v1927 = vadd.f32 %v1768, %v1844
      %v1928 = vadd.f32 %v1769, %v1847
      %v1929 = vadd.f32 %v1770, %v1850
      %v1930 = vadd.f32 %v1771, %v1853
      %v1931 = vadd.f32 %v1772, %v1856
      %v1932 = vadd.f32 %v1773, %v1859
      %v1933 = vadd.f32 %v1774, %v1862
      %v1934 = vadd.f32 %v1775, %v1865
      %v1935 = vadd.f32 %v1776, %v1868
      %v1936 = vadd.f32 %v1777, %v1871
      %v1937 = vadd.f32 %v1778, %v1874
      %v1938 = vadd.f32 %v1779, %v1877
      %v1939 = vadd.f32 %v1780, %v1880
      %v1940 = vadd.f32 %v1781, %v1883
      %v1941 = vadd.f32 %v1782, %v1886
      %v1942 = vadd.f32 %v1783, %v1889
      %v1943 = vadd.f32 %v1784, %v1892
      %v1944 = vadd.f32 %v1785, %v1895
      %v1945 = vadd.f32 %v1786, %v1898
      %v1946 = vadd.f32 %v1787, %v1901
      %v1947 = vadd.f32 %v1788, %v1904
      %v1948 = vadd.f32 %v1789, %v1907
      %v1949 = vadd.f32 %v1790, %v1910
      %v1950 = vadd.f32 %v1791, %v1913
      %v1951 = vadd.f32 %v1792, %v1916
      %v1952 = vadd.f32 %v1793, %v1919
      %v1953 = vld [vmem:[%s2] sm:$0x1]
      %v1954 = vadd.f32 %v1921, %v1922
      %v1955 = vadd.f32 %v1954, %v1923
      %v1956 = vadd.f32 %v1955, %v1924
      %v1957 = vadd.f32 %v1956, %v1925
      %v1958 = vadd.f32 %v1957, %v1926
      %v1959 = vadd.f32 %v1958, %v1927
      %v1960 = vadd.f32 %v1959, %v1928
      %v1961 = vadd.f32 %v1960, %v1929
      %v1962 = vadd.f32 %v1961, %v1930
      %v1963 = vadd.f32 %v1962, %v1931
      %v1964 = vadd.f32 %v1963, %v1932
      %v1965 = vadd.f32 %v1964, %v1933
      %v1966 = vadd.f32 %v1965, %v1934
      %v1967 = vadd.f32 %v1966, %v1935
      %v1968 = vadd.f32 %v1967, %v1936
      %v1969 = vadd.f32 %v1968, %v1937
      %v1970 = vadd.f32 %v1969, %v1938
      %v1971 = vadd.f32 %v1970, %v1939
      %v1972 = vadd.f32 %v1971, %v1940
      %v1973 = vadd.f32 %v1972, %v1941
      %v1974 = vadd.f32 %v1973, %v1942
      %v1975 = vadd.f32 %v1974, %v1943
      %v1976 = vadd.f32 %v1975, %v1944
      %v1977 = vadd.f32 %v1976, %v1945
      %v1978 = vadd.f32 %v1977, %v1946
      %v1979 = vadd.f32 %v1978, %v1947
      %v1980 = vadd.f32 %v1979, %v1948
      %v1981 = vadd.f32 %v1980, %v1949
      %v1982 = vadd.f32 %v1981, %v1950
      %v1983 = vadd.f32 %v1982, %v1951
      %v1984 = vadd.f32 %v1983, %v1952
      %v1985 = vrot.slane %v1984, 4
      %v1986 = vadd.f32 %v1984, %v1985
      %v1987 = vrot.slane %v1986, 2
      %v1988 = vadd.f32 %v1986, %v1987
      %v1989 = vrot.slane %v1988, 1
      %v1990 = vadd.f32 %v1988, %v1989
      %v1991 = vadd.f32 %v1953, %v1990
      %1992 = vst [vmem:[%s2] sm:$0x1] %v1991
      %v1993 = vld [vmem:[%s3] sm:$0x1]
      %v1994 = vmul.f32 %v1921, %v1921
      %v1995 = vmul.f32 %v1922, %v1922
      %v1996 = vmul.f32 %v1923, %v1923
      %v1997 = vmul.f32 %v1924, %v1924
      %v1998 = vmul.f32 %v1925, %v1925
      %v1999 = vmul.f32 %v1926, %v1926
      %v2000 = vmul.f32 %v1927, %v1927
      %v2001 = vmul.f32 %v1928, %v1928
      %v2002 = vmul.f32 %v1929, %v1929
      %v2003 = vmul.f32 %v1930, %v1930
      %v2004 = vmul.f32 %v1931, %v1931
      %v2005 = vmul.f32 %v1932, %v1932
      %v2006 = vmul.f32 %v1933, %v1933
      %v2007 = vmul.f32 %v1934, %v1934
      %v2008 = vmul.f32 %v1935, %v1935
      %v2009 = vmul.f32 %v1936, %v1936
      %v2010 = vmul.f32 %v1937, %v1937
      %v2011 = vmul.f32 %v1938, %v1938
      %v2012 = vmul.f32 %v1939, %v1939
      %v2013 = vmul.f32 %v1940, %v1940
      %v2014 = vmul.f32 %v1941, %v1941
      %v2015 = vmul.f32 %v1942, %v1942
      %v2016 = vmul.f32 %v1943, %v1943
      %v2017 = vmul.f32 %v1944, %v1944
      %v2018 = vmul.f32 %v1945, %v1945
      %v2019 = vmul.f32 %v1946, %v1946
      %v2020 = vmul.f32 %v1947, %v1947
      %v2021 = vmul.f32 %v1948, %v1948
      %v2022 = vmul.f32 %v1949, %v1949
      %v2023 = vmul.f32 %v1950, %v1950
      %v2024 = vmul.f32 %v1951, %v1951
      %v2025 = vmul.f32 %v1952, %v1952
      %v2026 = vadd.f32 %v1994, %v1995
      %v2027 = vadd.f32 %v2026, %v1996
      %v2028 = vadd.f32 %v2027, %v1997
      %v2029 = vadd.f32 %v2028, %v1998
      %v2030 = vadd.f32 %v2029, %v1999
      %v2031 = vadd.f32 %v2030, %v2000
      %v2032 = vadd.f32 %v2031, %v2001
      %v2033 = vadd.f32 %v2032, %v2002
      %v2034 = vadd.f32 %v2033, %v2003
      %v2035 = vadd.f32 %v2034, %v2004
      %v2036 = vadd.f32 %v2035, %v2005
      %v2037 = vadd.f32 %v2036, %v2006
      %v2038 = vadd.f32 %v2037, %v2007
      %v2039 = vadd.f32 %v2038, %v2008
      %v2040 = vadd.f32 %v2039, %v2009
      %v2041 = vadd.f32 %v2040, %v2010
      %v2042 = vadd.f32 %v2041, %v2011
      %v2043 = vadd.f32 %v2042, %v2012
      %v2044 = vadd.f32 %v2043, %v2013
      %v2045 = vadd.f32 %v2044, %v2014
      %v2046 = vadd.f32 %v2045, %v2015
      %v2047 = vadd.f32 %v2046, %v2016
      %v2048 = vadd.f32 %v2047, %v2017
      %v2049 = vadd.f32 %v2048, %v2018
      %v2050 = vadd.f32 %v2049, %v2019
      %v2051 = vadd.f32 %v2050, %v2020
      %v2052 = vadd.f32 %v2051, %v2021
      %v2053 = vadd.f32 %v2052, %v2022
      %v2054 = vadd.f32 %v2053, %v2023
      %v2055 = vadd.f32 %v2054, %v2024
      %v2056 = vadd.f32 %v2055, %v2025
      %v2057 = vrot.slane %v2056, 4
      %v2058 = vadd.f32 %v2056, %v2057
      %v2059 = vrot.slane %v2058, 2
      %v2060 = vadd.f32 %v2058, %v2059
      %v2061 = vrot.slane %v2060, 1
      %v2062 = vadd.f32 %v2060, %v2061
      %v2063 = vadd.f32 %v1993, %v2062
      %2064 = vst [vmem:[%s3] sm:$0x1] %v2063
      // Predicated region
      $region33: #{conv_block_forward.2} parent=27 // pred_check
        %p2065 = pneg %p75
      $region34: #{conv_block_forward.2} parent=27 // pred_check_branch
        %2067 = sbr.rel (%p2065) target = $region36
      $region35: #{conv_block_forward.2} parent=27 // pred_region
        _
      $region36: #{conv_block_forward.2} parent=27 // pred_fallthru
        _
      // Predicated region
      $region37: #{conv_block_forward.2} parent=27 // pred_check
        %p2068 = pneg %p96
      $region38: #{conv_block_forward.2} parent=27 // pred_check_branch
        %2070 = sbr.rel (%p2068) target = $region40
      $region39: #{conv_block_forward.2} parent=27 // pred_region
        _
      $region40: #{conv_block_forward.2} parent=27 // pred_fallthru
        _
      // Predicated region
      $region41: #{conv_block_forward.2} parent=27 // pred_check
        %p2071 = pneg %p75
      $region42: #{conv_block_forward.2} parent=27 // pred_check_branch
        %2073 = sbr.rel (%p2071) target = $region44
      $region43: #{conv_block_forward.2} parent=27 // pred_region
        _
      $region44: #{conv_block_forward.2} parent=27 // pred_fallthru
        _
      // Predicated region
      $region45: #{conv_block_forward.2} parent=27 // pred_check
        %p2074 = pneg %p96
      $region46: #{conv_block_forward.2} parent=27 // pred_check_branch
        %2076 = sbr.rel (%p2074) target = $region48
      $region47: #{conv_block_forward.2} parent=27 // pred_region
        _
      $region48: #{conv_block_forward.2} parent=27 // pred_fallthru
        _
    $region28: #{conv_block_forward.2} parent=5 // pred_fallthru
      _
    %p2077 = scmp.le.s32.totalorder 2, %s10
    // Predicated region
    $region49: #{conv_block_forward.2} parent=5 // pred_check
      %p2078 = pneg %p2077
    $region50: #{conv_block_forward.2} parent=5 // pred_check_branch
      %2080 = sbr.rel (%p2078) target = $region52
    $region51: #{conv_block_forward.2} parent=5 // pred_region
      %s2081 = ssub.s32 %s10, 2
    $region52: #{conv_block_forward.2} parent=5 // pred_fallthru
      _
  $region6: #{conv_block_forward.2} parent=0 // loop_footer
    %s14 = sadd.s32 1, %s10
  $region7: #{conv_block_forward.2} parent=0 // loop_footer_branch
    %9 = sbr.rel target = $region3
  $region8: #{conv_block_forward.2} parent=0 // loop_exit
    _

// kernel: conv_block_forward.3
$region0: #{conv_block_forward.3}
  #allocation0 [shape = 'u32[]', space=smem, size = 0x4, offset = 0x4, fixed_abs, tag = 'smem constant byte address 0x4 - core index']
  #allocation1 [shape = 'u32[72,128]{1,0:T(1,128)}', space=vmem, size = 0x9000, scoped, tag = 'internal scratch']
  %s0 = inlined_call_operand.vmem [shape: f32[2,18,18,4], index: 0, kind: input, shape index: {}]
  %s1 = inlined_call_operand.vmem [shape: f32[9,4,128], index: 1, kind: input, shape index: {}]
  %s2 = inlined_call_operand.vmem [shape: f32[2,128], index: 2, kind: input, shape index: {}]
  %s3 = inlined_call_operand.vmem [shape: f32[512,128], index: 3, kind: output, shape index: {}]
  %s4 = sld [smem:[#allocation0]]
  $region45: #{conv_block_forward.3} parent=0
    _
  %s6 = ssub.s32 1, %s4
  %s7 = scalar_select 0, %s6, %s4
  loop: start=0, step=1, limit=4
  $region2: #{conv_block_forward.3} parent=0 // loop_pre_header
    _
  $region3: #{conv_block_forward.3} parent=0 // loop_header
    %s9 = sphi 0, %s13
    %p10 = scmp.ge.s32.totalorder %s9, 4
    %s19 = sphi 0, %s21
    %s22 = sphi 0, %s19
    %s23 = sphi 0, %s22
    %s39 = sphi 0, %s23
    %s43 = sphi 0, %s43
    %s45 = sphi 0, %s43
    %s46 = sphi 0, %s45
    %s60 = sphi 0, %s46
    %s64 = sphi 0, %s64
    %s66 = sphi 0, %s64
    %s67 = sphi 0, %s66
    %s81 = sphi 0, %s67
    %s87 = sphi 0, %s89
    %s90 = sphi 0, %s87
    %s91 = sphi 0, %s90
    %s107 = sphi 0, %s91
  $region4: #{conv_block_forward.3} parent=0 // loop_header_branch
    %12 = sbr.rel (%p10) target = $region8
  $region5: #{conv_block_forward.3} parent=0 // loop_body
    %s14 = ssub.s32 %s9, 1
    %s15 = ssub.s32 %s9, 2
    %s16 = sadd.s32 %s9, 1
    %s17 = ssub.s32 %s9, %s16
    %p18 = scmp.eq.s32.totalorder %s17, 0
    %s20 = sadd.s32 %s19, 1
    %s21 = scalar_select %p18, %s19, %s20
    %p24 = pneg %p18
    %p25 = scmp.eq.s32.totalorder %s9, 1
    %p26 = por %p24, %p25
    %p27 = scmp.ne.s32.totalorder %s19, %s22
    %p28 = scmp.eq.s32.totalorder %s9, 0
    %p29 = por %p27, %p28
    %p30 = scmp.ne.s32.totalorder %s19, %s22
    %p31 = scmp.eq.s32.totalorder %s14, 1
    %p32 = por %p30, %p31
    %p33 = scmp.ne.s32.totalorder %s22, %s23
    %p34 = scmp.eq.s32.totalorder %s14, 0
    %p35 = por %p33, %p34
    %p36 = scmp.ne.s32.totalorder %s22, %s23
    %p37 = scmp.eq.s32.totalorder %s15, 1
    %p38 = por %p36, %p37
    %p40 = scmp.ne.s32.totalorder %s23, %s39
    %p41 = scmp.eq.s32.totalorder %s15, 0
    %p42 = por %p40, %p41
    %s44 = sadd.s32 %s43, 1
    %p47 = scmp.eq.s32.totalorder %s9, 1
    %p48 = scmp.ne.s32.totalorder %s43, %s45
    %p49 = scmp.eq.s32.totalorder %s9, 0
    %p50 = por %p48, %p49
    %p51 = scmp.ne.s32.totalorder %s43, %s45
    %p52 = scmp.eq.s32.totalorder %s14, 1
    %p53 = por %p51, %p52
    %p54 = scmp.ne.s32.totalorder %s45, %s46
    %p55 = scmp.eq.s32.totalorder %s14, 0
    %p56 = por %p54, %p55
    %p57 = scmp.ne.s32.totalorder %s45, %s46
    %p58 = scmp.eq.s32.totalorder %s15, 1
    %p59 = por %p57, %p58
    %p61 = scmp.ne.s32.totalorder %s46, %s60
    %p62 = scmp.eq.s32.totalorder %s15, 0
    %p63 = por %p61, %p62
    %s65 = sadd.s32 %s64, 1
    %p68 = scmp.eq.s32.totalorder %s9, 1
    %p69 = scmp.ne.s32.totalorder %s64, %s66
    %p70 = scmp.eq.s32.totalorder %s9, 0
    %p71 = por %p69, %p70
    %p72 = scmp.ne.s32.totalorder %s64, %s66
    %p73 = scmp.eq.s32.totalorder %s14, 1
    %p74 = por %p72, %p73
    %p75 = scmp.ne.s32.totalorder %s66, %s67
    %p76 = scmp.eq.s32.totalorder %s14, 0
    %p77 = por %p75, %p76
    %p78 = scmp.ne.s32.totalorder %s66, %s67
    %p79 = scmp.eq.s32.totalorder %s15, 1
    %p80 = por %p78, %p79
    %p82 = scmp.ne.s32.totalorder %s67, %s81
    %p83 = scmp.eq.s32.totalorder %s15, 0
    %p84 = por %p82, %p83
    %s85 = ssub.s32 %s9, %s16
    %p86 = scmp.eq.s32.totalorder %s85, 0
    %s88 = sadd.s32 %s87, 1
    %s89 = scalar_select %p86, %s87, %s88
    %p92 = pneg %p86
    %p93 = scmp.eq.s32.totalorder %s9, 1
    %p94 = por %p92, %p93
    %p95 = scmp.ne.s32.totalorder %s87, %s90
    %p96 = scmp.eq.s32.totalorder %s9, 0
    %p97 = por %p95, %p96
    %p98 = scmp.ne.s32.totalorder %s87, %s90
    %p99 = scmp.eq.s32.totalorder %s14, 1
    %p100 = por %p98, %p99
    %p101 = scmp.ne.s32.totalorder %s90, %s91
    %p102 = scmp.eq.s32.totalorder %s14, 0
    %p103 = por %p101, %p102
    %p104 = scmp.ne.s32.totalorder %s90, %s91
    %p105 = scmp.eq.s32.totalorder %s15, 1
    %p106 = por %p104, %p105
    %p108 = scmp.ne.s32.totalorder %s91, %s107
    %p109 = scmp.eq.s32.totalorder %s15, 0
    %p110 = por %p108, %p109
    %p111 = scmp.le.s32.totalorder 1, %s9
    %p112 = scmp.lt.s32.totalorder %s9, 3
    %p113 = pnand %p111, %p112
    %p114 = pneg %p113
    // Predicated region
    $region9: #{conv_block_forward.3} parent=5 // pred_check
      _
    $region10: #{conv_block_forward.3} parent=5 // pred_check_branch
      %116 = sbr.rel (%p113) target = $region12
    $region11: #{conv_block_forward.3} parent=5 // pred_region
      %s117 = ssub.s32 %s9, 1
      // Predicated region
      $region13: #{conv_block_forward.3} parent=11 // pred_check
        %p118 = pneg %p56
      $region14: #{conv_block_forward.3} parent=11 // pred_check_branch
        %120 = sbr.rel (%p118) target = $region16
      $region15: #{conv_block_forward.3} parent=11 // pred_region
        _
      $region16: #{conv_block_forward.3} parent=11 // pred_fallthru
        _
      // Predicated region
      $region17: #{conv_block_forward.3} parent=11 // pred_check
        %p121 = pneg %p77
      $region18: #{conv_block_forward.3} parent=11 // pred_check_branch
        %123 = sbr.rel (%p121) target = $region20
      $region19: #{conv_block_forward.3} parent=11 // pred_region
        _
      $region20: #{conv_block_forward.3} parent=11 // pred_fallthru
        _
    $region12: #{conv_block_forward.3} parent=5 // pred_fallthru
      _
    %p124 = scmp.lt.s32.totalorder %s9, 2
    // Predicated region
    $region21: #{conv_block_forward.3} parent=5 // pred_check
      %p125 = pneg %p124
    $region22: #{conv_block_forward.3} parent=5 // pred_check_branch
      %127 = sbr.rel (%p125) target = $region24
    $region23: #{conv_block_forward.3} parent=5 // pred_region
      // Predicated region
      $region25: #{conv_block_forward.3} parent=23 // pred_check
        %p128 = pneg %p29
      $region26: #{conv_block_forward.3} parent=23 // pred_check_branch
        %130 = sbr.rel (%p128) target = $region28
      $region27: #{conv_block_forward.3} parent=23 // pred_region
        %p131 = scmp.lt.s32.totalorder %s9, 1
        %s132 = scalar_select %p131, %s9, 1
        %s133 = smul.addr %s132, 54
        %s134 = smul.addr %s133, 8
        %s135 = scalar_lea.vmem %s0, %s134
      $region28: #{conv_block_forward.3} parent=23 // pred_fallthru
        _
    $region24: #{conv_block_forward.3} parent=5 // pred_fallthru
      _
    %p136 = scmp.le.s32.totalorder 1, %s9
    %p137 = scmp.lt.s32.totalorder %s9, 3
    %p138 = pnand %p136, %p137
    %p139 = pneg %p138
    // Predicated region
    $region29: #{conv_block_forward.3} parent=5 // pred_check
      _
    $region30: #{conv_block_forward.3} parent=5 // pred_check_branch
      %141 = sbr.rel (%p138) target = $region32
    $region31: #{conv_block_forward.3} parent=5 // pred_region
      %s142 = ssub.s32 %s9, 1
      %p143 = scmp.lt.s32.totalorder %s14, 1
      %s144 = scalar_select %p143, %s14, 1
      %s145 = smul.addr %s144, 54
      %s146 = smul.addr %s145, 8
      %s147 = scalar_lea.vmem %s0, %s146
      %p148 = pneg %p35
      %p149 = pneg %p32
      %p150 = pneg %p56
      %p151 = pneg %p53
      %p152 = pneg %p77
      %p153 = pneg %p74
      %p154 = pneg %p103
      %p155 = pneg %p100
      %s156 = smul.u32 32, %s14
      %p157 = scmp.lt.s32.totalorder %s156, 63
      %s158 = scalar_select %p157, %s156, 63
      %s159 = smul.addr %s158, 8
      %s160 = scalar_lea.vmem %s3, %s159
      %p161 = scmp.lt.s32.totalorder %s14, 1
      %s162 = scalar_select %p161, %s14, 1
      %s163 = smul.addr %s162, 54
      %s164 = smul.addr %s163, 8
      %s165 = scalar_lea.vmem %s0, %s164
      %s166 = smul.u32 32, %s14
      %p167 = scmp.lt.s32.totalorder %s166, 63
      %s168 = scalar_select %p167, %s166, 63
      %s169 = smul.addr %s168, 8
      %s170 = scalar_lea.vmem %s3, %s169
      %s171 = smul.u32 32, %s14
      %v172 = vld [vmem:[%s165] sm:$0xff]
      %v173 = vld [vmem:[%s165 + $0x8] sm:$0xff]
      %v174 = vld [vmem:[%s165 + $0x10] sm:$0x3]
      %v175 = vld [vmem:[%s165 + $0x18] sm:$0xff]
      %v176 = vld [vmem:[%s165 + $0x20] sm:$0xff]
      %v177 = vld [vmem:[%s165 + $0x28] sm:$0x3]
      %v178 = vld [vmem:[%s165 + $0x30] sm:$0xff]
      %v179 = vld [vmem:[%s165 + $0x38] sm:$0xff]
      %v180 = vld [vmem:[%s165 + $0x40] sm:$0x3]
      %v181 = vld [vmem:[%s165 + $0x48] sm:$0xff]
      %v182 = vld [vmem:[%s165 + $0x50] sm:$0xff]
      %v183 = vld [vmem:[%s165 + $0x58] sm:$0x3]
      %v184 = vld [vmem:[%s165 + $0x60] sm:$0xff]
      %v185 = vld [vmem:[%s165 + $0x68] sm:$0xff]
      %v186 = vld [vmem:[%s165 + $0x70] sm:$0x3]
      %v187 = vld [vmem:[%s165 + $0x78] sm:$0xff]
      %v188 = vld [vmem:[%s165 + $0x80] sm:$0xff]
      %v189 = vld [vmem:[%s165 + $0x88] sm:$0x3]
      %v190 = vld [vmem:[%s165 + $0x90] sm:$0xff]
      %v191 = vld [vmem:[%s165 + $0x98] sm:$0xff]
      %v192 = vld [vmem:[%s165 + $0xa0] sm:$0x3]
      %v193 = vld [vmem:[%s165 + $0xa8] sm:$0xff]
      %v194 = vld [vmem:[%s165 + $0xb0] sm:$0xff]
      %v195 = vld [vmem:[%s165 + $0xb8] sm:$0x3]
      %v196 = vld [vmem:[%s165 + $0xc0] sm:$0xff]
      %v197 = vld [vmem:[%s165 + $0xc8] sm:$0xff]
      %v198 = vld [vmem:[%s165 + $0xd0] sm:$0x3]
      %v199 = vld [vmem:[%s165 + $0xd8] sm:$0xff]
      %v200 = vld [vmem:[%s165 + $0xe0] sm:$0xff]
      %v201 = vld [vmem:[%s165 + $0xe8] sm:$0x3]
      %v202 = vld [vmem:[%s165 + $0xf0] sm:$0xff]
      %v203 = vld [vmem:[%s165 + $0xf8] sm:$0xff]
      %v204 = vld [vmem:[%s165 + $0x100] sm:$0x3]
      %v205 = vld [vmem:[%s165 + $0x108] sm:$0xff]
      %v206 = vld [vmem:[%s165 + $0x110] sm:$0xff]
      %v207 = vld [vmem:[%s165 + $0x118] sm:$0x3]
      %v208 = vld [vmem:[%s165 + $0x120] sm:$0xff]
      %v209 = vld [vmem:[%s165 + $0x128] sm:$0xff]
      %v210 = vld [vmem:[%s165 + $0x130] sm:$0x3]
      %v211 = vld [vmem:[%s165 + $0x138] sm:$0xff]
      %v212 = vld [vmem:[%s165 + $0x140] sm:$0xff]
      %v213 = vld [vmem:[%s165 + $0x148] sm:$0x3]
      %v214 = vld [vmem:[%s165 + $0x150] sm:$0xff]
      %v215 = vld [vmem:[%s165 + $0x158] sm:$0xff]
      %v216 = vld [vmem:[%s165 + $0x160] sm:$0x3]
      %v217 = vld [vmem:[%s165 + $0x168] sm:$0xff]
      %v218 = vld [vmem:[%s165 + $0x170] sm:$0xff]
      %v219 = vld [vmem:[%s165 + $0x178] sm:$0x3]
      %v220 = vld [vmem:[%s165 + $0x180] sm:$0xff]
      %v221 = vld [vmem:[%s165 + $0x188] sm:$0xff]
      %v222 = vld [vmem:[%s165 + $0x190] sm:$0x3]
      %v223 = vld [vmem:[%s165 + $0x198] sm:$0xff]
      %v224 = vld [vmem:[%s165 + $0x1a0] sm:$0xff]
      %v225 = vld [vmem:[%s165 + $0x1a8] sm:$0x3]
      %v226 = vld [vmem:[%s1] sm:$0xf]
      %vm275 = vcmask 1046528
      %v276 = vrot.slane %v172, 1
      %v277 = vrot.slane %v173, 1
      %v278 = vsel %vm275, %v276, %v277
      %v279 = vrot.slane %v174, 1
      %v280 = vsel %vm275, %v277, %v279
      %v281 = vrot.slane %v175, 1
      %v282 = vrot.slane %v176, 1
      %v283 = vsel %vm275, %v281, %v282
      %v284 = vrot.slane %v177, 1
      %v285 = vsel %vm275, %v282, %v284
      %v286 = vrot.slane %v178, 1
      %v287 = vrot.slane %v179, 1
      %v288 = vsel %vm275, %v286, %v287
      %v289 = vrot.slane %v180, 1
      %v290 = vsel %vm275, %v287, %v289
      %v291 = vrot.slane %v181, 1
      %v292 = vrot.slane %v182, 1
      %v293 = vsel %vm275, %v291, %v292
      %v294 = vrot.slane %v183, 1
      %v295 = vsel %vm275, %v292, %v294
      %v296 = vrot.slane %v184, 1
      %v297 = vrot.slane %v185, 1
      %v298 = vsel %vm275, %v296, %v297
      %v299 = vrot.slane %v186, 1
      %v300 = vsel %vm275, %v297, %v299
      %v301 = vrot.slane %v187, 1
      %v302 = vrot.slane %v188, 1
      %v303 = vsel %vm275, %v301, %v302
      %v304 = vrot.slane %v189, 1
      %v305 = vsel %vm275, %v302, %v304
      %v306 = vrot.slane %v190, 1
      %v307 = vrot.slane %v191, 1
      %v308 = vsel %vm275, %v306, %v307
      %v309 = vrot.slane %v192, 1
      %v310 = vsel %vm275, %v307, %v309
      %v311 = vrot.slane %v193, 1
      %v312 = vrot.slane %v194, 1
      %v313 = vsel %vm275, %v311, %v312
      %v314 = vrot.slane %v195, 1
      %v315 = vsel %vm275, %v312, %v314
      %v316 = vrot.slane %v196, 1
      %v317 = vrot.slane %v197, 1
      %v318 = vsel %vm275, %v316, %v317
      %v319 = vrot.slane %v198, 1
      %v320 = vsel %vm275, %v317, %v319
      %v321 = vrot.slane %v199, 1
      %v322 = vrot.slane %v200, 1
      %v323 = vsel %vm275, %v321, %v322
      %v324 = vrot.slane %v201, 1
      %v325 = vsel %vm275, %v322, %v324
      %v326 = vrot.slane %v202, 1
      %v327 = vrot.slane %v203, 1
      %v328 = vsel %vm275, %v326, %v327
      %v329 = vrot.slane %v204, 1
      %v330 = vsel %vm275, %v327, %v329
      %v331 = vrot.slane %v205, 1
      %v332 = vrot.slane %v206, 1
      %v333 = vsel %vm275, %v331, %v332
      %v334 = vrot.slane %v207, 1
      %v335 = vsel %vm275, %v332, %v334
      %v336 = vrot.slane %v208, 1
      %v337 = vrot.slane %v209, 1
      %v338 = vsel %vm275, %v336, %v337
      %v339 = vrot.slane %v210, 1
      %v340 = vsel %vm275, %v337, %v339
      %v341 = vrot.slane %v211, 1
      %v342 = vrot.slane %v212, 1
      %v343 = vsel %vm275, %v341, %v342
      %v344 = vrot.slane %v213, 1
      %v345 = vsel %vm275, %v342, %v344
      %v346 = vrot.slane %v214, 1
      %v347 = vrot.slane %v215, 1
      %v348 = vsel %vm275, %v346, %v347
      %v349 = vrot.slane %v216, 1
      %v350 = vsel %vm275, %v347, %v349
      %v351 = vrot.slane %v217, 1
      %v352 = vrot.slane %v218, 1
      %v353 = vsel %vm275, %v351, %v352
      %v354 = vrot.slane %v219, 1
      %v355 = vsel %vm275, %v352, %v354
      %s356 = scalar_lea.vmem %s1, 4
      %v357 = vld [vmem:[%s356] sm:$0xf]
      %vm358 = vcmask 31744
      %v359 = vsel %vm358, %v278, 0
      %v361 = vsel %vm358, %v280, 0
      %v363 = vsel %vm358, %v283, 0
      %v365 = vsel %vm358, %v285, 0
      %v367 = vsel %vm358, %v288, 0
      %v369 = vsel %vm358, %v290, 0
      %v371 = vsel %vm358, %v293, 0
      %v373 = vsel %vm358, %v295, 0
      %v375 = vsel %vm358, %v298, 0
      %v377 = vsel %vm358, %v300, 0
      %v379 = vsel %vm358, %v303, 0
      %v381 = vsel %vm358, %v305, 0
      %v383 = vsel %vm358, %v308, 0
      %v385 = vsel %vm358, %v310, 0
      %v387 = vsel %vm358, %v313, 0
      %v389 = vsel %vm358, %v315, 0
      %v391 = vsel %vm358, %v318, 0
      %v393 = vsel %vm358, %v320, 0
      %v395 = vsel %vm358, %v323, 0
      %v397 = vsel %vm358, %v325, 0
      %v399 = vsel %vm358, %v328, 0
      %v401 = vsel %vm358, %v330, 0
      %v403 = vsel %vm358, %v333, 0
      %v405 = vsel %vm358, %v335, 0
      %v407 = vsel %vm358, %v338, 0
      %v409 = vsel %vm358, %v340, 0
      %v411 = vsel %vm358, %v343, 0
      %v413 = vsel %vm358, %v345, 0
      %v415 = vsel %vm358, %v348, 0
      %v417 = vsel %vm358, %v350, 0
      %v419 = vsel %vm358, %v353, 0
      %v421 = vsel %vm358, %v355, 0
      %vm423 = vcmask 1043456
      %v425 = vsel %vm423, %v357, 0
      %427 = vmatpush.msra.mxu0 0.0
      %428 = vmatpush.msra.mxu0 0.0
      %429 = vmatpush.msra.mxu0 0.0
      %430 = vmatpush.msra.mxu0 0.0
      %431 = vmatpush.msra.mxu0 0.0
      %432 = vmatpush.msra.mxu0 0.0
      %433 = vmatpush.msra.mxu0 0.0
      %434 = vmatpush.msra.mxu0 0.0
      %435 = vmatpush.msra.mxu0 0.0
      %436 = vmatpush.msra.mxu0 0.0
      %437 = vmatpush.msra.mxu0 0.0
      %438 = vmatpush.msra.mxu0 0.0
      %439 = vmatpush.msra.mxu0 0.0
      %440 = vmatpush.msra.mxu0 0.0
      %441 = vmatpush.msra.mxu0 0.0
      %442 = vmatpush.msra.mxu0 %v425
      %443 = vmatmul.f32.gmra.mxu0 %v359
      %v444 = vpop.f32.mrf.mxu0
      %v445 = vadd.f32 0.0, %v444
      %446 = vmatmul.f32.gmra.mxu0 %v361
      %v447 = vpop.f32.mrf.mxu0
      %v448 = vadd.f32 0.0, %v447
      %449 = vmatmul.f32.gmra.mxu0 %v363
      %v450 = vpop.f32.mrf.mxu0
      %v451 = vadd.f32 0.0, %v450
      %452 = vmatmul.f32.gmra.mxu0 %v365
      %v453 = vpop.f32.mrf.mxu0
      %v454 = vadd.f32 0.0, %v453
      %455 = vmatmul.f32.gmra.mxu0 %v367
      %v456 = vpop.f32.mrf.mxu0
      %v457 = vadd.f32 0.0, %v456
      %458 = vmatmul.f32.gmra.mxu0 %v369
      %v459 = vpop.f32.mrf.mxu0
      %v460 = vadd.f32 0.0, %v459
      %461 = vmatmul.f32.gmra.mxu0 %v371
      %v462 = vpop.f32.mrf.mxu0
      %v463 = vadd.f32 0.0, %v462
      %464 = vmatmul.f32.gmra.mxu0 %v373
      %v465 = vpop.f32.mrf.mxu0
      %v466 = vadd.f32 0.0, %v465
      %467 = vmatmul.f32.gmra.mxu0 %v375
      %v468 = vpop.f32.mrf.mxu0
      %v469 = vadd.f32 0.0, %v468
      %470 = vmatmul.f32.gmra.mxu0 %v377
      %v471 = vpop.f32.mrf.mxu0
      %v472 = vadd.f32 0.0, %v471
      %473 = vmatmul.f32.gmra.mxu0 %v379
      %v474 = vpop.f32.mrf.mxu0
      %v475 = vadd.f32 0.0, %v474
      %476 = vmatmul.f32.gmra.mxu0 %v381
      %v477 = vpop.f32.mrf.mxu0
      %v478 = vadd.f32 0.0, %v477
      %479 = vmatmul.f32.gmra.mxu0 %v383
      %v480 = vpop.f32.mrf.mxu0
      %v481 = vadd.f32 0.0, %v480
      %482 = vmatmul.f32.gmra.mxu0 %v385
      %v483 = vpop.f32.mrf.mxu0
      %v484 = vadd.f32 0.0, %v483
      %485 = vmatmul.f32.gmra.mxu0 %v387
      %v486 = vpop.f32.mrf.mxu0
      %v487 = vadd.f32 0.0, %v486
      %488 = vmatmul.f32.gmra.mxu0 %v389
      %v489 = vpop.f32.mrf.mxu0
      %v490 = vadd.f32 0.0, %v489
      %491 = vmatmul.f32.gmra.mxu0 %v391
      %v492 = vpop.f32.mrf.mxu0
      %v493 = vadd.f32 0.0, %v492
      %494 = vmatmul.f32.gmra.mxu0 %v393
      %v495 = vpop.f32.mrf.mxu0
      %v496 = vadd.f32 0.0, %v495
      %497 = vmatmul.f32.gmra.mxu0 %v395
      %v498 = vpop.f32.mrf.mxu0
      %v499 = vadd.f32 0.0, %v498
      %500 = vmatmul.f32.gmra.mxu0 %v397
      %v501 = vpop.f32.mrf.mxu0
      %v502 = vadd.f32 0.0, %v501
      %503 = vmatmul.f32.gmra.mxu0 %v399
      %v504 = vpop.f32.mrf.mxu0
      %v505 = vadd.f32 0.0, %v504
      %506 = vmatmul.f32.gmra.mxu0 %v401
      %v507 = vpop.f32.mrf.mxu0
      %v508 = vadd.f32 0.0, %v507
      %509 = vmatmul.f32.gmra.mxu0 %v403
      %v510 = vpop.f32.mrf.mxu0
      %v511 = vadd.f32 0.0, %v510
      %512 = vmatmul.f32.gmra.mxu0 %v405
      %v513 = vpop.f32.mrf.mxu0
      %v514 = vadd.f32 0.0, %v513
      %515 = vmatmul.f32.gmra.mxu0 %v407
      %v516 = vpop.f32.mrf.mxu0
      %v517 = vadd.f32 0.0, %v516
      %518 = vmatmul.f32.gmra.mxu0 %v409
      %v519 = vpop.f32.mrf.mxu0
      %v520 = vadd.f32 0.0, %v519
      %521 = vmatmul.f32.gmra.mxu0 %v411
      %v522 = vpop.f32.mrf.mxu0
      %v523 = vadd.f32 0.0, %v522
      %524 = vmatmul.f32.gmra.mxu0 %v413
      %v525 = vpop.f32.mrf.mxu0
      %v526 = vadd.f32 0.0, %v525
      %527 = vmatmul.f32.gmra.mxu0 %v415
      %v528 = vpop.f32.mrf.mxu0
      %v529 = vadd.f32 0.0, %v528
      %530 = vmatmul.f32.gmra.mxu0 %v417
      %v531 = vpop.f32.mrf.mxu0
      %v532 = vadd.f32 0.0, %v531
      %533 = vmatmul.f32.gmra.mxu0 %v419
      %v534 = vpop.f32.mrf.mxu0
      %v535 = vadd.f32 0.0, %v534
      %536 = vmatmul.f32.gmra.mxu0 %v421
      %v537 = vpop.f32.mrf.mxu0
      %v538 = vadd.f32 0.0, %v537
      %539 = vdwg.mxu0
      %v540 = vsel %vm358, %v172, 0
      %v542 = vsel %vm358, %v173, 0
      %v544 = vsel %vm358, %v175, 0
      %v546 = vsel %vm358, %v176, 0
      %v548 = vsel %vm358, %v178, 0
      %v550 = vsel %vm358, %v179, 0
      %v552 = vsel %vm358, %v181, 0
      %v554 = vsel %vm358, %v182, 0
      %v556 = vsel %vm358, %v184, 0
      %v558 = vsel %vm358, %v185, 0
      %v560 = vsel %vm358, %v187, 0
      %v562 = vsel %vm358, %v188, 0
      %v564 = vsel %vm358, %v190, 0
      %v566 = vsel %vm358, %v191, 0
      %v568 = vsel %vm358, %v193, 0
      %v570 = vsel %vm358, %v194, 0
      %v572 = vsel %vm358, %v196, 0
      %v574 = vsel %vm358, %v197, 0
      %v576 = vsel %vm358, %v199, 0
      %v578 = vsel %vm358, %v200, 0
      %v580 = vsel %vm358, %v202, 0
      %v582 = vsel %vm358, %v203, 0
      %v584 = vsel %vm358, %v205, 0
      %v586 = vsel %vm358, %v206, 0
      %v588 = vsel %vm358, %v208, 0
      %v590 = vsel %vm358, %v209, 0
      %v592 = vsel %vm358, %v211, 0
      %v594 = vsel %vm358, %v212, 0
      %v596 = vsel %vm358, %v214, 0
      %v598 = vsel %vm358, %v215, 0
      %v600 = vsel %vm358, %v217, 0
      %v602 = vsel %vm358, %v218, 0
      %v605 = vsel %vm423, %v226, 0
      %607 = vmatpush.msra.mxu0 0.0
      %608 = vmatpush.msra.mxu0 0.0
      %609 = vmatpush.msra.mxu0 0.0
      %610 = vmatpush.msra.mxu0 0.0
      %611 = vmatpush.msra.mxu0 0.0
      %612 = vmatpush.msra.mxu0 0.0
      %613 = vmatpush.msra.mxu0 0.0
      %614 = vmatpush.msra.mxu0 0.0
      %615 = vmatpush.msra.mxu0 0.0
      %616 = vmatpush.msra.mxu0 0.0
      %617 = vmatpush.msra.mxu0 0.0
      %618 = vmatpush.msra.mxu0 0.0
      %619 = vmatpush.msra.mxu0 0.0
      %620 = vmatpush.msra.mxu0 0.0
      %621 = vmatpush.msra.mxu0 0.0
      %622 = vmatpush.msra.mxu0 %v605
      %623 = vmatmul.f32.gmra.mxu0 %v540
      %v624 = vpop.f32.mrf.mxu0
      %v625 = vadd.f32 %v445, %v624
      %626 = vmatmul.f32.gmra.mxu0 %v542
      %v627 = vpop.f32.mrf.mxu0
      %v628 = vadd.f32 %v448, %v627
      %629 = vmatmul.f32.gmra.mxu0 %v544
      %v630 = vpop.f32.mrf.mxu0
      %v631 = vadd.f32 %v451, %v630
      %632 = vmatmul.f32.gmra.mxu0 %v546
      %v633 = vpop.f32.mrf.mxu0
      %v634 = vadd.f32 %v454, %v633
      %635 = vmatmul.f32.gmra.mxu0 %v548
      %v636 = vpop.f32.mrf.mxu0
      %v637 = vadd.f32 %v457, %v636
      %638 = vmatmul.f32.gmra.mxu0 %v550
      %v639 = vpop.f32.mrf.mxu0
      %v640 = vadd.f32 %v460, %v639
      %641 = vmatmul.f32.gmra.mxu0 %v552
      %v642 = vpop.f32.mrf.mxu0
      %v643 = vadd.f32 %v463, %v642
      %644 = vmatmul.f32.gmra.mxu0 %v554
      %v645 = vpop.f32.mrf.mxu0
      %v646 = vadd.f32 %v466, %v645
      %647 = vmatmul.f32.gmra.mxu0 %v556
      %v648 = vpop.f32.mrf.mxu0
      %v649 = vadd.f32 %v469, %v648
      %650 = vmatmul.f32.gmra.mxu0 %v558
      %v651 = vpop.f32.mrf.mxu0
      %v652 = vadd.f32 %v472, %v651
      %653 = vmatmul.f32.gmra.mxu0 %v560
      %v654 = vpop.f32.mrf.mxu0
      %v655 = vadd.f32 %v475, %v654
      %656 = vmatmul.f32.gmra.mxu0 %v562
      %v657 = vpop.f32.mrf.mxu0
      %v658 = vadd.f32 %v478, %v657
      %659 = vmatmul.f32.gmra.mxu0 %v564
      %v660 = vpop.f32.mrf.mxu0
      %v661 = vadd.f32 %v481, %v660
      %662 = vmatmul.f32.gmra.mxu0 %v566
      %v663 = vpop.f32.mrf.mxu0
      %v664 = vadd.f32 %v484, %v663
      %665 = vmatmul.f32.gmra.mxu0 %v568
      %v666 = vpop.f32.mrf.mxu0
      %v667 = vadd.f32 %v487, %v666
      %668 = vmatmul.f32.gmra.mxu0 %v570
      %v669 = vpop.f32.mrf.mxu0
      %v670 = vadd.f32 %v490, %v669
      %671 = vmatmul.f32.gmra.mxu0 %v572
      %v672 = vpop.f32.mrf.mxu0
      %v673 = vadd.f32 %v493, %v672
      %674 = vmatmul.f32.gmra.mxu0 %v574
      %v675 = vpop.f32.mrf.mxu0
      %v676 = vadd.f32 %v496, %v675
      %677 = vmatmul.f32.gmra.mxu0 %v576
      %v678 = vpop.f32.mrf.mxu0
      %v679 = vadd.f32 %v499, %v678
      %680 = vmatmul.f32.gmra.mxu0 %v578
      %v681 = vpop.f32.mrf.mxu0
      %v682 = vadd.f32 %v502, %v681
      %683 = vmatmul.f32.gmra.mxu0 %v580
      %v684 = vpop.f32.mrf.mxu0
      %v685 = vadd.f32 %v505, %v684
      %686 = vmatmul.f32.gmra.mxu0 %v582
      %v687 = vpop.f32.mrf.mxu0
      %v688 = vadd.f32 %v508, %v687
      %689 = vmatmul.f32.gmra.mxu0 %v584
      %v690 = vpop.f32.mrf.mxu0
      %v691 = vadd.f32 %v511, %v690
      %692 = vmatmul.f32.gmra.mxu0 %v586
      %v693 = vpop.f32.mrf.mxu0
      %v694 = vadd.f32 %v514, %v693
      %695 = vmatmul.f32.gmra.mxu0 %v588
      %v696 = vpop.f32.mrf.mxu0
      %v697 = vadd.f32 %v517, %v696
      %698 = vmatmul.f32.gmra.mxu0 %v590
      %v699 = vpop.f32.mrf.mxu0
      %v700 = vadd.f32 %v520, %v699
      %701 = vmatmul.f32.gmra.mxu0 %v592
      %v702 = vpop.f32.mrf.mxu0
      %v703 = vadd.f32 %v523, %v702
      %704 = vmatmul.f32.gmra.mxu0 %v594
      %v705 = vpop.f32.mrf.mxu0
      %v706 = vadd.f32 %v526, %v705
      %707 = vmatmul.f32.gmra.mxu0 %v596
      %v708 = vpop.f32.mrf.mxu0
      %v709 = vadd.f32 %v529, %v708
      %710 = vmatmul.f32.gmra.mxu0 %v598
      %v711 = vpop.f32.mrf.mxu0
      %v712 = vadd.f32 %v532, %v711
      %713 = vmatmul.f32.gmra.mxu0 %v600
      %v714 = vpop.f32.mrf.mxu0
      %v715 = vadd.f32 %v535, %v714
      %716 = vmatmul.f32.gmra.mxu0 %v602
      %v717 = vpop.f32.mrf.mxu0
      %v718 = vadd.f32 %v538, %v717
      %719 = vdwg.mxu0
      %vm720 = vcmask 1045504
      %v721 = vrot.slane %v172, 2
      %v722 = vrot.slane %v173, 2
      %v723 = vsel %vm720, %v721, %v722
      %v724 = vrot.slane %v174, 2
      %v725 = vsel %vm720, %v722, %v724
      %v726 = vrot.slane %v175, 2
      %v727 = vrot.slane %v176, 2
      %v728 = vsel %vm720, %v726, %v727
      %v729 = vrot.slane %v177, 2
      %v730 = vsel %vm720, %v727, %v729
      %v731 = vrot.slane %v178, 2
      %v732 = vrot.slane %v179, 2
      %v733 = vsel %vm720, %v731, %v732
      %v734 = vrot.slane %v180, 2
      %v735 = vsel %vm720, %v732, %v734
      %v736 = vrot.slane %v181, 2
      %v737 = vrot.slane %v182, 2
      %v738 = vsel %vm720, %v736, %v737
      %v739 = vrot.slane %v183, 2
      %v740 = vsel %vm720, %v737, %v739
      %v741 = vrot.slane %v184, 2
      %v742 = vrot.slane %v185, 2
      %v743 = vsel %vm720, %v741, %v742
      %v744 = vrot.slane %v186, 2
      %v745 = vsel %vm720, %v742, %v744
      %v746 = vrot.slane %v187, 2
      %v747 = vrot.slane %v188, 2
      %v748 = vsel %vm720, %v746, %v747
      %v749 = vrot.slane %v189, 2
      %v750 = vsel %vm720, %v747, %v749
      %v751 = vrot.slane %v190, 2
      %v752 = vrot.slane %v191, 2
      %v753 = vsel %vm720, %v751, %v752
      %v754 = vrot.slane %v192, 2
      %v755 = vsel %vm720, %v752, %v754
      %v756 = vrot.slane %v193, 2
      %v757 = vrot.slane %v194, 2
      %v758 = vsel %vm720, %v756, %v757
      %v759 = vrot.slane %v195, 2
      %v760 = vsel %vm720, %v757, %v759
      %v761 = vrot.slane %v196, 2
      %v762 = vrot.slane %v197, 2
      %v763 = vsel %vm720, %v761, %v762
      %v764 = vrot.slane %v198, 2
      %v765 = vsel %vm720, %v762, %v764
      %v766 = vrot.slane %v199, 2
      %v767 = vrot.slane %v200, 2
      %v768 = vsel %vm720, %v766, %v767
      %v769 = vrot.slane %v201, 2
      %v770 = vsel %vm720, %v767, %v769
      %v771 = vrot.slane %v202, 2
      %v772 = vrot.slane %v203, 2
      %v773 = vsel %vm720, %v771, %v772
      %v774 = vrot.slane %v204, 2
      %v775 = vsel %vm720, %v772, %v774
      %v776 = vrot.slane %v205, 2
      %v777 = vrot.slane %v206, 2
      %v778 = vsel %vm720, %v776, %v777
      %v779 = vrot.slane %v207, 2
      %v780 = vsel %vm720, %v777, %v779
      %v781 = vrot.slane %v208, 2
      %v782 = vrot.slane %v209, 2
      %v783 = vsel %vm720, %v781, %v782
      %v784 = vrot.slane %v210, 2
      %v785 = vsel %vm720, %v782, %v784
      %v786 = vrot.slane %v211, 2
      %v787 = vrot.slane %v212, 2
      %v788 = vsel %vm720, %v786, %v787
      %v789 = vrot.slane %v213, 2
      %v790 = vsel %vm720, %v787, %v789
      %v791 = vrot.slane %v214, 2
      %v792 = vrot.slane %v215, 2
      %v793 = vsel %vm720, %v791, %v792
      %v794 = vrot.slane %v216, 2
      %v795 = vsel %vm720, %v792, %v794
      %v796 = vrot.slane %v217, 2
      %v797 = vrot.slane %v218, 2
      %v798 = vsel %vm720, %v796, %v797
      %v799 = vrot.slane %v219, 2
      %v800 = vsel %vm720, %v797, %v799
      %s801 = scalar_lea.vmem %s1, 8
      %v802 = vld [vmem:[%s801] sm:$0xf]
      %v803 = vsel %vm358, %v723, 0
      %v805 = vsel %vm358, %v725, 0
      %v807 = vsel %vm358, %v728, 0
      %v809 = vsel %vm358, %v730, 0
      %v811 = vsel %vm358, %v733, 0
      %v813 = vsel %vm358, %v735, 0
      %v815 = vsel %vm358, %v738, 0
      %v817 = vsel %vm358, %v740, 0
      %v819 = vsel %vm358, %v743, 0
      %v821 = vsel %vm358, %v745, 0
      %v823 = vsel %vm358, %v748, 0
      %v825 = vsel %vm358, %v750, 0
      %v827 = vsel %vm358, %v753, 0
      %v829 = vsel %vm358, %v755, 0
      %v831 = vsel %vm358, %v758, 0
      %v833 = vsel %vm358, %v760, 0
      %v835 = vsel %vm358, %v763, 0
      %v837 = vsel %vm358, %v765, 0
      %v839 = vsel %vm358, %v768, 0
      %v841 = vsel %vm358, %v770, 0
      %v843 = vsel %vm358, %v773, 0
      %v845 = vsel %vm358, %v775, 0
      %v847 = vsel %vm358, %v778, 0
      %v849 = vsel %vm358, %v780, 0
      %v851 = vsel %vm358, %v783, 0
      %v853 = vsel %vm358, %v785, 0
      %v855 = vsel %vm358, %v788, 0
      %v857 = vsel %vm358, %v790, 0
      %v859 = vsel %vm358, %v793, 0
      %v861 = vsel %vm358, %v795, 0
      %v863 = vsel %vm358, %v798, 0
      %v865 = vsel %vm358, %v800, 0
      %v868 = vsel %vm423, %v802, 0
      %870 = vmatpush.msra.mxu0 0.0
      %871 = vmatpush.msra.mxu0 0.0
      %872 = vmatpush.msra.mxu0 0.0
      %873 = vmatpush.msra.mxu0 0.0
      %874 = vmatpush.msra.mxu0 0.0
      %875 = vmatpush.msra.mxu0 0.0
      %876 = vmatpush.msra.mxu0 0.0
      %877 = vmatpush.msra.mxu0 0.0
      %878 = vmatpush.msra.mxu0 0.0
      %879 = vmatpush.msra.mxu0 0.0
      %880 = vmatpush.msra.mxu0 0.0
      %881 = vmatpush.msra.mxu0 0.0
      %882 = vmatpush.msra.mxu0 0.0
      %883 = vmatpush.msra.mxu0 0.0
      %884 = vmatpush.msra.mxu0 0.0
      %885 = vmatpush.msra.mxu0 %v868
      %886 = vmatmul.f32.gmra.mxu0 %v803
      %v887 = vpop.f32.mrf.mxu0
      %v888 = vadd.f32 0.0, %v887
      %889 = vmatmul.f32.gmra.mxu0 %v805
      %v890 = vpop.f32.mrf.mxu0
      %v891 = vadd.f32 0.0, %v890
      %892 = vmatmul.f32.gmra.mxu0 %v807
      %v893 = vpop.f32.mrf.mxu0
      %v894 = vadd.f32 0.0, %v893
      %895 = vmatmul.f32.gmra.mxu0 %v809
      %v896 = vpop.f32.mrf.mxu0
      %v897 = vadd.f32 0.0, %v896
      %898 = vmatmul.f32.gmra.mxu0 %v811
      %v899 = vpop.f32.mrf.mxu0
      %v900 = vadd.f32 0.0, %v899
      %901 = vmatmul.f32.gmra.mxu0 %v813
      %v902 = vpop.f32.mrf.mxu0
      %v903 = vadd.f32 0.0, %v902
      %904 = vmatmul.f32.gmra.mxu0 %v815
      %v905 = vpop.f32.mrf.mxu0
      %v906 = vadd.f32 0.0, %v905
      %907 = vmatmul.f32.gmra.mxu0 %v817
      %v908 = vpop.f32.mrf.mxu0
      %v909 = vadd.f32 0.0, %v908
      %910 = vmatmul.f32.gmra.mxu0 %v819
      %v911 = vpop.f32.mrf.mxu0
      %v912 = vadd.f32 0.0, %v911
      %913 = vmatmul.f32.gmra.mxu0 %v821
      %v914 = vpop.f32.mrf.mxu0
      %v915 = vadd.f32 0.0, %v914
      %916 = vmatmul.f32.gmra.mxu0 %v823
      %v917 = vpop.f32.mrf.mxu0
      %v918 = vadd.f32 0.0, %v917
      %919 = vmatmul.f32.gmra.mxu0 %v825
      %v920 = vpop.f32.mrf.mxu0
      %v921 = vadd.f32 0.0, %v920
      %922 = vmatmul.f32.gmra.mxu0 %v827
      %v923 = vpop.f32.mrf.mxu0
      %v924 = vadd.f32 0.0, %v923
      %925 = vmatmul.f32.gmra.mxu0 %v829
      %v926 = vpop.f32.mrf.mxu0
      %v927 = vadd.f32 0.0, %v926
      %928 = vmatmul.f32.gmra.mxu0 %v831
      %v929 = vpop.f32.mrf.mxu0
      %v930 = vadd.f32 0.0, %v929
      %931 = vmatmul.f32.gmra.mxu0 %v833
      %v932 = vpop.f32.mrf.mxu0
      %v933 = vadd.f32 0.0, %v932
      %934 = vmatmul.f32.gmra.mxu0 %v835
      %v935 = vpop.f32.mrf.mxu0
      %v936 = vadd.f32 0.0, %v935
      %937 = vmatmul.f32.gmra.mxu0 %v837
      %v938 = vpop.f32.mrf.mxu0
      %v939 = vadd.f32 0.0, %v938
      %940 = vmatmul.f32.gmra.mxu0 %v839
      %v941 = vpop.f32.mrf.mxu0
      %v942 = vadd.f32 0.0, %v941
      %943 = vmatmul.f32.gmra.mxu0 %v841
      %v944 = vpop.f32.mrf.mxu0
      %v945 = vadd.f32 0.0, %v944
      %946 = vmatmul.f32.gmra.mxu0 %v843
      %v947 = vpop.f32.mrf.mxu0
      %v948 = vadd.f32 0.0, %v947
      %949 = vmatmul.f32.gmra.mxu0 %v845
      %v950 = vpop.f32.mrf.mxu0
      %v951 = vadd.f32 0.0, %v950
      %952 = vmatmul.f32.gmra.mxu0 %v847
      %v953 = vpop.f32.mrf.mxu0
      %v954 = vadd.f32 0.0, %v953
      %955 = vmatmul.f32.gmra.mxu0 %v849
      %v956 = vpop.f32.mrf.mxu0
      %v957 = vadd.f32 0.0, %v956
      %958 = vmatmul.f32.gmra.mxu0 %v851
      %v959 = vpop.f32.mrf.mxu0
      %v960 = vadd.f32 0.0, %v959
      %961 = vmatmul.f32.gmra.mxu0 %v853
      %v962 = vpop.f32.mrf.mxu0
      %v963 = vadd.f32 0.0, %v962
      %964 = vmatmul.f32.gmra.mxu0 %v855
      %v965 = vpop.f32.mrf.mxu0
      %v966 = vadd.f32 0.0, %v965
      %967 = vmatmul.f32.gmra.mxu0 %v857
      %v968 = vpop.f32.mrf.mxu0
      %v969 = vadd.f32 0.0, %v968
      %970 = vmatmul.f32.gmra.mxu0 %v859
      %v971 = vpop.f32.mrf.mxu0
      %v972 = vadd.f32 0.0, %v971
      %973 = vmatmul.f32.gmra.mxu0 %v861
      %v974 = vpop.f32.mrf.mxu0
      %v975 = vadd.f32 0.0, %v974
      %976 = vmatmul.f32.gmra.mxu0 %v863
      %v977 = vpop.f32.mrf.mxu0
      %v978 = vadd.f32 0.0, %v977
      %979 = vmatmul.f32.gmra.mxu0 %v865
      %v980 = vpop.f32.mrf.mxu0
      %v981 = vadd.f32 0.0, %v980
      %982 = vdwg.mxu0
      %v983 = vadd.f32 %v625, %v888
      %v984 = vadd.f32 %v628, %v891
      %v985 = vadd.f32 %v631, %v894
      %v986 = vadd.f32 %v634, %v897
      %v987 = vadd.f32 %v637, %v900
      %v988 = vadd.f32 %v640, %v903
      %v989 = vadd.f32 %v643, %v906
      %v990 = vadd.f32 %v646, %v909
      %v991 = vadd.f32 %v649, %v912
      %v992 = vadd.f32 %v652, %v915
      %v993 = vadd.f32 %v655, %v918
      %v994 = vadd.f32 %v658, %v921
      %v995 = vadd.f32 %v661, %v924
      %v996 = vadd.f32 %v664, %v927
      %v997 = vadd.f32 %v667, %v930
      %v998 = vadd.f32 %v670, %v933
      %v999 = vadd.f32 %v673, %v936
      %v1000 = vadd.f32 %v676, %v939
      %v1001 = vadd.f32 %v679, %v942
      %v1002 = vadd.f32 %v682, %v945
      %v1003 = vadd.f32 %v685, %v948
      %v1004 = vadd.f32 %v688, %v951
      %v1005 = vadd.f32 %v691, %v954
      %v1006 = vadd.f32 %v694, %v957
      %v1007 = vadd.f32 %v697, %v960
      %v1008 = vadd.f32 %v700, %v963
      %v1009 = vadd.f32 %v703, %v966
      %v1010 = vadd.f32 %v706, %v969
      %v1011 = vadd.f32 %v709, %v972
      %v1012 = vadd.f32 %v712, %v975
      %v1013 = vadd.f32 %v715, %v978
      %v1014 = vadd.f32 %v718, %v981
      %s1015 = scalar_lea.vmem %s1, 12
      %v1016 = vld [vmem:[%s1015] sm:$0xf]
      %v1018 = vsel %vm358, %v220, 0
      %v1021 = vsel %vm358, %v221, 0
      %v1024 = vsel %vm423, %v1016, 0
      %1026 = vmatpush.msra.mxu0 0.0
      %1027 = vmatpush.msra.mxu0 0.0
      %1028 = vmatpush.msra.mxu0 0.0
      %1029 = vmatpush.msra.mxu0 0.0
      %1030 = vmatpush.msra.mxu0 0.0
      %1031 = vmatpush.msra.mxu0 0.0
      %1032 = vmatpush.msra.mxu0 0.0
      %1033 = vmatpush.msra.mxu0 0.0
      %1034 = vmatpush.msra.mxu0 0.0
      %1035 = vmatpush.msra.mxu0 0.0
      %1036 = vmatpush.msra.mxu0 0.0
      %1037 = vmatpush.msra.mxu0 0.0
      %1038 = vmatpush.msra.mxu0 0.0
      %1039 = vmatpush.msra.mxu0 0.0
      %1040 = vmatpush.msra.mxu0 0.0
      %1041 = vmatpush.msra.mxu0 %v1024
      %1042 = vmatmul.f32.gmra.mxu0 %v544
      %v1043 = vpop.f32.mrf.mxu0
      %v1044 = vadd.f32 0.0, %v1043
      %1045 = vmatmul.f32.gmra.mxu0 %v546
      %v1046 = vpop.f32.mrf.mxu0
      %v1047 = vadd.f32 0.0, %v1046
      %1048 = vmatmul.f32.gmra.mxu0 %v548
      %v1049 = vpop.f32.mrf.mxu0
      %v1050 = vadd.f32 0.0, %v1049
      %1051 = vmatmul.f32.gmra.mxu0 %v550
      %v1052 = vpop.f32.mrf.mxu0
      %v1053 = vadd.f32 0.0, %v1052
      %1054 = vmatmul.f32.gmra.mxu0 %v552
      %v1055 = vpop.f32.mrf.mxu0
      %v1056 = vadd.f32 0.0, %v1055
      %1057 = vmatmul.f32.gmra.mxu0 %v554
      %v1058 = vpop.f32.mrf.mxu0
      %v1059 = vadd.f32 0.0, %v1058
      %1060 = vmatmul.f32.gmra.mxu0 %v556
      %v1061 = vpop.f32.mrf.mxu0
      %v1062 = vadd.f32 0.0, %v1061
      %1063 = vmatmul.f32.gmra.mxu0 %v558
      %v1064 = vpop.f32.mrf.mxu0
      %v1065 = vadd.f32 0.0, %v1064
      %1066 = vmatmul.f32.gmra.mxu0 %v560
      %v1067 = vpop.f32.mrf.mxu0
      %v1068 = vadd.f32 0.0, %v1067
      %1069 = vmatmul.f32.gmra.mxu0 %v562
      %v1070 = vpop.f32.mrf.mxu0
      %v1071 = vadd.f32 0.0, %v1070
      %1072 = vmatmul.f32.gmra.mxu0 %v564
      %v1073 = vpop.f32.mrf.mxu0
      %v1074 = vadd.f32 0.0, %v1073
      %1075 = vmatmul.f32.gmra.mxu0 %v566
      %v1076 = vpop.f32.mrf.mxu0
      %v1077 = vadd.f32 0.0, %v1076
      %1078 = vmatmul.f32.gmra.mxu0 %v568
      %v1079 = vpop.f32.mrf.mxu0
      %v1080 = vadd.f32 0.0, %v1079
      %1081 = vmatmul.f32.gmra.mxu0 %v570
      %v1082 = vpop.f32.mrf.mxu0
      %v1083 = vadd.f32 0.0, %v1082
      %1084 = vmatmul.f32.gmra.mxu0 %v572
      %v1085 = vpop.f32.mrf.mxu0
      %v1086 = vadd.f32 0.0, %v1085
      %1087 = vmatmul.f32.gmra.mxu0 %v574
      %v1088 = vpop.f32.mrf.mxu0
      %v1089 = vadd.f32 0.0, %v1088
      %1090 = vmatmul.f32.gmra.mxu0 %v576
      %v1091 = vpop.f32.mrf.mxu0
      %v1092 = vadd.f32 0.0, %v1091
      %1093 = vmatmul.f32.gmra.mxu0 %v578
      %v1094 = vpop.f32.mrf.mxu0
      %v1095 = vadd.f32 0.0, %v1094
      %1096 = vmatmul.f32.gmra.mxu0 %v580
      %v1097 = vpop.f32.mrf.mxu0
      %v1098 = vadd.f32 0.0, %v1097
      %1099 = vmatmul.f32.gmra.mxu0 %v582
      %v1100 = vpop.f32.mrf.mxu0
      %v1101 = vadd.f32 0.0, %v1100
      %1102 = vmatmul.f32.gmra.mxu0 %v584
      %v1103 = vpop.f32.mrf.mxu0
      %v1104 = vadd.f32 0.0, %v1103
      %1105 = vmatmul.f32.gmra.mxu0 %v586
      %v1106 = vpop.f32.mrf.mxu0
      %v1107 = vadd.f32 0.0, %v1106
      %1108 = vmatmul.f32.gmra.mxu0 %v588
      %v1109 = vpop.f32.mrf.mxu0
      %v1110 = vadd.f32 0.0, %v1109
      %1111 = vmatmul.f32.gmra.mxu0 %v590
      %v1112 = vpop.f32.mrf.mxu0
      %v1113 = vadd.f32 0.0, %v1112
      %1114 = vmatmul.f32.gmra.mxu0 %v592
      %v1115 = vpop.f32.mrf.mxu0
      %v1116 = vadd.f32 0.0, %v1115
      %1117 = vmatmul.f32.gmra.mxu0 %v594
      %v1118 = vpop.f32.mrf.mxu0
      %v1119 = vadd.f32 0.0, %v1118
      %1120 = vmatmul.f32.gmra.mxu0 %v596
      %v1121 = vpop.f32.mrf.mxu0
      %v1122 = vadd.f32 0.0, %v1121
      %1123 = vmatmul.f32.gmra.mxu0 %v598
      %v1124 = vpop.f32.mrf.mxu0
      %v1125 = vadd.f32 0.0, %v1124
      %1126 = vmatmul.f32.gmra.mxu0 %v600
      %v1127 = vpop.f32.mrf.mxu0
      %v1128 = vadd.f32 0.0, %v1127
      %1129 = vmatmul.f32.gmra.mxu0 %v602
      %v1130 = vpop.f32.mrf.mxu0
      %v1131 = vadd.f32 0.0, %v1130
      %1132 = vmatmul.f32.gmra.mxu0 %v1018
      %v1133 = vpop.f32.mrf.mxu0
      %v1134 = vadd.f32 0.0, %v1133
      %1135 = vmatmul.f32.gmra.mxu0 %v1021
      %v1136 = vpop.f32.mrf.mxu0
      %v1137 = vadd.f32 0.0, %v1136
      %1138 = vdwg.mxu0
      %v1139 = vadd.f32 %v983, %v1044
      %v1140 = vadd.f32 %v984, %v1047
      %v1141 = vadd.f32 %v985, %v1050
      %v1142 = vadd.f32 %v986, %v1053
      %v1143 = vadd.f32 %v987, %v1056
      %v1144 = vadd.f32 %v988, %v1059
      %v1145 = vadd.f32 %v989, %v1062
      %v1146 = vadd.f32 %v990, %v1065
      %v1147 = vadd.f32 %v991, %v1068
      %v1148 = vadd.f32 %v992, %v1071
      %v1149 = vadd.f32 %v993, %v1074
      %v1150 = vadd.f32 %v994, %v1077
      %v1151 = vadd.f32 %v995, %v1080
      %v1152 = vadd.f32 %v996, %v1083
      %v1153 = vadd.f32 %v997, %v1086
      %v1154 = vadd.f32 %v998, %v1089
      %v1155 = vadd.f32 %v999, %v1092
      %v1156 = vadd.f32 %v1000, %v1095
      %v1157 = vadd.f32 %v1001, %v1098
      %v1158 = vadd.f32 %v1002, %v1101
      %v1159 = vadd.f32 %v1003, %v1104
      %v1160 = vadd.f32 %v1004, %v1107
      %v1161 = vadd.f32 %v1005, %v1110
      %v1162 = vadd.f32 %v1006, %v1113
      %v1163 = vadd.f32 %v1007, %v1116
      %v1164 = vadd.f32 %v1008, %v1119
      %v1165 = vadd.f32 %v1009, %v1122
      %v1166 = vadd.f32 %v1010, %v1125
      %v1167 = vadd.f32 %v1011, %v1128
      %v1168 = vadd.f32 %v1012, %v1131
      %v1169 = vadd.f32 %v1013, %v1134
      %v1170 = vadd.f32 %v1014, %v1137
      %v1172 = vrot.slane %v220, 1
      %v1173 = vrot.slane %v221, 1
      %v1174 = vsel %vm275, %v1172, %v1173
      %v1175 = vrot.slane %v222, 1
      %v1176 = vsel %vm275, %v1173, %v1175
      %s1177 = scalar_lea.vmem %s1, 16
      %v1178 = vld [vmem:[%s1177] sm:$0xf]
      %v1179 = vsel %vm358, %v1174, 0
      %v1181 = vsel %vm358, %v1176, 0
      %v1184 = vsel %vm423, %v1178, 0
      %1186 = vmatpush.msra.mxu0 0.0
      %1187 = vmatpush.msra.mxu0 0.0
      %1188 = vmatpush.msra.mxu0 0.0
      %1189 = vmatpush.msra.mxu0 0.0
      %1190 = vmatpush.msra.mxu0 0.0
      %1191 = vmatpush.msra.mxu0 0.0
      %1192 = vmatpush.msra.mxu0 0.0
      %1193 = vmatpush.msra.mxu0 0.0
      %1194 = vmatpush.msra.mxu0 0.0
      %1195 = vmatpush.msra.mxu0 0.0
      %1196 = vmatpush.msra.mxu0 0.0
      %1197 = vmatpush.msra.mxu0 0.0
      %1198 = vmatpush.msra.mxu0 0.0
      %1199 = vmatpush.msra.mxu0 0.0
      %1200 = vmatpush.msra.mxu0 0.0
      %1201 = vmatpush.msra.mxu0 %v1184
      %1202 = vmatmul.f32.gmra.mxu0 %v363
      %v1203 = vpop.f32.mrf.mxu0
      %v1204 = vadd.f32 0.0, %v1203
      %1205 = vmatmul.f32.gmra.mxu0 %v365
      %v1206 = vpop.f32.mrf.mxu0
      %v1207 = vadd.f32 0.0, %v1206
      %1208 = vmatmul.f32.gmra.mxu0 %v367
      %v1209 = vpop.f32.mrf.mxu0
      %v1210 = vadd.f32 0.0, %v1209
      %1211 = vmatmul.f32.gmra.mxu0 %v369
      %v1212 = vpop.f32.mrf.mxu0
      %v1213 = vadd.f32 0.0, %v1212
      %1214 = vmatmul.f32.gmra.mxu0 %v371
      %v1215 = vpop.f32.mrf.mxu0
      %v1216 = vadd.f32 0.0, %v1215
      %1217 = vmatmul.f32.gmra.mxu0 %v373
      %v1218 = vpop.f32.mrf.mxu0
      %v1219 = vadd.f32 0.0, %v1218
      %1220 = vmatmul.f32.gmra.mxu0 %v375
      %v1221 = vpop.f32.mrf.mxu0
      %v1222 = vadd.f32 0.0, %v1221
      %1223 = vmatmul.f32.gmra.mxu0 %v377
      %v1224 = vpop.f32.mrf.mxu0
      %v1225 = vadd.f32 0.0, %v1224
      %1226 = vmatmul.f32.gmra.mxu0 %v379
      %v1227 = vpop.f32.mrf.mxu0
      %v1228 = vadd.f32 0.0, %v1227
      %1229 = vmatmul.f32.gmra.mxu0 %v381
      %v1230 = vpop.f32.mrf.mxu0
      %v1231 = vadd.f32 0.0, %v1230
      %1232 = vmatmul.f32.gmra.mxu0 %v383
      %v1233 = vpop.f32.mrf.mxu0
      %v1234 = vadd.f32 0.0, %v1233
      %1235 = vmatmul.f32.gmra.mxu0 %v385
      %v1236 = vpop.f32.mrf.mxu0
      %v1237 = vadd.f32 0.0, %v1236
      %1238 = vmatmul.f32.gmra.mxu0 %v387
      %v1239 = vpop.f32.mrf.mxu0
      %v1240 = vadd.f32 0.0, %v1239
      %1241 = vmatmul.f32.gmra.mxu0 %v389
      %v1242 = vpop.f32.mrf.mxu0
      %v1243 = vadd.f32 0.0, %v1242
      %1244 = vmatmul.f32.gmra.mxu0 %v391
      %v1245 = vpop.f32.mrf.mxu0
      %v1246 = vadd.f32 0.0, %v1245
      %1247 = vmatmul.f32.gmra.mxu0 %v393
      %v1248 = vpop.f32.mrf.mxu0
      %v1249 = vadd.f32 0.0, %v1248
      %1250 = vmatmul.f32.gmra.mxu0 %v395
      %v1251 = vpop.f32.mrf.mxu0
      %v1252 = vadd.f32 0.0, %v1251
      %1253 = vmatmul.f32.gmra.mxu0 %v397
      %v1254 = vpop.f32.mrf.mxu0
      %v1255 = vadd.f32 0.0, %v1254
      %1256 = vmatmul.f32.gmra.mxu0 %v399
      %v1257 = vpop.f32.mrf.mxu0
      %v1258 = vadd.f32 0.0, %v1257
      %1259 = vmatmul.f32.gmra.mxu0 %v401
      %v1260 = vpop.f32.mrf.mxu0
      %v1261 = vadd.f32 0.0, %v1260
      %1262 = vmatmul.f32.gmra.mxu0 %v403
      %v1263 = vpop.f32.mrf.mxu0
      %v1264 = vadd.f32 0.0, %v1263
      %1265 = vmatmul.f32.gmra.mxu0 %v405
      %v1266 = vpop.f32.mrf.mxu0
      %v1267 = vadd.f32 0.0, %v1266
      %1268 = vmatmul.f32.gmra.mxu0 %v407
      %v1269 = vpop.f32.mrf.mxu0
      %v1270 = vadd.f32 0.0, %v1269
      %1271 = vmatmul.f32.gmra.mxu0 %v409
      %v1272 = vpop.f32.mrf.mxu0
      %v1273 = vadd.f32 0.0, %v1272
      %1274 = vmatmul.f32.gmra.mxu0 %v411
      %v1275 = vpop.f32.mrf.mxu0
      %v1276 = vadd.f32 0.0, %v1275
      %1277 = vmatmul.f32.gmra.mxu0 %v413
      %v1278 = vpop.f32.mrf.mxu0
      %v1279 = vadd.f32 0.0, %v1278
      %1280 = vmatmul.f32.gmra.mxu0 %v415
      %v1281 = vpop.f32.mrf.mxu0
      %v1282 = vadd.f32 0.0, %v1281
      %1283 = vmatmul.f32.gmra.mxu0 %v417
      %v1284 = vpop.f32.mrf.mxu0
      %v1285 = vadd.f32 0.0, %v1284
      %1286 = vmatmul.f32.gmra.mxu0 %v419
      %v1287 = vpop.f32.mrf.mxu0
      %v1288 = vadd.f32 0.0, %v1287
      %1289 = vmatmul.f32.gmra.mxu0 %v421
      %v1290 = vpop.f32.mrf.mxu0
      %v1291 = vadd.f32 0.0, %v1290
      %1292 = vmatmul.f32.gmra.mxu0 %v1179
      %v1293 = vpop.f32.mrf.mxu0
      %v1294 = vadd.f32 0.0, %v1293
      %1295 = vmatmul.f32.gmra.mxu0 %v1181
      %v1296 = vpop.f32.mrf.mxu0
      %v1297 = vadd.f32 0.0, %v1296
      %1298 = vdwg.mxu0
      %v1299 = vadd.f32 %v1139, %v1204
      %v1300 = vadd.f32 %v1140, %v1207
      %v1301 = vadd.f32 %v1141, %v1210
      %v1302 = vadd.f32 %v1142, %v1213
      %v1303 = vadd.f32 %v1143, %v1216
      %v1304 = vadd.f32 %v1144, %v1219
      %v1305 = vadd.f32 %v1145, %v1222
      %v1306 = vadd.f32 %v1146, %v1225
      %v1307 = vadd.f32 %v1147, %v1228
      %v1308 = vadd.f32 %v1148, %v1231
      %v1309 = vadd.f32 %v1149, %v1234
      %v1310 = vadd.f32 %v1150, %v1237
      %v1311 = vadd.f32 %v1151, %v1240
      %v1312 = vadd.f32 %v1152, %v1243
      %v1313 = vadd.f32 %v1153, %v1246
      %v1314 = vadd.f32 %v1154, %v1249
      %v1315 = vadd.f32 %v1155, %v1252
      %v1316 = vadd.f32 %v1156, %v1255
      %v1317 = vadd.f32 %v1157, %v1258
      %v1318 = vadd.f32 %v1158, %v1261
      %v1319 = vadd.f32 %v1159, %v1264
      %v1320 = vadd.f32 %v1160, %v1267
      %v1321 = vadd.f32 %v1161, %v1270
      %v1322 = vadd.f32 %v1162, %v1273
      %v1323 = vadd.f32 %v1163, %v1276
      %v1324 = vadd.f32 %v1164, %v1279
      %v1325 = vadd.f32 %v1165, %v1282
      %v1326 = vadd.f32 %v1166, %v1285
      %v1327 = vadd.f32 %v1167, %v1288
      %v1328 = vadd.f32 %v1168, %v1291
      %v1329 = vadd.f32 %v1169, %v1294
      %v1330 = vadd.f32 %v1170, %v1297
      %v1331 = vrot.slane %v220, 2
      %v1332 = vrot.slane %v221, 2
      %v1333 = vsel %vm720, %v1331, %v1332
      %v1334 = vrot.slane %v222, 2
      %v1335 = vsel %vm720, %v1332, %v1334
      %s1336 = scalar_lea.vmem %s1, 20
      %v1337 = vld [vmem:[%s1336] sm:$0xf]
      %v1338 = vsel %vm358, %v1333, 0
      %v1340 = vsel %vm358, %v1335, 0
      %v1343 = vsel %vm423, %v1337, 0
      %1345 = vmatpush.msra.mxu0 0.0
      %1346 = vmatpush.msra.mxu0 0.0
      %1347 = vmatpush.msra.mxu0 0.0
      %1348 = vmatpush.msra.mxu0 0.0
      %1349 = vmatpush.msra.mxu0 0.0
      %1350 = vmatpush.msra.mxu0 0.0
      %1351 = vmatpush.msra.mxu0 0.0
      %1352 = vmatpush.msra.mxu0 0.0
      %1353 = vmatpush.msra.mxu0 0.0
      %1354 = vmatpush.msra.mxu0 0.0
      %1355 = vmatpush.msra.mxu0 0.0
      %1356 = vmatpush.msra.mxu0 0.0
      %1357 = vmatpush.msra.mxu0 0.0
      %1358 = vmatpush.msra.mxu0 0.0
      %1359 = vmatpush.msra.mxu0 0.0
      %1360 = vmatpush.msra.mxu0 %v1343
      %1361 = vmatmul.f32.gmra.mxu0 %v807
      %v1362 = vpop.f32.mrf.mxu0
      %v1363 = vadd.f32 0.0, %v1362
      %1364 = vmatmul.f32.gmra.mxu0 %v809
      %v1365 = vpop.f32.mrf.mxu0
      %v1366 = vadd.f32 0.0, %v1365
      %1367 = vmatmul.f32.gmra.mxu0 %v811
      %v1368 = vpop.f32.mrf.mxu0
      %v1369 = vadd.f32 0.0, %v1368
      %1370 = vmatmul.f32.gmra.mxu0 %v813
      %v1371 = vpop.f32.mrf.mxu0
      %v1372 = vadd.f32 0.0, %v1371
      %1373 = vmatmul.f32.gmra.mxu0 %v815
      %v1374 = vpop.f32.mrf.mxu0
      %v1375 = vadd.f32 0.0, %v1374
      %1376 = vmatmul.f32.gmra.mxu0 %v817
      %v1377 = vpop.f32.mrf.mxu0
      %v1378 = vadd.f32 0.0, %v1377
      %1379 = vmatmul.f32.gmra.mxu0 %v819
      %v1380 = vpop.f32.mrf.mxu0
      %v1381 = vadd.f32 0.0, %v1380
      %1382 = vmatmul.f32.gmra.mxu0 %v821
      %v1383 = vpop.f32.mrf.mxu0
      %v1384 = vadd.f32 0.0, %v1383
      %1385 = vmatmul.f32.gmra.mxu0 %v823
      %v1386 = vpop.f32.mrf.mxu0
      %v1387 = vadd.f32 0.0, %v1386
      %1388 = vmatmul.f32.gmra.mxu0 %v825
      %v1389 = vpop.f32.mrf.mxu0
      %v1390 = vadd.f32 0.0, %v1389
      %1391 = vmatmul.f32.gmra.mxu0 %v827
      %v1392 = vpop.f32.mrf.mxu0
      %v1393 = vadd.f32 0.0, %v1392
      %1394 = vmatmul.f32.gmra.mxu0 %v829
      %v1395 = vpop.f32.mrf.mxu0
      %v1396 = vadd.f32 0.0, %v1395
      %1397 = vmatmul.f32.gmra.mxu0 %v831
      %v1398 = vpop.f32.mrf.mxu0
      %v1399 = vadd.f32 0.0, %v1398
      %1400 = vmatmul.f32.gmra.mxu0 %v833
      %v1401 = vpop.f32.mrf.mxu0
      %v1402 = vadd.f32 0.0, %v1401
      %1403 = vmatmul.f32.gmra.mxu0 %v835
      %v1404 = vpop.f32.mrf.mxu0
      %v1405 = vadd.f32 0.0, %v1404
      %1406 = vmatmul.f32.gmra.mxu0 %v837
      %v1407 = vpop.f32.mrf.mxu0
      %v1408 = vadd.f32 0.0, %v1407
      %1409 = vmatmul.f32.gmra.mxu0 %v839
      %v1410 = vpop.f32.mrf.mxu0
      %v1411 = vadd.f32 0.0, %v1410
      %1412 = vmatmul.f32.gmra.mxu0 %v841
      %v1413 = vpop.f32.mrf.mxu0
      %v1414 = vadd.f32 0.0, %v1413
      %1415 = vmatmul.f32.gmra.mxu0 %v843
      %v1416 = vpop.f32.mrf.mxu0
      %v1417 = vadd.f32 0.0, %v1416
      %1418 = vmatmul.f32.gmra.mxu0 %v845
      %v1419 = vpop.f32.mrf.mxu0
      %v1420 = vadd.f32 0.0, %v1419
      %1421 = vmatmul.f32.gmra.mxu0 %v847
      %v1422 = vpop.f32.mrf.mxu0
      %v1423 = vadd.f32 0.0, %v1422
      %1424 = vmatmul.f32.gmra.mxu0 %v849
      %v1425 = vpop.f32.mrf.mxu0
      %v1426 = vadd.f32 0.0, %v1425
      %1427 = vmatmul.f32.gmra.mxu0 %v851
      %v1428 = vpop.f32.mrf.mxu0
      %v1429 = vadd.f32 0.0, %v1428
      %1430 = vmatmul.f32.gmra.mxu0 %v853
      %v1431 = vpop.f32.mrf.mxu0
      %v1432 = vadd.f32 0.0, %v1431
      %1433 = vmatmul.f32.gmra.mxu0 %v855
      %v1434 = vpop.f32.mrf.mxu0
      %v1435 = vadd.f32 0.0, %v1434
      %1436 = vmatmul.f32.gmra.mxu0 %v857
      %v1437 = vpop.f32.mrf.mxu0
      %v1438 = vadd.f32 0.0, %v1437
      %1439 = vmatmul.f32.gmra.mxu0 %v859
      %v1440 = vpop.f32.mrf.mxu0
      %v1441 = vadd.f32 0.0, %v1440
      %1442 = vmatmul.f32.gmra.mxu0 %v861
      %v1443 = vpop.f32.mrf.mxu0
      %v1444 = vadd.f32 0.0, %v1443
      %1445 = vmatmul.f32.gmra.mxu0 %v863
      %v1446 = vpop.f32.mrf.mxu0
      %v1447 = vadd.f32 0.0, %v1446
      %1448 = vmatmul.f32.gmra.mxu0 %v865
      %v1449 = vpop.f32.mrf.mxu0
      %v1450 = vadd.f32 0.0, %v1449
      %1451 = vmatmul.f32.gmra.mxu0 %v1338
      %v1452 = vpop.f32.mrf.mxu0
      %v1453 = vadd.f32 0.0, %v1452
      %1454 = vmatmul.f32.gmra.mxu0 %v1340
      %v1455 = vpop.f32.mrf.mxu0
      %v1456 = vadd.f32 0.0, %v1455
      %1457 = vdwg.mxu0
      %v1458 = vadd.f32 %v1299, %v1363
      %v1459 = vadd.f32 %v1300, %v1366
      %v1460 = vadd.f32 %v1301, %v1369
      %v1461 = vadd.f32 %v1302, %v1372
      %v1462 = vadd.f32 %v1303, %v1375
      %v1463 = vadd.f32 %v1304, %v1378
      %v1464 = vadd.f32 %v1305, %v1381
      %v1465 = vadd.f32 %v1306, %v1384
      %v1466 = vadd.f32 %v1307, %v1387
      %v1467 = vadd.f32 %v1308, %v1390
      %v1468 = vadd.f32 %v1309, %v1393
      %v1469 = vadd.f32 %v1310, %v1396
      %v1470 = vadd.f32 %v1311, %v1399
      %v1471 = vadd.f32 %v1312, %v1402
      %v1472 = vadd.f32 %v1313, %v1405
      %v1473 = vadd.f32 %v1314, %v1408
      %v1474 = vadd.f32 %v1315, %v1411
      %v1475 = vadd.f32 %v1316, %v1414
      %v1476 = vadd.f32 %v1317, %v1417
      %v1477 = vadd.f32 %v1318, %v1420
      %v1478 = vadd.f32 %v1319, %v1423
      %v1479 = vadd.f32 %v1320, %v1426
      %v1480 = vadd.f32 %v1321, %v1429
      %v1481 = vadd.f32 %v1322, %v1432
      %v1482 = vadd.f32 %v1323, %v1435
      %v1483 = vadd.f32 %v1324, %v1438
      %v1484 = vadd.f32 %v1325, %v1441
      %v1485 = vadd.f32 %v1326, %v1444
      %v1486 = vadd.f32 %v1327, %v1447
      %v1487 = vadd.f32 %v1328, %v1450
      %v1488 = vadd.f32 %v1329, %v1453
      %v1489 = vadd.f32 %v1330, %v1456
      %s1490 = scalar_lea.vmem %s1, 24
      %v1491 = vld [vmem:[%s1490] sm:$0xf]
      %v1493 = vsel %vm358, %v223, 0
      %v1496 = vsel %vm358, %v224, 0
      %v1499 = vsel %vm423, %v1491, 0
      %1501 = vmatpush.msra.mxu0 0.0
      %1502 = vmatpush.msra.mxu0 0.0
      %1503 = vmatpush.msra.mxu0 0.0
      %1504 = vmatpush.msra.mxu0 0.0
      %1505 = vmatpush.msra.mxu0 0.0
      %1506 = vmatpush.msra.mxu0 0.0
      %1507 = vmatpush.msra.mxu0 0.0
      %1508 = vmatpush.msra.mxu0 0.0
      %1509 = vmatpush.msra.mxu0 0.0
      %1510 = vmatpush.msra.mxu0 0.0
      %1511 = vmatpush.msra.mxu0 0.0
      %1512 = vmatpush.msra.mxu0 0.0
      %1513 = vmatpush.msra.mxu0 0.0
      %1514 = vmatpush.msra.mxu0 0.0
      %1515 = vmatpush.msra.mxu0 0.0
      %1516 = vmatpush.msra.mxu0 %v1499
      %1517 = vmatmul.f32.gmra.mxu0 %v548
      %v1518 = vpop.f32.mrf.mxu0
      %v1519 = vadd.f32 0.0, %v1518
      %1520 = vmatmul.f32.gmra.mxu0 %v550
      %v1521 = vpop.f32.mrf.mxu0
      %v1522 = vadd.f32 0.0, %v1521
      %1523 = vmatmul.f32.gmra.mxu0 %v552
      %v1524 = vpop.f32.mrf.mxu0
      %v1525 = vadd.f32 0.0, %v1524
      %1526 = vmatmul.f32.gmra.mxu0 %v554
      %v1527 = vpop.f32.mrf.mxu0
      %v1528 = vadd.f32 0.0, %v1527
      %1529 = vmatmul.f32.gmra.mxu0 %v556
      %v1530 = vpop.f32.mrf.mxu0
      %v1531 = vadd.f32 0.0, %v1530
      %1532 = vmatmul.f32.gmra.mxu0 %v558
      %v1533 = vpop.f32.mrf.mxu0
      %v1534 = vadd.f32 0.0, %v1533
      %1535 = vmatmul.f32.gmra.mxu0 %v560
      %v1536 = vpop.f32.mrf.mxu0
      %v1537 = vadd.f32 0.0, %v1536
      %1538 = vmatmul.f32.gmra.mxu0 %v562
      %v1539 = vpop.f32.mrf.mxu0
      %v1540 = vadd.f32 0.0, %v1539
      %1541 = vmatmul.f32.gmra.mxu0 %v564
      %v1542 = vpop.f32.mrf.mxu0
      %v1543 = vadd.f32 0.0, %v1542
      %1544 = vmatmul.f32.gmra.mxu0 %v566
      %v1545 = vpop.f32.mrf.mxu0
      %v1546 = vadd.f32 0.0, %v1545
      %1547 = vmatmul.f32.gmra.mxu0 %v568
      %v1548 = vpop.f32.mrf.mxu0
      %v1549 = vadd.f32 0.0, %v1548
      %1550 = vmatmul.f32.gmra.mxu0 %v570
      %v1551 = vpop.f32.mrf.mxu0
      %v1552 = vadd.f32 0.0, %v1551
      %1553 = vmatmul.f32.gmra.mxu0 %v572
      %v1554 = vpop.f32.mrf.mxu0
      %v1555 = vadd.f32 0.0, %v1554
      %1556 = vmatmul.f32.gmra.mxu0 %v574
      %v1557 = vpop.f32.mrf.mxu0
      %v1558 = vadd.f32 0.0, %v1557
      %1559 = vmatmul.f32.gmra.mxu0 %v576
      %v1560 = vpop.f32.mrf.mxu0
      %v1561 = vadd.f32 0.0, %v1560
      %1562 = vmatmul.f32.gmra.mxu0 %v578
      %v1563 = vpop.f32.mrf.mxu0
      %v1564 = vadd.f32 0.0, %v1563
      %1565 = vmatmul.f32.gmra.mxu0 %v580
      %v1566 = vpop.f32.mrf.mxu0
      %v1567 = vadd.f32 0.0, %v1566
      %1568 = vmatmul.f32.gmra.mxu0 %v582
      %v1569 = vpop.f32.mrf.mxu0
      %v1570 = vadd.f32 0.0, %v1569
      %1571 = vmatmul.f32.gmra.mxu0 %v584
      %v1572 = vpop.f32.mrf.mxu0
      %v1573 = vadd.f32 0.0, %v1572
      %1574 = vmatmul.f32.gmra.mxu0 %v586
      %v1575 = vpop.f32.mrf.mxu0
      %v1576 = vadd.f32 0.0, %v1575
      %1577 = vmatmul.f32.gmra.mxu0 %v588
      %v1578 = vpop.f32.mrf.mxu0
      %v1579 = vadd.f32 0.0, %v1578
      %1580 = vmatmul.f32.gmra.mxu0 %v590
      %v1581 = vpop.f32.mrf.mxu0
      %v1582 = vadd.f32 0.0, %v1581
      %1583 = vmatmul.f32.gmra.mxu0 %v592
      %v1584 = vpop.f32.mrf.mxu0
      %v1585 = vadd.f32 0.0, %v1584
      %1586 = vmatmul.f32.gmra.mxu0 %v594
      %v1587 = vpop.f32.mrf.mxu0
      %v1588 = vadd.f32 0.0, %v1587
      %1589 = vmatmul.f32.gmra.mxu0 %v596
      %v1590 = vpop.f32.mrf.mxu0
      %v1591 = vadd.f32 0.0, %v1590
      %1592 = vmatmul.f32.gmra.mxu0 %v598
      %v1593 = vpop.f32.mrf.mxu0
      %v1594 = vadd.f32 0.0, %v1593
      %1595 = vmatmul.f32.gmra.mxu0 %v600
      %v1596 = vpop.f32.mrf.mxu0
      %v1597 = vadd.f32 0.0, %v1596
      %1598 = vmatmul.f32.gmra.mxu0 %v602
      %v1599 = vpop.f32.mrf.mxu0
      %v1600 = vadd.f32 0.0, %v1599
      %1601 = vmatmul.f32.gmra.mxu0 %v1018
      %v1602 = vpop.f32.mrf.mxu0
      %v1603 = vadd.f32 0.0, %v1602
      %1604 = vmatmul.f32.gmra.mxu0 %v1021
      %v1605 = vpop.f32.mrf.mxu0
      %v1606 = vadd.f32 0.0, %v1605
      %1607 = vmatmul.f32.gmra.mxu0 %v1493
      %v1608 = vpop.f32.mrf.mxu0
      %v1609 = vadd.f32 0.0, %v1608
      %1610 = vmatmul.f32.gmra.mxu0 %v1496
      %v1611 = vpop.f32.mrf.mxu0
      %v1612 = vadd.f32 0.0, %v1611
      %1613 = vdwg.mxu0
      %v1614 = vadd.f32 %v1458, %v1519
      %v1615 = vadd.f32 %v1459, %v1522
      %v1616 = vadd.f32 %v1460, %v1525
      %v1617 = vadd.f32 %v1461, %v1528
      %v1618 = vadd.f32 %v1462, %v1531
      %v1619 = vadd.f32 %v1463, %v1534
      %v1620 = vadd.f32 %v1464, %v1537
      %v1621 = vadd.f32 %v1465, %v1540
      %v1622 = vadd.f32 %v1466, %v1543
      %v1623 = vadd.f32 %v1467, %v1546
      %v1624 = vadd.f32 %v1468, %v1549
      %v1625 = vadd.f32 %v1469, %v1552
      %v1626 = vadd.f32 %v1470, %v1555
      %v1627 = vadd.f32 %v1471, %v1558
      %v1628 = vadd.f32 %v1472, %v1561
      %v1629 = vadd.f32 %v1473, %v1564
      %v1630 = vadd.f32 %v1474, %v1567
      %v1631 = vadd.f32 %v1475, %v1570
      %v1632 = vadd.f32 %v1476, %v1573
      %v1633 = vadd.f32 %v1477, %v1576
      %v1634 = vadd.f32 %v1478, %v1579
      %v1635 = vadd.f32 %v1479, %v1582
      %v1636 = vadd.f32 %v1480, %v1585
      %v1637 = vadd.f32 %v1481, %v1588
      %v1638 = vadd.f32 %v1482, %v1591
      %v1639 = vadd.f32 %v1483, %v1594
      %v1640 = vadd.f32 %v1484, %v1597
      %v1641 = vadd.f32 %v1485, %v1600
      %v1642 = vadd.f32 %v1486, %v1603
      %v1643 = vadd.f32 %v1487, %v1606
      %v1644 = vadd.f32 %v1488, %v1609
      %v1645 = vadd.f32 %v1489, %v1612
      %v1647 = vrot.slane %v223, 1
      %v1648 = vrot.slane %v224, 1
      %v1649 = vsel %vm275, %v1647, %v1648
      %v1650 = vrot.slane %v225, 1
      %v1651 = vsel %vm275, %v1648, %v1650
      %s1652 = scalar_lea.vmem %s1, 28
      %v1653 = vld [vmem:[%s1652] sm:$0xf]
      %v1654 = vsel %vm358, %v1649, 0
      %v1656 = vsel %vm358, %v1651, 0
      %v1659 = vsel %vm423, %v1653, 0
      %1661 = vmatpush.msra.mxu0 0.0
      %1662 = vmatpush.msra.mxu0 0.0
      %1663 = vmatpush.msra.mxu0 0.0
      %1664 = vmatpush.msra.mxu0 0.0
      %1665 = vmatpush.msra.mxu0 0.0
      %1666 = vmatpush.msra.mxu0 0.0
      %1667 = vmatpush.msra.mxu0 0.0
      %1668 = vmatpush.msra.mxu0 0.0
      %1669 = vmatpush.msra.mxu0 0.0
      %1670 = vmatpush.msra.mxu0 0.0
      %1671 = vmatpush.msra.mxu0 0.0
      %1672 = vmatpush.msra.mxu0 0.0
      %1673 = vmatpush.msra.mxu0 0.0
      %1674 = vmatpush.msra.mxu0 0.0
      %1675 = vmatpush.msra.mxu0 0.0
      %1676 = vmatpush.msra.mxu0 %v1659
      %1677 = vmatmul.f32.gmra.mxu0 %v367
      %v1678 = vpop.f32.mrf.mxu0
      %v1679 = vadd.f32 0.0, %v1678
      %1680 = vmatmul.f32.gmra.mxu0 %v369
      %v1681 = vpop.f32.mrf.mxu0
      %v1682 = vadd.f32 0.0, %v1681
      %1683 = vmatmul.f32.gmra.mxu0 %v371
      %v1684 = vpop.f32.mrf.mxu0
      %v1685 = vadd.f32 0.0, %v1684
      %1686 = vmatmul.f32.gmra.mxu0 %v373
      %v1687 = vpop.f32.mrf.mxu0
      %v1688 = vadd.f32 0.0, %v1687
      %1689 = vmatmul.f32.gmra.mxu0 %v375
      %v1690 = vpop.f32.mrf.mxu0
      %v1691 = vadd.f32 0.0, %v1690
      %1692 = vmatmul.f32.gmra.mxu0 %v377
      %v1693 = vpop.f32.mrf.mxu0
      %v1694 = vadd.f32 0.0, %v1693
      %1695 = vmatmul.f32.gmra.mxu0 %v379
      %v1696 = vpop.f32.mrf.mxu0
      %v1697 = vadd.f32 0.0, %v1696
      %1698 = vmatmul.f32.gmra.mxu0 %v381
      %v1699 = vpop.f32.mrf.mxu0
      %v1700 = vadd.f32 0.0, %v1699
      %1701 = vmatmul.f32.gmra.mxu0 %v383
      %v1702 = vpop.f32.mrf.mxu0
      %v1703 = vadd.f32 0.0, %v1702
      %1704 = vmatmul.f32.gmra.mxu0 %v385
      %v1705 = vpop.f32.mrf.mxu0
      %v1706 = vadd.f32 0.0, %v1705
      %1707 = vmatmul.f32.gmra.mxu0 %v387
      %v1708 = vpop.f32.mrf.mxu0
      %v1709 = vadd.f32 0.0, %v1708
      %1710 = vmatmul.f32.gmra.mxu0 %v389
      %v1711 = vpop.f32.mrf.mxu0
      %v1712 = vadd.f32 0.0, %v1711
      %1713 = vmatmul.f32.gmra.mxu0 %v391
      %v1714 = vpop.f32.mrf.mxu0
      %v1715 = vadd.f32 0.0, %v1714
      %1716 = vmatmul.f32.gmra.mxu0 %v393
      %v1717 = vpop.f32.mrf.mxu0
      %v1718 = vadd.f32 0.0, %v1717
      %1719 = vmatmul.f32.gmra.mxu0 %v395
      %v1720 = vpop.f32.mrf.mxu0
      %v1721 = vadd.f32 0.0, %v1720
      %1722 = vmatmul.f32.gmra.mxu0 %v397
      %v1723 = vpop.f32.mrf.mxu0
      %v1724 = vadd.f32 0.0, %v1723
      %1725 = vmatmul.f32.gmra.mxu0 %v399
      %v1726 = vpop.f32.mrf.mxu0
      %v1727 = vadd.f32 0.0, %v1726
      %1728 = vmatmul.f32.gmra.mxu0 %v401
      %v1729 = vpop.f32.mrf.mxu0
      %v1730 = vadd.f32 0.0, %v1729
      %1731 = vmatmul.f32.gmra.mxu0 %v403
      %v1732 = vpop.f32.mrf.mxu0
      %v1733 = vadd.f32 0.0, %v1732
      %1734 = vmatmul.f32.gmra.mxu0 %v405
      %v1735 = vpop.f32.mrf.mxu0
      %v1736 = vadd.f32 0.0, %v1735
      %1737 = vmatmul.f32.gmra.mxu0 %v407
      %v1738 = vpop.f32.mrf.mxu0
      %v1739 = vadd.f32 0.0, %v1738
      %1740 = vmatmul.f32.gmra.mxu0 %v409
      %v1741 = vpop.f32.mrf.mxu0
      %v1742 = vadd.f32 0.0, %v1741
      %1743 = vmatmul.f32.gmra.mxu0 %v411
      %v1744 = vpop.f32.mrf.mxu0
      %v1745 = vadd.f32 0.0, %v1744
      %1746 = vmatmul.f32.gmra.mxu0 %v413
      %v1747 = vpop.f32.mrf.mxu0
      %v1748 = vadd.f32 0.0, %v1747
      %1749 = vmatmul.f32.gmra.mxu0 %v415
      %v1750 = vpop.f32.mrf.mxu0
      %v1751 = vadd.f32 0.0, %v1750
      %1752 = vmatmul.f32.gmra.mxu0 %v417
      %v1753 = vpop.f32.mrf.mxu0
      %v1754 = vadd.f32 0.0, %v1753
      %1755 = vmatmul.f32.gmra.mxu0 %v419
      %v1756 = vpop.f32.mrf.mxu0
      %v1757 = vadd.f32 0.0, %v1756
      %1758 = vmatmul.f32.gmra.mxu0 %v421
      %v1759 = vpop.f32.mrf.mxu0
      %v1760 = vadd.f32 0.0, %v1759
      %1761 = vmatmul.f32.gmra.mxu0 %v1179
      %v1762 = vpop.f32.mrf.mxu0
      %v1763 = vadd.f32 0.0, %v1762
      %1764 = vmatmul.f32.gmra.mxu0 %v1181
      %v1765 = vpop.f32.mrf.mxu0
      %v1766 = vadd.f32 0.0, %v1765
      %1767 = vmatmul.f32.gmra.mxu0 %v1654
      %v1768 = vpop.f32.mrf.mxu0
      %v1769 = vadd.f32 0.0, %v1768
      %1770 = vmatmul.f32.gmra.mxu0 %v1656
      %v1771 = vpop.f32.mrf.mxu0
      %v1772 = vadd.f32 0.0, %v1771
      %1773 = vdwg.mxu0
      %v1774 = vadd.f32 %v1614, %v1679
      %v1775 = vadd.f32 %v1615, %v1682
      %v1776 = vadd.f32 %v1616, %v1685
      %v1777 = vadd.f32 %v1617, %v1688
      %v1778 = vadd.f32 %v1618, %v1691
      %v1779 = vadd.f32 %v1619, %v1694
      %v1780 = vadd.f32 %v1620, %v1697
      %v1781 = vadd.f32 %v1621, %v1700
      %v1782 = vadd.f32 %v1622, %v1703
      %v1783 = vadd.f32 %v1623, %v1706
      %v1784 = vadd.f32 %v1624, %v1709
      %v1785 = vadd.f32 %v1625, %v1712
      %v1786 = vadd.f32 %v1626, %v1715
      %v1787 = vadd.f32 %v1627, %v1718
      %v1788 = vadd.f32 %v1628, %v1721
      %v1789 = vadd.f32 %v1629, %v1724
      %v1790 = vadd.f32 %v1630, %v1727
      %v1791 = vadd.f32 %v1631, %v1730
      %v1792 = vadd.f32 %v1632, %v1733
      %v1793 = vadd.f32 %v1633, %v1736
      %v1794 = vadd.f32 %v1634, %v1739
      %v1795 = vadd.f32 %v1635, %v1742
      %v1796 = vadd.f32 %v1636, %v1745
      %v1797 = vadd.f32 %v1637, %v1748
      %v1798 = vadd.f32 %v1638, %v1751
      %v1799 = vadd.f32 %v1639, %v1754
      %v1800 = vadd.f32 %v1640, %v1757
      %v1801 = vadd.f32 %v1641, %v1760
      %v1802 = vadd.f32 %v1642, %v1763
      %v1803 = vadd.f32 %v1643, %v1766
      %v1804 = vadd.f32 %v1644, %v1769
      %v1805 = vadd.f32 %v1645, %v1772
      %v1806 = vrot.slane %v223, 2
      %v1807 = vrot.slane %v224, 2
      %v1808 = vsel %vm720, %v1806, %v1807
      %v1809 = vrot.slane %v225, 2
      %v1810 = vsel %vm720, %v1807, %v1809
      %s1811 = scalar_lea.vmem %s1, 32
      %v1812 = vld [vmem:[%s1811] sm:$0xf]
      %v1813 = vsel %vm358, %v1808, 0
      %v1815 = vsel %vm358, %v1810, 0
      %v1818 = vsel %vm423, %v1812, 0
      %1820 = vmatpush.msra.mxu0 0.0
      %1821 = vmatpush.msra.mxu0 0.0
      %1822 = vmatpush.msra.mxu0 0.0
      %1823 = vmatpush.msra.mxu0 0.0
      %1824 = vmatpush.msra.mxu0 0.0
      %1825 = vmatpush.msra.mxu0 0.0
      %1826 = vmatpush.msra.mxu0 0.0
      %1827 = vmatpush.msra.mxu0 0.0
      %1828 = vmatpush.msra.mxu0 0.0
      %1829 = vmatpush.msra.mxu0 0.0
      %1830 = vmatpush.msra.mxu0 0.0
      %1831 = vmatpush.msra.mxu0 0.0
      %1832 = vmatpush.msra.mxu0 0.0
      %1833 = vmatpush.msra.mxu0 0.0
      %1834 = vmatpush.msra.mxu0 0.0
      %1835 = vmatpush.msra.mxu0 %v1818
      %1836 = vmatmul.f32.gmra.mxu0 %v811
      %v1837 = vpop.f32.mrf.mxu0
      %v1838 = vadd.f32 0.0, %v1837
      %1839 = vmatmul.f32.gmra.mxu0 %v813
      %v1840 = vpop.f32.mrf.mxu0
      %v1841 = vadd.f32 0.0, %v1840
      %1842 = vmatmul.f32.gmra.mxu0 %v815
      %v1843 = vpop.f32.mrf.mxu0
      %v1844 = vadd.f32 0.0, %v1843
      %1845 = vmatmul.f32.gmra.mxu0 %v817
      %v1846 = vpop.f32.mrf.mxu0
      %v1847 = vadd.f32 0.0, %v1846
      %1848 = vmatmul.f32.gmra.mxu0 %v819
      %v1849 = vpop.f32.mrf.mxu0
      %v1850 = vadd.f32 0.0, %v1849
      %1851 = vmatmul.f32.gmra.mxu0 %v821
      %v1852 = vpop.f32.mrf.mxu0
      %v1853 = vadd.f32 0.0, %v1852
      %1854 = vmatmul.f32.gmra.mxu0 %v823
      %v1855 = vpop.f32.mrf.mxu0
      %v1856 = vadd.f32 0.0, %v1855
      %1857 = vmatmul.f32.gmra.mxu0 %v825
      %v1858 = vpop.f32.mrf.mxu0
      %v1859 = vadd.f32 0.0, %v1858
      %1860 = vmatmul.f32.gmra.mxu0 %v827
      %v1861 = vpop.f32.mrf.mxu0
      %v1862 = vadd.f32 0.0, %v1861
      %1863 = vmatmul.f32.gmra.mxu0 %v829
      %v1864 = vpop.f32.mrf.mxu0
      %v1865 = vadd.f32 0.0, %v1864
      %1866 = vmatmul.f32.gmra.mxu0 %v831
      %v1867 = vpop.f32.mrf.mxu0
      %v1868 = vadd.f32 0.0, %v1867
      %1869 = vmatmul.f32.gmra.mxu0 %v833
      %v1870 = vpop.f32.mrf.mxu0
      %v1871 = vadd.f32 0.0, %v1870
      %1872 = vmatmul.f32.gmra.mxu0 %v835
      %v1873 = vpop.f32.mrf.mxu0
      %v1874 = vadd.f32 0.0, %v1873
      %1875 = vmatmul.f32.gmra.mxu0 %v837
      %v1876 = vpop.f32.mrf.mxu0
      %v1877 = vadd.f32 0.0, %v1876
      %1878 = vmatmul.f32.gmra.mxu0 %v839
      %v1879 = vpop.f32.mrf.mxu0
      %v1880 = vadd.f32 0.0, %v1879
      %1881 = vmatmul.f32.gmra.mxu0 %v841
      %v1882 = vpop.f32.mrf.mxu0
      %v1883 = vadd.f32 0.0, %v1882
      %1884 = vmatmul.f32.gmra.mxu0 %v843
      %v1885 = vpop.f32.mrf.mxu0
      %v1886 = vadd.f32 0.0, %v1885
      %1887 = vmatmul.f32.gmra.mxu0 %v845
      %v1888 = vpop.f32.mrf.mxu0
      %v1889 = vadd.f32 0.0, %v1888
      %1890 = vmatmul.f32.gmra.mxu0 %v847
      %v1891 = vpop.f32.mrf.mxu0
      %v1892 = vadd.f32 0.0, %v1891
      %1893 = vmatmul.f32.gmra.mxu0 %v849
      %v1894 = vpop.f32.mrf.mxu0
      %v1895 = vadd.f32 0.0, %v1894
      %1896 = vmatmul.f32.gmra.mxu0 %v851
      %v1897 = vpop.f32.mrf.mxu0
      %v1898 = vadd.f32 0.0, %v1897
      %1899 = vmatmul.f32.gmra.mxu0 %v853
      %v1900 = vpop.f32.mrf.mxu0
      %v1901 = vadd.f32 0.0, %v1900
      %1902 = vmatmul.f32.gmra.mxu0 %v855
      %v1903 = vpop.f32.mrf.mxu0
      %v1904 = vadd.f32 0.0, %v1903
      %1905 = vmatmul.f32.gmra.mxu0 %v857
      %v1906 = vpop.f32.mrf.mxu0
      %v1907 = vadd.f32 0.0, %v1906
      %1908 = vmatmul.f32.gmra.mxu0 %v859
      %v1909 = vpop.f32.mrf.mxu0
      %v1910 = vadd.f32 0.0, %v1909
      %1911 = vmatmul.f32.gmra.mxu0 %v861
      %v1912 = vpop.f32.mrf.mxu0
      %v1913 = vadd.f32 0.0, %v1912
      %1914 = vmatmul.f32.gmra.mxu0 %v863
      %v1915 = vpop.f32.mrf.mxu0
      %v1916 = vadd.f32 0.0, %v1915
      %1917 = vmatmul.f32.gmra.mxu0 %v865
      %v1918 = vpop.f32.mrf.mxu0
      %v1919 = vadd.f32 0.0, %v1918
      %1920 = vmatmul.f32.gmra.mxu0 %v1338
      %v1921 = vpop.f32.mrf.mxu0
      %v1922 = vadd.f32 0.0, %v1921
      %1923 = vmatmul.f32.gmra.mxu0 %v1340
      %v1924 = vpop.f32.mrf.mxu0
      %v1925 = vadd.f32 0.0, %v1924
      %1926 = vmatmul.f32.gmra.mxu0 %v1813
      %v1927 = vpop.f32.mrf.mxu0
      %v1928 = vadd.f32 0.0, %v1927
      %1929 = vmatmul.f32.gmra.mxu0 %v1815
      %v1930 = vpop.f32.mrf.mxu0
      %v1931 = vadd.f32 0.0, %v1930
      %1932 = vdwg.mxu0
      %v1933 = vadd.f32 %v1774, %v1838
      %v1934 = vadd.f32 %v1775, %v1841
      %v1935 = vadd.f32 %v1776, %v1844
      %v1936 = vadd.f32 %v1777, %v1847
      %v1937 = vadd.f32 %v1778, %v1850
      %v1938 = vadd.f32 %v1779, %v1853
      %v1939 = vadd.f32 %v1780, %v1856
      %v1940 = vadd.f32 %v1781, %v1859
      %v1941 = vadd.f32 %v1782, %v1862
      %v1942 = vadd.f32 %v1783, %v1865
      %v1943 = vadd.f32 %v1784, %v1868
      %v1944 = vadd.f32 %v1785, %v1871
      %v1945 = vadd.f32 %v1786, %v1874
      %v1946 = vadd.f32 %v1787, %v1877
      %v1947 = vadd.f32 %v1788, %v1880
      %v1948 = vadd.f32 %v1789, %v1883
      %v1949 = vadd.f32 %v1790, %v1886
      %v1950 = vadd.f32 %v1791, %v1889
      %v1951 = vadd.f32 %v1792, %v1892
      %v1952 = vadd.f32 %v1793, %v1895
      %v1953 = vadd.f32 %v1794, %v1898
      %v1954 = vadd.f32 %v1795, %v1901
      %v1955 = vadd.f32 %v1796, %v1904
      %v1956 = vadd.f32 %v1797, %v1907
      %v1957 = vadd.f32 %v1798, %v1910
      %v1958 = vadd.f32 %v1799, %v1913
      %v1959 = vadd.f32 %v1800, %v1916
      %v1960 = vadd.f32 %v1801, %v1919
      %v1961 = vadd.f32 %v1802, %v1922
      %v1962 = vadd.f32 %v1803, %v1925
      %v1963 = vadd.f32 %v1804, %v1928
      %v1964 = vadd.f32 %v1805, %v1931
      %v1965 = vld [vmem:[%s2] sm:$0x3]
      %v1966 = vperm.slane %v1965, 0
      %v1967 = vmul.f32 %v1933, %v1966
      %v1968 = vmul.f32 %v1934, %v1966
      %v1969 = vmul.f32 %v1935, %v1966
      %v1970 = vmul.f32 %v1936, %v1966
      %v1971 = vmul.f32 %v1937, %v1966
      %v1972 = vmul.f32 %v1938, %v1966
      %v1973 = vmul.f32 %v1939, %v1966
      %v1974 = vmul.f32 %v1940, %v1966
      %v1975 = vmul.f32 %v1941, %v1966
      %v1976 = vmul.f32 %v1942, %v1966
      %v1977 = vmul.f32 %v1943, %v1966
      %v1978 = vmul.f32 %v1944, %v1966
      %v1979 = vmul.f32 %v1945, %v1966
      %v1980 = vmul.f32 %v1946, %v1966
      %v1981 = vmul.f32 %v1947, %v1966
      %v1982 = vmul.f32 %v1948, %v1966
      %v1983 = vmul.f32 %v1949, %v1966
      %v1984 = vmul.f32 %v1950, %v1966
      %v1985 = vmul.f32 %v1951, %v1966
      %v1986 = vmul.f32 %v1952, %v1966
      %v1987 = vmul.f32 %v1953, %v1966
      %v1988 = vmul.f32 %v1954, %v1966
      %v1989 = vmul.f32 %v1955, %v1966
      %v1990 = vmul.f32 %v1956, %v1966
      %v1991 = vmul.f32 %v1957, %v1966
      %v1992 = vmul.f32 %v1958, %v1966
      %v1993 = vmul.f32 %v1959, %v1966
      %v1994 = vmul.f32 %v1960, %v1966
      %v1995 = vmul.f32 %v1961, %v1966
      %v1996 = vmul.f32 %v1962, %v1966
      %v1997 = vmul.f32 %v1963, %v1966
      %v1998 = vmul.f32 %v1964, %v1966
      %v1999 = vperm.slane %v1965, 1
      %v2000 = vadd.f32 %v1967, %v1999
      %v2001 = vadd.f32 %v1968, %v1999
      %v2002 = vadd.f32 %v1969, %v1999
      %v2003 = vadd.f32 %v1970, %v1999
      %v2004 = vadd.f32 %v1971, %v1999
      %v2005 = vadd.f32 %v1972, %v1999
      %v2006 = vadd.f32 %v1973, %v1999
      %v2007 = vadd.f32 %v1974, %v1999
      %v2008 = vadd.f32 %v1975, %v1999
      %v2009 = vadd.f32 %v1976, %v1999
      %v2010 = vadd.f32 %v1977, %v1999
      %v2011 = vadd.f32 %v1978, %v1999
      %v2012 = vadd.f32 %v1979, %v1999
      %v2013 = vadd.f32 %v1980, %v1999
      %v2014 = vadd.f32 %v1981, %v1999
      %v2015 = vadd.f32 %v1982, %v1999
      %v2016 = vadd.f32 %v1983, %v1999
      %v2017 = vadd.f32 %v1984, %v1999
      %v2018 = vadd.f32 %v1985, %v1999
      %v2019 = vadd.f32 %v1986, %v1999
      %v2020 = vadd.f32 %v1987, %v1999
      %v2021 = vadd.f32 %v1988, %v1999
      %v2022 = vadd.f32 %v1989, %v1999
      %v2023 = vadd.f32 %v1990, %v1999
      %v2024 = vadd.f32 %v1991, %v1999
      %v2025 = vadd.f32 %v1992, %v1999
      %v2026 = vadd.f32 %v1993, %v1999
      %v2027 = vadd.f32 %v1994, %v1999
      %v2028 = vadd.f32 %v1995, %v1999
      %v2029 = vadd.f32 %v1996, %v1999
      %v2030 = vadd.f32 %v1997, %v1999
      %v2031 = vadd.f32 %v1998, %v1999
      %v2032 = vmax.f32 %v2000, 0.0
      %v2033 = vmax.f32 %v2001, 0.0
      %v2034 = vmax.f32 %v2002, 0.0
      %v2035 = vmax.f32 %v2003, 0.0
      %v2036 = vmax.f32 %v2004, 0.0
      %v2037 = vmax.f32 %v2005, 0.0
      %v2038 = vmax.f32 %v2006, 0.0
      %v2039 = vmax.f32 %v2007, 0.0
      %v2040 = vmax.f32 %v2008, 0.0
      %v2041 = vmax.f32 %v2009, 0.0
      %v2042 = vmax.f32 %v2010, 0.0
      %v2043 = vmax.f32 %v2011, 0.0
      %v2044 = vmax.f32 %v2012, 0.0
      %v2045 = vmax.f32 %v2013, 0.0
      %v2046 = vmax.f32 %v2014, 0.0
      %v2047 = vmax.f32 %v2015, 0.0
      %v2048 = vmax.f32 %v2016, 0.0
      %v2049 = vmax.f32 %v2017, 0.0
      %v2050 = vmax.f32 %v2018, 0.0
      %v2051 = vmax.f32 %v2019, 0.0
      %v2052 = vmax.f32 %v2020, 0.0
      %v2053 = vmax.f32 %v2021, 0.0
      %v2054 = vmax.f32 %v2022, 0.0
      %v2055 = vmax.f32 %v2023, 0.0
      %v2056 = vmax.f32 %v2024, 0.0
      %v2057 = vmax.f32 %v2025, 0.0
      %v2058 = vmax.f32 %v2026, 0.0
      %v2059 = vmax.f32 %v2027, 0.0
      %v2060 = vmax.f32 %v2028, 0.0
      %v2061 = vmax.f32 %v2029, 0.0
      %v2062 = vmax.f32 %v2030, 0.0
      %v2063 = vmax.f32 %v2031, 0.0
      %2064 = vst [vmem:[%s170] sm:$0xff] %v2032
      %2065 = vst [vmem:[%s170 + $0x8] sm:$0xff] %v2033
      %2066 = vst [vmem:[%s170 + $0x10] sm:$0xff] %v2034
      %2067 = vst [vmem:[%s170 + $0x18] sm:$0xff] %v2035
      %2068 = vst [vmem:[%s170 + $0x20] sm:$0xff] %v2036
      %2069 = vst [vmem:[%s170 + $0x28] sm:$0xff] %v2037
      %2070 = vst [vmem:[%s170 + $0x30] sm:$0xff] %v2038
      %2071 = vst [vmem:[%s170 + $0x38] sm:$0xff] %v2039
      %2072 = vst [vmem:[%s170 + $0x40] sm:$0xff] %v2040
      %2073 = vst [vmem:[%s170 + $0x48] sm:$0xff] %v2041
      %2074 = vst [vmem:[%s170 + $0x50] sm:$0xff] %v2042
      %2075 = vst [vmem:[%s170 + $0x58] sm:$0xff] %v2043
      %2076 = vst [vmem:[%s170 + $0x60] sm:$0xff] %v2044
      %2077 = vst [vmem:[%s170 + $0x68] sm:$0xff] %v2045
      %2078 = vst [vmem:[%s170 + $0x70] sm:$0xff] %v2046
      %2079 = vst [vmem:[%s170 + $0x78] sm:$0xff] %v2047
      %2080 = vst [vmem:[%s170 + $0x80] sm:$0xff] %v2048
      %2081 = vst [vmem:[%s170 + $0x88] sm:$0xff] %v2049
      %2082 = vst [vmem:[%s170 + $0x90] sm:$0xff] %v2050
      %2083 = vst [vmem:[%s170 + $0x98] sm:$0xff] %v2051
      %2084 = vst [vmem:[%s170 + $0xa0] sm:$0xff] %v2052
      %2085 = vst [vmem:[%s170 + $0xa8] sm:$0xff] %v2053
      %2086 = vst [vmem:[%s170 + $0xb0] sm:$0xff] %v2054
      %2087 = vst [vmem:[%s170 + $0xb8] sm:$0xff] %v2055
      %2088 = vst [vmem:[%s170 + $0xc0] sm:$0xff] %v2056
      %2089 = vst [vmem:[%s170 + $0xc8] sm:$0xff] %v2057
      %2090 = vst [vmem:[%s170 + $0xd0] sm:$0xff] %v2058
      %2091 = vst [vmem:[%s170 + $0xd8] sm:$0xff] %v2059
      %2092 = vst [vmem:[%s170 + $0xe0] sm:$0xff] %v2060
      %2093 = vst [vmem:[%s170 + $0xe8] sm:$0xff] %v2061
      %2094 = vst [vmem:[%s170 + $0xf0] sm:$0xff] %v2062
      %2095 = vst [vmem:[%s170 + $0xf8] sm:$0xff] %v2063
      %s2096 = smul.u32 32, %s14
      %p2097 = scmp.lt.s32.totalorder %s2096, 63
      %s2098 = scalar_select %p2097, %s2096, 63
      %s2099 = smul.addr %s2098, 8
      %s2100 = scalar_lea.vmem %s3, %s2099
      // Predicated region
      $region33: #{conv_block_forward.3} parent=31 // pred_check
        %p2101 = pneg %p100
      $region34: #{conv_block_forward.3} parent=31 // pred_check_branch
        %2103 = sbr.rel (%p2101) target = $region36
      $region35: #{conv_block_forward.3} parent=31 // pred_region
        %s2104 = smul.u32 32, %s14
      $region36: #{conv_block_forward.3} parent=31 // pred_fallthru
        _
    $region32: #{conv_block_forward.3} parent=5 // pred_fallthru
      _
    %p2105 = scmp.le.s32.totalorder 2, %s9
    // Predicated region
    $region37: #{conv_block_forward.3} parent=5 // pred_check
      %p2106 = pneg %p2105
    $region38: #{conv_block_forward.3} parent=5 // pred_check_branch
      %2108 = sbr.rel (%p2106) target = $region40
    $region39: #{conv_block_forward.3} parent=5 // pred_region
      %s2109 = ssub.s32 %s9, 2
      // Predicated region
      $region41: #{conv_block_forward.3} parent=39 // pred_check
        %p2110 = pneg %p106
      $region42: #{conv_block_forward.3} parent=39 // pred_check_branch
        %2112 = sbr.rel (%p2110) target = $region44
      $region43: #{conv_block_forward.3} parent=39 // pred_region
        %s2113 = smul.u32 32, %s15
        %p2114 = scmp.lt.s32.totalorder %s2113, 63
        %s2115 = scalar_select %p2114, %s2113, 63
        %s2116 = smul.addr %s2115, 8
        %s2117 = scalar_lea.vmem %s3, %s2116
      $region44: #{conv_block_forward.3} parent=39 // pred_fallthru
        _
    $region40: #{conv_block_forward.3} parent=5 // pred_fallthru
      _
  $region6: #{conv_block_forward.3} parent=0 // loop_footer
    %s13 = sadd.s32 1, %s9
  $region7: #{conv_block_forward.3} parent=0 // loop_footer_branch
    %8 = sbr.rel target = $region3
  $region8: #{conv_block_forward.3} parent=0 // loop_exit
    _

</llo_original>
